<compile_context>
chip_gen: v7x
topology: tpu7x:2x2x1
jax: 0.10.0
libtpu: 0.0.40
codegen_flags: <defaults>
</compile_context>

<pallas_src>
import jax
import jax.numpy as jnp
from jax.experimental import pallas as pl
from jax.experimental.pallas import tpu as pltpu

D = 128        # input / reconstruction dim
H = 64         # logical hidden dim
Z = 32         # logical latent dim
HP = 128       # hidden dim padded to full lane width
ZP = 128       # latent dim padded to full lane width

B_TOTAL = 1024 # total batch
TB = 512       # batch rows per grid step (2 steps: pipeline overlap + v7x 2 TCs)

assert B_TOTAL % TB == 0, "B_TOTAL must be divisible by TB"
NUM_TILES = B_TOTAL // TB
assert NUM_TILES >= 2, "keep >= 2 grid steps (pipeline overlap / v7x megacore)"
assert TB % 8 == 0


def ae_forward_kernel(x_ref,
                      w1_ref, b1_ref, w2_ref, b2_ref,
                      w3_ref, b3_ref, w4_ref, b4_ref,
                      z_ref, recon_ref, loss_ref):
    x = x_ref[...]                                                    # (TB, D) f32
    xb = x.astype(jnp.bfloat16)

    # ---------------- encoder ----------------
    h1 = jnp.dot(xb, w1_ref[...], preferred_element_type=jnp.float32)     # (TB, HP)
    h1 = jnp.maximum(h1 + b1_ref[...], 0.0)                               # ReLU (f32)
    z = jnp.dot(h1.astype(jnp.bfloat16), w2_ref[...],
                preferred_element_type=jnp.float32) + b2_ref[...]         # (TB, ZP)
    # Only the first Z lanes are nonzero (padded cols of w2/b2 are exact 0);
    # store just those 32 lanes -> 4x fewer latent HBM bytes than the padded
    # f32 slab (masked vst, but this kernel is writeback/overhead-bound).
    z_ref[...] = z[:, :Z]

    # ---------------- decoder ----------------
    h2 = jnp.dot(z.astype(jnp.bfloat16), w3_ref[...],
                 preferred_element_type=jnp.float32)                      # (TB, HP)
    h2 = jnp.maximum(h2 + b3_ref[...], 0.0)                               # ReLU (f32)
    logits = jnp.dot(h2.astype(jnp.bfloat16), w4_ref[...],
                     preferred_element_type=jnp.float32) + b4_ref[...]    # (TB, D)
    recon = jax.nn.sigmoid(logits)                                        # Sigmoid (f32)
    recon_ref[...] = recon

    # ---- per-tile partial of MSE(none).sum(-1): squared-error partials ----
    # Reduce only over the leading (vreg-group) axis: (TB,128)->(TB//8,8,128)
    # summed over axis 0 is pure element-wise VPU adds (no XLU cross-lane
    # reduce, no scalar broadcast). The wrapper finishes with a dense jnp.sum.
    diff = recon - x
    sq = diff * diff
    loss_ref[...] = jnp.sum(sq.reshape(TB // 8, 8, D), axis=0)            # (8, 128)


def autoencoder_forward(x, params):
    """Full AE forward in one gridded Pallas kernel.

    Returns (z_sample, x_recon, loss) mirroring AEOutput.
    """
    (w1, b1, w2, b2, w3, b3, w4, b4) = params

    tiled = lambda shape: pl.BlockSpec(shape, lambda i: (i, 0))   # per-tile blocks
    # Constant index_map -> same block every step: Pallas DMAs these once and
    # keeps them VMEM-resident across the grid (no per-step re-fetch).
    const = lambda shape: pl.BlockSpec(shape, lambda i: (0, 0))

    z, recon, loss_part = pl.pallas_call(
        ae_forward_kernel,
        out_shape=(
            jax.ShapeDtypeStruct((B_TOTAL, Z), jnp.float32),           # latent (unpadded)
            jax.ShapeDtypeStruct((B_TOTAL, D), jnp.float32),           # reconstruction
            jax.ShapeDtypeStruct((NUM_TILES * 8, 128), jnp.float32),   # loss partials
        ),
        grid=(NUM_TILES,),
        in_specs=[
            tiled((TB, D)),                     # x
            const((D, HP)), const((1, HP)),     # enc linear 1 (padded)
            const((HP, ZP)), const((1, ZP)),    # enc linear 2 (padded)
            const((ZP, HP)), const((1, HP)),    # dec linear 1 (padded)
            const((HP, D)), const((1, D)),      # dec linear 2 (padded)
        ],
        out_specs=(
            tiled((TB, Z)),
            tiled((TB, D)),
            pl.BlockSpec((8, 128), lambda i: (i, 0)),
        ),
        compiler_params=pltpu.CompilerParams(
            dimension_semantics=("parallel",),   # shard batch tiles across TCs (v7x)
            vmem_limit_bytes=24 << 20,           # covers larger double-buffered blocks
        ),
    )(x, w1, b1, w2, b2, w3, b3, w4, b4)

    # Finish MSE(none).sum(-1).mean(): dense sum of all per-tile partials.
    loss = jnp.sum(loss_part) / B_TOTAL
    return z, recon, loss


def init_params(key):
    """Logical Linear params, zero-padded to 128-lane TPU-friendly shapes."""
    ks = jax.random.split(key, 8)
    s = 0.1
    w1 = s * jax.random.normal(ks[0], (D, H), jnp.float32)
    b1 = s * jax.random.normal(ks[1], (H,), jnp.float32)
    w2 = s * jax.random.normal(ks[2], (H, Z), jnp.float32)
    b2 = s * jax.random.normal(ks[3], (Z,), jnp.float32)
    w3 = s * jax.random.normal(ks[4], (Z, H), jnp.float32)
    b3 = s * jax.random.normal(ks[5], (H,), jnp.float32)
    w4 = s * jax.random.normal(ks[6], (H, D), jnp.float32)
    b4 = s * jax.random.normal(ks[7], (D,), jnp.float32)

    def pad_w(w, rows, cols):
        return jnp.zeros((rows, cols), w.dtype).at[:w.shape[0], :w.shape[1]].set(w)

    def pad_b(b, cols):
        return jnp.zeros((1, cols), b.dtype).at[0, :b.shape[0]].set(b)

    # Weights in bf16 (MXU inputs, half the DMA bytes); biases stay f32.
    w1p = pad_w(w1, D, HP).astype(jnp.bfloat16)
    w2p = pad_w(w2, HP, ZP).astype(jnp.bfloat16)
    w3p = pad_w(w3, ZP, HP).astype(jnp.bfloat16)
    w4p = pad_w(w4, HP, D).astype(jnp.bfloat16)
    return (w1p, pad_b(b1, HP), w2p, pad_b(b2, ZP),
            w3p, pad_b(b3, HP), w4p, pad_b(b4, D))


def reference_forward(x, params):
    """Pure-JAX reference with identical bf16-input / f32-accumulate casts."""
    (w1, b1, w2, b2, w3, b3, w4, b4) = params
    h1 = jnp.maximum(
        jnp.dot(x.astype(jnp.bfloat16), w1, preferred_element_type=jnp.float32) + b1, 0.0)
    z = jnp.dot(h1.astype(jnp.bfloat16), w2, preferred_element_type=jnp.float32) + b2
    h2 = jnp.maximum(
        jnp.dot(z.astype(jnp.bfloat16), w3, preferred_element_type=jnp.float32) + b3, 0.0)
    recon = jax.nn.sigmoid(
        jnp.dot(h2.astype(jnp.bfloat16), w4, preferred_element_type=jnp.float32) + b4)
    loss = jnp.mean(jnp.sum((recon - x) ** 2, axis=-1))
    return z[:, :Z], recon, loss


if __name__ == "__main__":
    key = jax.random.PRNGKey(0)
    k_x, k_p = jax.random.split(key)
    x = jax.random.uniform(k_x, (B_TOTAL, D), jnp.float32)  # pixel-like data in [0, 1)
    params = init_params(k_p)

    z, recon, loss = autoencoder_forward(x, params)
    jax.block_until_ready((z, recon, loss))

    # sanity check against pure-JAX reference
    z_ref, recon_ref, loss_ref = reference_forward(x, params)
    assert z.shape == (B_TOTAL, Z) and recon.shape == (B_TOTAL, D)
    assert jnp.allclose(z, z_ref, atol=2e-3, rtol=2e-3)
    assert jnp.allclose(recon, recon_ref, atol=2e-3, rtol=2e-3)
    assert jnp.allclose(loss, loss_ref, atol=1e-2, rtol=1e-3)

    print("KERNEL_OK")
</pallas_src>

<mosaic_0001>
module attributes {stable_mosaic.version = 11 : i64} {
  func.func @ae_forward_kernel(%arg0: i32, %arg1: memref<512x128xf32, #tpu.memory_space<vmem>>, %arg2: memref<128x128xbf16, #tpu.memory_space<vmem>>, %arg3: memref<1x128xf32, #tpu.memory_space<vmem>>, %arg4: memref<128x128xbf16, #tpu.memory_space<vmem>>, %arg5: memref<1x128xf32, #tpu.memory_space<vmem>>, %arg6: memref<128x128xbf16, #tpu.memory_space<vmem>>, %arg7: memref<1x128xf32, #tpu.memory_space<vmem>>, %arg8: memref<128x128xbf16, #tpu.memory_space<vmem>>, %arg9: memref<1x128xf32, #tpu.memory_space<vmem>>, %arg10: memref<512x32xf32, #tpu.memory_space<vmem>>, %arg11: memref<512x128xf32, #tpu.memory_space<vmem>>, %arg12: memref<8x128xf32, #tpu.memory_space<vmem>>) attributes {dimension_semantics = [#tpu.dimension_semantics<parallel>], iteration_bounds = array<i64: 2>, scalar_prefetch = 0 : i64, scratch_operands = 0 : i64, tpu.core_type = #tpu.core_type<tc>, window_params = [{transform_indices = @transform_0, window_bounds = array<i64: 512, 128>}, {pipeline_mode = #tpu.pipeline_mode<synchronous>, transform_indices = @transform_1, window_bounds = array<i64: 128, 128>}, {pipeline_mode = #tpu.pipeline_mode<synchronous>, transform_indices = @transform_2, window_bounds = array<i64: 1, 128>}, {pipeline_mode = #tpu.pipeline_mode<synchronous>, transform_indices = @transform_3, window_bounds = array<i64: 128, 128>}, {pipeline_mode = #tpu.pipeline_mode<synchronous>, transform_indices = @transform_4, window_bounds = array<i64: 1, 128>}, {pipeline_mode = #tpu.pipeline_mode<synchronous>, transform_indices = @transform_5, window_bounds = array<i64: 128, 128>}, {pipeline_mode = #tpu.pipeline_mode<synchronous>, transform_indices = @transform_6, window_bounds = array<i64: 1, 128>}, {pipeline_mode = #tpu.pipeline_mode<synchronous>, transform_indices = @transform_7, window_bounds = array<i64: 128, 128>}, {pipeline_mode = #tpu.pipeline_mode<synchronous>, transform_indices = @transform_8, window_bounds = array<i64: 1, 128>}, {transform_indices = @transform_9, window_bounds = array<i64: 512, 32>}, {transform_indices = @transform_10, window_bounds = array<i64: 512, 128>}, {transform_indices = @transform_11, window_bounds = array<i64: 8, 128>}]} {
    %c0 = arith.constant 0 : index
    %c0_0 = arith.constant 0 : index
    %0 = vector.load %arg1[%c0, %c0_0] : memref<512x128xf32, #tpu.memory_space<vmem>>, vector<512x128xf32>
    %1 = arith.truncf %0 : vector<512x128xf32> to vector<512x128xbf16>
    %c0_1 = arith.constant 0 : index
    %c0_2 = arith.constant 0 : index
    %2 = vector.load %arg2[%c0_1, %c0_2] : memref<128x128xbf16, #tpu.memory_space<vmem>>, vector<128x128xbf16>
    %cst = arith.constant dense<0.000000e+00> : vector<512x128xf32>
    %3 = tpu.matmul %1, %2, %cst {dimension_numbers = #tpu.dot_dimension_numbers<[1], [0], [0], [1], [0, 0, 1, 1], [], []>} : vector<512x128xbf16>, vector<128x128xbf16>, vector<512x128xf32> -> vector<512x128xf32>
    %c0_3 = arith.constant 0 : index
    %c0_4 = arith.constant 0 : index
    %4 = vector.load %arg3[%c0_3, %c0_4] : memref<1x128xf32, #tpu.memory_space<vmem>>, vector<1x128xf32>
    %5 = vector.broadcast %4 : vector<1x128xf32> to vector<512x128xf32>
    %6 = arith.addf %3, %5 : vector<512x128xf32>
    %cst_5 = arith.constant 0.000000e+00 : f32
    %7 = vector.broadcast %cst_5 : f32 to vector<512x128xf32>
    %8 = arith.maximumf %6, %7 : vector<512x128xf32>
    %9 = arith.truncf %8 : vector<512x128xf32> to vector<512x128xbf16>
    %c0_6 = arith.constant 0 : index
    %c0_7 = arith.constant 0 : index
    %10 = vector.load %arg4[%c0_6, %c0_7] : memref<128x128xbf16, #tpu.memory_space<vmem>>, vector<128x128xbf16>
    %cst_8 = arith.constant dense<0.000000e+00> : vector<512x128xf32>
    %11 = tpu.matmul %9, %10, %cst_8 {dimension_numbers = #tpu.dot_dimension_numbers<[1], [0], [0], [1], [0, 0, 1, 1], [], []>} : vector<512x128xbf16>, vector<128x128xbf16>, vector<512x128xf32> -> vector<512x128xf32>
    %c0_9 = arith.constant 0 : index
    %c0_10 = arith.constant 0 : index
    %12 = vector.load %arg5[%c0_9, %c0_10] : memref<1x128xf32, #tpu.memory_space<vmem>>, vector<1x128xf32>
    %13 = vector.broadcast %12 : vector<1x128xf32> to vector<512x128xf32>
    %14 = arith.addf %11, %13 : vector<512x128xf32>
    %15 = vector.extract_strided_slice %14 {offsets = [0, 0], sizes = [512, 32], strides = [1, 1]} : vector<512x128xf32> to vector<512x32xf32>
    %c0_11 = arith.constant 0 : index
    %c0_12 = arith.constant 0 : index
    %16 = vector.load %arg10[%c0_11, %c0_12] : memref<512x32xf32, #tpu.memory_space<vmem>>, vector<512x32xf32>
    tpu.vector_store %arg10[%c0_11, %c0_12], %15 {strides = array<i32>} : memref<512x32xf32, #tpu.memory_space<vmem>>, vector<512x32xf32>,
    %17 = arith.truncf %14 : vector<512x128xf32> to vector<512x128xbf16>
    %c0_13 = arith.constant 0 : index
    %c0_14 = arith.constant 0 : index
    %18 = vector.load %arg6[%c0_13, %c0_14] : memref<128x128xbf16, #tpu.memory_space<vmem>>, vector<128x128xbf16>
    %cst_15 = arith.constant dense<0.000000e+00> : vector<512x128xf32>
    %19 = tpu.matmul %17, %18, %cst_15 {dimension_numbers = #tpu.dot_dimension_numbers<[1], [0], [0], [1], [0, 0, 1, 1], [], []>} : vector<512x128xbf16>, vector<128x128xbf16>, vector<512x128xf32> -> vector<512x128xf32>
    %c0_16 = arith.constant 0 : index
    %c0_17 = arith.constant 0 : index
    %20 = vector.load %arg7[%c0_16, %c0_17] : memref<1x128xf32, #tpu.memory_space<vmem>>, vector<1x128xf32>
    %21 = vector.broadcast %20 : vector<1x128xf32> to vector<512x128xf32>
    %22 = arith.addf %19, %21 : vector<512x128xf32>
    %cst_18 = arith.constant 0.000000e+00 : f32
    %23 = vector.broadcast %cst_18 : f32 to vector<512x128xf32>
    %24 = arith.maximumf %22, %23 : vector<512x128xf32>
    %25 = arith.truncf %24 : vector<512x128xf32> to vector<512x128xbf16>
    %c0_19 = arith.constant 0 : index
    %c0_20 = arith.constant 0 : index
    %26 = vector.load %arg8[%c0_19, %c0_20] : memref<128x128xbf16, #tpu.memory_space<vmem>>, vector<128x128xbf16>
    %cst_21 = arith.constant dense<0.000000e+00> : vector<512x128xf32>
    %27 = tpu.matmul %25, %26, %cst_21 {dimension_numbers = #tpu.dot_dimension_numbers<[1], [0], [0], [1], [0, 0, 1, 1], [], []>} : vector<512x128xbf16>, vector<128x128xbf16>, vector<512x128xf32> -> vector<512x128xf32>
    %c0_22 = arith.constant 0 : index
    %c0_23 = arith.constant 0 : index
    %28 = vector.load %arg9[%c0_22, %c0_23] : memref<1x128xf32, #tpu.memory_space<vmem>>, vector<1x128xf32>
    %29 = vector.broadcast %28 : vector<1x128xf32> to vector<512x128xf32>
    %30 = arith.addf %27, %29 : vector<512x128xf32>
    %31 = arith.negf %30 : vector<512x128xf32>
    %32 = math.exp %31 : vector<512x128xf32>
    %cst_24 = arith.constant 1.000000e+00 : f32
    %33 = vector.broadcast %cst_24 : f32 to vector<512x128xf32>
    %34 = arith.addf %33, %32 : vector<512x128xf32>
    %35 = arith.divf %33, %34 : vector<512x128xf32>
    %c0_25 = arith.constant 0 : index
    %c0_26 = arith.constant 0 : index
    %36 = vector.load %arg11[%c0_25, %c0_26] : memref<512x128xf32, #tpu.memory_space<vmem>>, vector<512x128xf32>
    tpu.vector_store %arg11[%c0_25, %c0_26], %35 {strides = array<i32>} : memref<512x128xf32, #tpu.memory_space<vmem>>, vector<512x128xf32>,
    %37 = arith.subf %35, %0 : vector<512x128xf32>
    %38 = arith.mulf %37, %37 : vector<512x128xf32>
    %39 = vector.shape_cast %38 : vector<512x128xf32> to vector<64x8x128xf32>
    %cst_27 = arith.constant dense<0.000000e+00> : vector<8x128xf32>
    %40 = vector.multi_reduction <add>, %39, %cst_27 [0] : vector<64x8x128xf32> to vector<8x128xf32>
    %c0_28 = arith.constant 0 : index
    %c0_29 = arith.constant 0 : index
    %41 = vector.load %arg12[%c0_28, %c0_29] : memref<8x128xf32, #tpu.memory_space<vmem>>, vector<8x128xf32>
    tpu.vector_store %arg12[%c0_28, %c0_29], %40 {strides = array<i32>} : memref<8x128xf32, #tpu.memory_space<vmem>>, vector<8x128xf32>,
    return
  }
  func.func @transform_0(%arg0: i32) -> (i32, i32) {
    %c0_i32 = arith.constant 0 : i32
    %c0_i32_0 = arith.constant 0 : i32
    return %arg0, %c0_i32 : i32, i32
  }
  func.func @transform_1(%arg0: i32) -> (i32, i32) {
    %c0_i32 = arith.constant 0 : i32
    %c0_i32_0 = arith.constant 0 : i32
    %c0_i32_1 = arith.constant 0 : i32
    return %c0_i32, %c0_i32_0 : i32, i32
  }
  func.func @transform_2(%arg0: i32) -> (i32, i32) {
    %c0_i32 = arith.constant 0 : i32
    %c0_i32_0 = arith.constant 0 : i32
    %c0_i32_1 = arith.constant 0 : i32
    return %c0_i32, %c0_i32_0 : i32, i32
  }
  func.func @transform_3(%arg0: i32) -> (i32, i32) {
    %c0_i32 = arith.constant 0 : i32
    %c0_i32_0 = arith.constant 0 : i32
    %c0_i32_1 = arith.constant 0 : i32
    return %c0_i32, %c0_i32_0 : i32, i32
  }
  func.func @transform_4(%arg0: i32) -> (i32, i32) {
    %c0_i32 = arith.constant 0 : i32
    %c0_i32_0 = arith.constant 0 : i32
    %c0_i32_1 = arith.constant 0 : i32
    return %c0_i32, %c0_i32_0 : i32, i32
  }
  func.func @transform_5(%arg0: i32) -> (i32, i32) {
    %c0_i32 = arith.constant 0 : i32
    %c0_i32_0 = arith.constant 0 : i32
    %c0_i32_1 = arith.constant 0 : i32
    return %c0_i32, %c0_i32_0 : i32, i32
  }
  func.func @transform_6(%arg0: i32) -> (i32, i32) {
    %c0_i32 = arith.constant 0 : i32
    %c0_i32_0 = arith.constant 0 : i32
    %c0_i32_1 = arith.constant 0 : i32
    return %c0_i32, %c0_i32_0 : i32, i32
  }
  func.func @transform_7(%arg0: i32) -> (i32, i32) {
    %c0_i32 = arith.constant 0 : i32
    %c0_i32_0 = arith.constant 0 : i32
    %c0_i32_1 = arith.constant 0 : i32
    return %c0_i32, %c0_i32_0 : i32, i32
  }
  func.func @transform_8(%arg0: i32) -> (i32, i32) {
    %c0_i32 = arith.constant 0 : i32
    %c0_i32_0 = arith.constant 0 : i32
    %c0_i32_1 = arith.constant 0 : i32
    return %c0_i32, %c0_i32_0 : i32, i32
  }
  func.func @transform_9(%arg0: i32) -> (i32, i32) {
    %c0_i32 = arith.constant 0 : i32
    %c0_i32_0 = arith.constant 0 : i32
    return %arg0, %c0_i32 : i32, i32
  }
  func.func @transform_10(%arg0: i32) -> (i32, i32) {
    %c0_i32 = arith.constant 0 : i32
    %c0_i32_0 = arith.constant 0 : i32
    return %arg0, %c0_i32 : i32, i32
  }
  func.func @transform_11(%arg0: i32) -> (i32, i32) {
    %c0_i32 = arith.constant 0 : i32
    %c0_i32_0 = arith.constant 0 : i32
    return %arg0, %c0_i32 : i32, i32
  }
}

</mosaic_0001>

<llo_original>
// kernel: tpu_custom_call.1
$region0: #{tpu_custom_call.1}
  #allocation0 [shape = 'u32[]', space=smem, size = 0x4, offset = 0x4, fixed_abs, tag = 'smem constant byte address 0x4 - core index']
  #allocation1 [shape = 'u32[144,128]{1,0:T(1,128)}', space=vmem, size = 0x12000, scoped, tag = 'internal scratch']
  %s0 = inlined_call_operand.hbm [shape: f32[1024,128], index: 0, kind: input, shape index: {}]
  %s1 = inlined_call_operand.hbm [shape: bf16[128,128], index: 1, kind: input, shape index: {}]
  %s2 = inlined_call_operand.vmem [shape: f32[1,128], index: 2, kind: input, shape index: {}]
  %s3 = inlined_call_operand.hbm [shape: bf16[128,128], index: 3, kind: input, shape index: {}]
  %s4 = inlined_call_operand.vmem [shape: f32[1,128], index: 4, kind: input, shape index: {}]
  %s5 = inlined_call_operand.hbm [shape: bf16[128,128], index: 5, kind: input, shape index: {}]
  %s6 = inlined_call_operand.vmem [shape: f32[1,128], index: 6, kind: input, shape index: {}]
  %s7 = inlined_call_operand.hbm [shape: bf16[128,128], index: 7, kind: input, shape index: {}]
  %s8 = inlined_call_operand.vmem [shape: f32[1,128], index: 8, kind: input, shape index: {}]
  %s9 = inlined_call_operand.vmem [shape: f32[1024,32], index: 9, kind: output, shape index: {0}]
  %s10 = inlined_call_operand.hbm [shape: f32[1024,128], index: 10, kind: output, shape index: {1}]
  %s11 = inlined_call_operand.hbm [shape: f32[16,128], index: 11, kind: output, shape index: {2}]
  %12 = xla_tuple %s9, %s10, %s11
  %s13 = sld [smem:[#allocation0]]
  $region105: #{tpu_custom_call.1} parent=0
    _
  %s15 = ssub.s32 1, %s13
  %s16 = scalar_select 0, %s15, %s13
  $region1: #{tpu_custom_call.1} parent=0
    #allocation2 [shape = 'u8[524288]{0}', space=vmem, size = 0x80000, scoped, tag = 'input window, operand 0']
    #allocation3 [shape = 's32[2]{0}', space=sflag, size = 0x8, scoped, tag = 'scoped memory for tpu_custom_call.1']
    #allocation4 [shape = 's32[2]{0}', space=sflag, size = 0x8, scoped, tag = 'scoped memory for tpu_custom_call.1']
    #allocation5 [shape = 'u8[32768]{0}', space=vmem, size = 0x8000, scoped, tag = 'input window, operand 1, single buffered']
    #allocation6 [shape = 's32[1]{0}', space=sflag, size = 0x4, scoped, tag = 'scoped memory for tpu_custom_call.1']
    #allocation7 [shape = 'u8[32768]{0}', space=vmem, size = 0x8000, scoped, tag = 'input window, operand 3, single buffered']
    #allocation8 [shape = 'u8[32768]{0}', space=vmem, size = 0x8000, scoped, tag = 'input window, operand 5, single buffered']
    #allocation9 [shape = 's32[1]{0}', space=sflag, size = 0x4, scoped, tag = 'scoped memory for tpu_custom_call.1']
    #allocation10 [shape = 'u8[32768]{0}', space=vmem, size = 0x8000, scoped, tag = 'input window, operand 7, single buffered']
    #allocation11 [shape = 'u8[524288]{0}', space=vmem, size = 0x80000, scoped, tag = 'output window, operand 1']
    #allocation12 [shape = 'u8[8192]{0}', space=vmem, size = 0x2000, scoped, tag = 'output window, operand 2']
    #allocation13 [shape = 's32[2]{0}', space=sflag, size = 0x8, scoped, tag = 'scoped memory for tpu_custom_call.1']
    %17 = vsyncpa [#allocation3], 0
    %s18 = scalar_lea.sflag [#allocation3], 1
    %19 = vsyncpa %s18, 0
    %20 = vsyncpa [#allocation6], 0
    %21 = vsyncpa [#allocation9], 0
    %22 = vsyncpa [#allocation4], 0
    %s23 = scalar_lea.sflag [#allocation4], 1
    %24 = vsyncpa %s23, 0
    %25 = vsyncpa [#allocation13], 0
    %s26 = scalar_lea.sflag [#allocation13], 1
    %27 = vsyncpa %s26, 0
    loop: start=0, step=1, limit=4
    $region2: #{tpu_custom_call.1} parent=1 // loop_pre_header
      _
    $region3: #{tpu_custom_call.1} parent=1 // loop_header
      %s29 = sphi 0, %s33
      %p30 = scmp.ge.s32.totalorder %s29, 4
      %s39 = sphi 0, %s41
      %s42 = sphi 0, %s39
      %s43 = sphi 0, %s42
      %s59 = sphi 0, %s43
      %s63 = sphi 0, %s63
      %s65 = sphi 0, %s63
      %s66 = sphi 0, %s65
      %s80 = sphi 0, %s66
      %s84 = sphi 0, %s84
      %s86 = sphi 0, %s84
      %s87 = sphi 0, %s86
      %s101 = sphi 0, %s87
      %s105 = sphi 0, %s105
      %s107 = sphi 0, %s105
      %s108 = sphi 0, %s107
      %s122 = sphi 0, %s108
      %s126 = sphi 0, %s126
      %s128 = sphi 0, %s126
      %s129 = sphi 0, %s128
      %s143 = sphi 0, %s129
      %s147 = sphi 0, %s147
      %s149 = sphi 0, %s147
      %s150 = sphi 0, %s149
      %s164 = sphi 0, %s150
      %s168 = sphi 0, %s168
      %s170 = sphi 0, %s168
      %s171 = sphi 0, %s170
      %s185 = sphi 0, %s171
      %s189 = sphi 0, %s189
      %s191 = sphi 0, %s189
      %s192 = sphi 0, %s191
      %s206 = sphi 0, %s192
      %s210 = sphi 0, %s210
      %s212 = sphi 0, %s210
      %s213 = sphi 0, %s212
      %s227 = sphi 0, %s213
      %s233 = sphi 0, %s235
      %s236 = sphi 0, %s233
      %s237 = sphi 0, %s236
      %s253 = sphi 0, %s237
      %s259 = sphi 0, %s261
      %s262 = sphi 0, %s259
      %s263 = sphi 0, %s262
      %s279 = sphi 0, %s263
      %s285 = sphi 0, %s287
      %s288 = sphi 0, %s285
      %s289 = sphi 0, %s288
      %s305 = sphi 0, %s289
    $region4: #{tpu_custom_call.1} parent=1 // loop_header_branch
      %32 = sbr.rel (%p30) target = $region8
    $region5: #{tpu_custom_call.1} parent=1 // loop_body
      %s34 = ssub.s32 %s29, 1
      %s35 = ssub.s32 %s29, 2
      %s36 = sadd.s32 %s29, 1
      %s37 = ssub.s32 %s29, %s36
      %p38 = scmp.eq.s32.totalorder %s37, 0
      %s40 = sadd.s32 %s39, 1
      %s41 = scalar_select %p38, %s39, %s40
      %p44 = pneg %p38
      %p45 = scmp.eq.s32.totalorder %s29, 1
      %p46 = por %p44, %p45
      %p47 = scmp.ne.s32.totalorder %s39, %s42
      %p48 = scmp.eq.s32.totalorder %s29, 0
      %p49 = por %p47, %p48
      %p50 = scmp.ne.s32.totalorder %s39, %s42
      %p51 = scmp.eq.s32.totalorder %s34, 1
      %p52 = por %p50, %p51
      %p53 = scmp.ne.s32.totalorder %s42, %s43
      %p54 = scmp.eq.s32.totalorder %s34, 0
      %p55 = por %p53, %p54
      %p56 = scmp.ne.s32.totalorder %s42, %s43
      %p57 = scmp.eq.s32.totalorder %s35, 1
      %p58 = por %p56, %p57
      %p60 = scmp.ne.s32.totalorder %s43, %s59
      %p61 = scmp.eq.s32.totalorder %s35, 0
      %p62 = por %p60, %p61
      %s64 = sadd.s32 %s63, 1
      %p67 = scmp.eq.s32.totalorder %s29, 1
      %p68 = scmp.ne.s32.totalorder %s63, %s65
      %p69 = scmp.eq.s32.totalorder %s29, 0
      %p70 = por %p68, %p69
      %p71 = scmp.ne.s32.totalorder %s63, %s65
      %p72 = scmp.eq.s32.totalorder %s34, 1
      %p73 = por %p71, %p72
      %p74 = scmp.ne.s32.totalorder %s65, %s66
      %p75 = scmp.eq.s32.totalorder %s34, 0
      %p76 = por %p74, %p75
      %p77 = scmp.ne.s32.totalorder %s65, %s66
      %p78 = scmp.eq.s32.totalorder %s35, 1
      %p79 = por %p77, %p78
      %p81 = scmp.ne.s32.totalorder %s66, %s80
      %p82 = scmp.eq.s32.totalorder %s35, 0
      %p83 = por %p81, %p82
      %s85 = sadd.s32 %s84, 1
      %p88 = scmp.eq.s32.totalorder %s29, 1
      %p89 = scmp.ne.s32.totalorder %s84, %s86
      %p90 = scmp.eq.s32.totalorder %s29, 0
      %p91 = por %p89, %p90
      %p92 = scmp.ne.s32.totalorder %s84, %s86
      %p93 = scmp.eq.s32.totalorder %s34, 1
      %p94 = por %p92, %p93
      %p95 = scmp.ne.s32.totalorder %s86, %s87
      %p96 = scmp.eq.s32.totalorder %s34, 0
      %p97 = por %p95, %p96
      %p98 = scmp.ne.s32.totalorder %s86, %s87
      %p99 = scmp.eq.s32.totalorder %s35, 1
      %p100 = por %p98, %p99
      %p102 = scmp.ne.s32.totalorder %s87, %s101
      %p103 = scmp.eq.s32.totalorder %s35, 0
      %p104 = por %p102, %p103
      %s106 = sadd.s32 %s105, 1
      %p109 = scmp.eq.s32.totalorder %s29, 1
      %p110 = scmp.ne.s32.totalorder %s105, %s107
      %p111 = scmp.eq.s32.totalorder %s29, 0
      %p112 = por %p110, %p111
      %p113 = scmp.ne.s32.totalorder %s105, %s107
      %p114 = scmp.eq.s32.totalorder %s34, 1
      %p115 = por %p113, %p114
      %p116 = scmp.ne.s32.totalorder %s107, %s108
      %p117 = scmp.eq.s32.totalorder %s34, 0
      %p118 = por %p116, %p117
      %p119 = scmp.ne.s32.totalorder %s107, %s108
      %p120 = scmp.eq.s32.totalorder %s35, 1
      %p121 = por %p119, %p120
      %p123 = scmp.ne.s32.totalorder %s108, %s122
      %p124 = scmp.eq.s32.totalorder %s35, 0
      %p125 = por %p123, %p124
      %s127 = sadd.s32 %s126, 1
      %p130 = scmp.eq.s32.totalorder %s29, 1
      %p131 = scmp.ne.s32.totalorder %s126, %s128
      %p132 = scmp.eq.s32.totalorder %s29, 0
      %p133 = por %p131, %p132
      %p134 = scmp.ne.s32.totalorder %s126, %s128
      %p135 = scmp.eq.s32.totalorder %s34, 1
      %p136 = por %p134, %p135
      %p137 = scmp.ne.s32.totalorder %s128, %s129
      %p138 = scmp.eq.s32.totalorder %s34, 0
      %p139 = por %p137, %p138
      %p140 = scmp.ne.s32.totalorder %s128, %s129
      %p141 = scmp.eq.s32.totalorder %s35, 1
      %p142 = por %p140, %p141
      %p144 = scmp.ne.s32.totalorder %s129, %s143
      %p145 = scmp.eq.s32.totalorder %s35, 0
      %p146 = por %p144, %p145
      %s148 = sadd.s32 %s147, 1
      %p151 = scmp.eq.s32.totalorder %s29, 1
      %p152 = scmp.ne.s32.totalorder %s147, %s149
      %p153 = scmp.eq.s32.totalorder %s29, 0
      %p154 = por %p152, %p153
      %p155 = scmp.ne.s32.totalorder %s147, %s149
      %p156 = scmp.eq.s32.totalorder %s34, 1
      %p157 = por %p155, %p156
      %p158 = scmp.ne.s32.totalorder %s149, %s150
      %p159 = scmp.eq.s32.totalorder %s34, 0
      %p160 = por %p158, %p159
      %p161 = scmp.ne.s32.totalorder %s149, %s150
      %p162 = scmp.eq.s32.totalorder %s35, 1
      %p163 = por %p161, %p162
      %p165 = scmp.ne.s32.totalorder %s150, %s164
      %p166 = scmp.eq.s32.totalorder %s35, 0
      %p167 = por %p165, %p166
      %s169 = sadd.s32 %s168, 1
      %p172 = scmp.eq.s32.totalorder %s29, 1
      %p173 = scmp.ne.s32.totalorder %s168, %s170
      %p174 = scmp.eq.s32.totalorder %s29, 0
      %p175 = por %p173, %p174
      %p176 = scmp.ne.s32.totalorder %s168, %s170
      %p177 = scmp.eq.s32.totalorder %s34, 1
      %p178 = por %p176, %p177
      %p179 = scmp.ne.s32.totalorder %s170, %s171
      %p180 = scmp.eq.s32.totalorder %s34, 0
      %p181 = por %p179, %p180
      %p182 = scmp.ne.s32.totalorder %s170, %s171
      %p183 = scmp.eq.s32.totalorder %s35, 1
      %p184 = por %p182, %p183
      %p186 = scmp.ne.s32.totalorder %s171, %s185
      %p187 = scmp.eq.s32.totalorder %s35, 0
      %p188 = por %p186, %p187
      %s190 = sadd.s32 %s189, 1
      %p193 = scmp.eq.s32.totalorder %s29, 1
      %p194 = scmp.ne.s32.totalorder %s189, %s191
      %p195 = scmp.eq.s32.totalorder %s29, 0
      %p196 = por %p194, %p195
      %p197 = scmp.ne.s32.totalorder %s189, %s191
      %p198 = scmp.eq.s32.totalorder %s34, 1
      %p199 = por %p197, %p198
      %p200 = scmp.ne.s32.totalorder %s191, %s192
      %p201 = scmp.eq.s32.totalorder %s34, 0
      %p202 = por %p200, %p201
      %p203 = scmp.ne.s32.totalorder %s191, %s192
      %p204 = scmp.eq.s32.totalorder %s35, 1
      %p205 = por %p203, %p204
      %p207 = scmp.ne.s32.totalorder %s192, %s206
      %p208 = scmp.eq.s32.totalorder %s35, 0
      %p209 = por %p207, %p208
      %s211 = sadd.s32 %s210, 1
      %p214 = scmp.eq.s32.totalorder %s29, 1
      %p215 = scmp.ne.s32.totalorder %s210, %s212
      %p216 = scmp.eq.s32.totalorder %s29, 0
      %p217 = por %p215, %p216
      %p218 = scmp.ne.s32.totalorder %s210, %s212
      %p219 = scmp.eq.s32.totalorder %s34, 1
      %p220 = por %p218, %p219
      %p221 = scmp.ne.s32.totalorder %s212, %s213
      %p222 = scmp.eq.s32.totalorder %s34, 0
      %p223 = por %p221, %p222
      %p224 = scmp.ne.s32.totalorder %s212, %s213
      %p225 = scmp.eq.s32.totalorder %s35, 1
      %p226 = por %p224, %p225
      %p228 = scmp.ne.s32.totalorder %s213, %s227
      %p229 = scmp.eq.s32.totalorder %s35, 0
      %p230 = por %p228, %p229
      %s231 = ssub.s32 %s29, %s36
      %p232 = scmp.eq.s32.totalorder %s231, 0
      %s234 = sadd.s32 %s233, 1
      %s235 = scalar_select %p232, %s233, %s234
      %p238 = pneg %p232
      %p239 = scmp.eq.s32.totalorder %s29, 1
      %p240 = por %p238, %p239
      %p241 = scmp.ne.s32.totalorder %s233, %s236
      %p242 = scmp.eq.s32.totalorder %s29, 0
      %p243 = por %p241, %p242
      %p244 = scmp.ne.s32.totalorder %s233, %s236
      %p245 = scmp.eq.s32.totalorder %s34, 1
      %p246 = por %p244, %p245
      %p247 = scmp.ne.s32.totalorder %s236, %s237
      %p248 = scmp.eq.s32.totalorder %s34, 0
      %p249 = por %p247, %p248
      %p250 = scmp.ne.s32.totalorder %s236, %s237
      %p251 = scmp.eq.s32.totalorder %s35, 1
      %p252 = por %p250, %p251
      %p254 = scmp.ne.s32.totalorder %s237, %s253
      %p255 = scmp.eq.s32.totalorder %s35, 0
      %p256 = por %p254, %p255
      %s257 = ssub.s32 %s29, %s36
      %p258 = scmp.eq.s32.totalorder %s257, 0
      %s260 = sadd.s32 %s259, 1
      %s261 = scalar_select %p258, %s259, %s260
      %p264 = pneg %p258
      %p265 = scmp.eq.s32.totalorder %s29, 1
      %p266 = por %p264, %p265
      %p267 = scmp.ne.s32.totalorder %s259, %s262
      %p268 = scmp.eq.s32.totalorder %s29, 0
      %p269 = por %p267, %p268
      %p270 = scmp.ne.s32.totalorder %s259, %s262
      %p271 = scmp.eq.s32.totalorder %s34, 1
      %p272 = por %p270, %p271
      %p273 = scmp.ne.s32.totalorder %s262, %s263
      %p274 = scmp.eq.s32.totalorder %s34, 0
      %p275 = por %p273, %p274
      %p276 = scmp.ne.s32.totalorder %s262, %s263
      %p277 = scmp.eq.s32.totalorder %s35, 1
      %p278 = por %p276, %p277
      %p280 = scmp.ne.s32.totalorder %s263, %s279
      %p281 = scmp.eq.s32.totalorder %s35, 0
      %p282 = por %p280, %p281
      %s283 = ssub.s32 %s29, %s36
      %p284 = scmp.eq.s32.totalorder %s283, 0
      %s286 = sadd.s32 %s285, 1
      %s287 = scalar_select %p284, %s285, %s286
      %p290 = pneg %p284
      %p291 = scmp.eq.s32.totalorder %s29, 1
      %p292 = por %p290, %p291
      %p293 = scmp.ne.s32.totalorder %s285, %s288
      %p294 = scmp.eq.s32.totalorder %s29, 0
      %p295 = por %p293, %p294
      %p296 = scmp.ne.s32.totalorder %s285, %s288
      %p297 = scmp.eq.s32.totalorder %s34, 1
      %p298 = por %p296, %p297
      %p299 = scmp.ne.s32.totalorder %s288, %s289
      %p300 = scmp.eq.s32.totalorder %s34, 0
      %p301 = por %p299, %p300
      %p302 = scmp.ne.s32.totalorder %s288, %s289
      %p303 = scmp.eq.s32.totalorder %s35, 1
      %p304 = por %p302, %p303
      %p306 = scmp.ne.s32.totalorder %s289, %s305
      %p307 = scmp.eq.s32.totalorder %s35, 0
      %p308 = por %p306, %p307
      %p309 = scmp.le.s32.totalorder 1, %s29
      %p310 = scmp.lt.s32.totalorder %s29, 3
      %p311 = pnand %p309, %p310
      %p312 = pneg %p311
      // Predicated region
      $region9: #{tpu_custom_call.1} parent=5 // pred_check
        _
      $region10: #{tpu_custom_call.1} parent=5 // pred_check_branch
        %314 = sbr.rel (%p311) target = $region12
      $region11: #{tpu_custom_call.1} parent=5 // pred_region
        %s315 = ssub.s32 %s29, 1
        // Predicated region
        $region13: #{tpu_custom_call.1} parent=11 // pred_check
          %p316 = pneg %p76
        $region14: #{tpu_custom_call.1} parent=11 // pred_check_branch
          %318 = sbr.rel (%p316) target = $region16
        $region15: #{tpu_custom_call.1} parent=11 // pred_region
          %s320 = ssub.s32 1024, 1024
          %321 = vsyncadd [#allocation6], %s320
          %s322 = sshll.u32 [#allocation5], 4
          %s323 = int_to_ptr.vmem [resolvable:$true] %s322
          %328 = dma.hbm_to_vmem [thread:$0]  %s1, 1024, %s323, [#allocation6], 64, 64, 4
        $region16: #{tpu_custom_call.1} parent=11 // pred_fallthru
          _
        // Predicated region
        $region17: #{tpu_custom_call.1} parent=11 // pred_check
          %p329 = pneg %p97
        $region18: #{tpu_custom_call.1} parent=11 // pred_check_branch
          %331 = sbr.rel (%p329) target = $region20
        $region19: #{tpu_custom_call.1} parent=11 // pred_region
          _
        $region20: #{tpu_custom_call.1} parent=11 // pred_fallthru
          _
        // Predicated region
        $region21: #{tpu_custom_call.1} parent=11 // pred_check
          %p332 = pneg %p118
        $region22: #{tpu_custom_call.1} parent=11 // pred_check_branch
          %334 = sbr.rel (%p332) target = $region24
        $region23: #{tpu_custom_call.1} parent=11 // pred_region
          %s336 = ssub.s32 1024, 1024
          %337 = vsyncadd [#allocation6], %s336
          %s338 = sshll.u32 [#allocation7], 4
          %s339 = int_to_ptr.vmem [resolvable:$true] %s338
          %344 = dma.hbm_to_vmem [thread:$0]  %s3, 1024, %s339, [#allocation6], 64, 64, 4
        $region24: #{tpu_custom_call.1} parent=11 // pred_fallthru
          _
        // Predicated region
        $region25: #{tpu_custom_call.1} parent=11 // pred_check
          %p345 = pneg %p139
        $region26: #{tpu_custom_call.1} parent=11 // pred_check_branch
          %347 = sbr.rel (%p345) target = $region28
        $region27: #{tpu_custom_call.1} parent=11 // pred_region
          _
        $region28: #{tpu_custom_call.1} parent=11 // pred_fallthru
          _
        // Predicated region
        $region29: #{tpu_custom_call.1} parent=11 // pred_check
          %p348 = pneg %p160
        $region30: #{tpu_custom_call.1} parent=11 // pred_check_branch
          %350 = sbr.rel (%p348) target = $region32
        $region31: #{tpu_custom_call.1} parent=11 // pred_region
          %s352 = ssub.s32 1024, 1024
          %353 = vsyncadd [#allocation9], %s352
          %s354 = sshll.u32 [#allocation8], 4
          %s355 = int_to_ptr.vmem [resolvable:$true] %s354
          %360 = dma.hbm_to_vmem [thread:$0]  %s5, 1024, %s355, [#allocation9], 64, 64, 4
        $region32: #{tpu_custom_call.1} parent=11 // pred_fallthru
          _
        // Predicated region
        $region33: #{tpu_custom_call.1} parent=11 // pred_check
          %p361 = pneg %p181
        $region34: #{tpu_custom_call.1} parent=11 // pred_check_branch
          %363 = sbr.rel (%p361) target = $region36
        $region35: #{tpu_custom_call.1} parent=11 // pred_region
          _
        $region36: #{tpu_custom_call.1} parent=11 // pred_fallthru
          _
        // Predicated region
        $region37: #{tpu_custom_call.1} parent=11 // pred_check
          %p364 = pneg %p202
        $region38: #{tpu_custom_call.1} parent=11 // pred_check_branch
          %366 = sbr.rel (%p364) target = $region40
        $region39: #{tpu_custom_call.1} parent=11 // pred_region
          %s368 = ssub.s32 1024, 1024
          %369 = vsyncadd [#allocation9], %s368
          %s370 = sshll.u32 [#allocation10], 4
          %s371 = int_to_ptr.vmem [resolvable:$true] %s370
          %376 = dma.hbm_to_vmem [thread:$0]  %s7, 1024, %s371, [#allocation9], 64, 64, 4
        $region40: #{tpu_custom_call.1} parent=11 // pred_fallthru
          _
        // Predicated region
        $region41: #{tpu_custom_call.1} parent=11 // pred_check
          %p377 = pneg %p223
        $region42: #{tpu_custom_call.1} parent=11 // pred_check_branch
          %379 = sbr.rel (%p377) target = $region44
        $region43: #{tpu_custom_call.1} parent=11 // pred_region
          _
        $region44: #{tpu_custom_call.1} parent=11 // pred_fallthru
          _
      $region12: #{tpu_custom_call.1} parent=5 // pred_fallthru
        _
      %p380 = scmp.lt.s32.totalorder %s29, 2
      // Predicated region
      $region45: #{tpu_custom_call.1} parent=5 // pred_check
        %p381 = pneg %p380
      $region46: #{tpu_custom_call.1} parent=5 // pred_check_branch
        %383 = sbr.rel (%p381) target = $region48
      $region47: #{tpu_custom_call.1} parent=5 // pred_region
        // Predicated region
        $region49: #{tpu_custom_call.1} parent=47 // pred_check
          %p384 = pneg %p49
        $region50: #{tpu_custom_call.1} parent=47 // pred_check_branch
          %386 = sbr.rel (%p384) target = $region52
        $region51: #{tpu_custom_call.1} parent=47 // pred_region
          %s387 = sand.u32 %s39, 1
          %s388 = scalar_lea.sflag [#allocation3], %s387
          %s389 = sand.u32 %s39, 1
          %s390 = smul.addr %s389, 512
          %s391 = scalar_lea.vmem [#allocation2], %s390
          %s392 = smul.u32 64, %s29
          %s394 = ssub.s32 8192, 8192
          %395 = vsyncadd %s388, %s394
          %s396 = smul.addr %s392, 128
          %s397 = scalar_lea.hbm %s0, %s396
          %s398 = sshll.u32 %s391, 4
          %s399 = int_to_ptr.vmem [resolvable:$true] %s398
          %404 = dma.hbm_to_vmem [thread:$0]  %s397, 8192, %s399, %s388, 128, 128, 8
        $region52: #{tpu_custom_call.1} parent=47 // pred_fallthru
          _
      $region48: #{tpu_custom_call.1} parent=5 // pred_fallthru
        _
      %p405 = scmp.le.s32.totalorder 1, %s29
      %p406 = scmp.lt.s32.totalorder %s29, 3
      %p407 = pnand %p405, %p406
      %p408 = pneg %p407
      // Predicated region
      $region53: #{tpu_custom_call.1} parent=5 // pred_check
        _
      $region54: #{tpu_custom_call.1} parent=5 // pred_check_branch
        %410 = sbr.rel (%p407) target = $region56
      $region55: #{tpu_custom_call.1} parent=5 // pred_region
        %s411 = ssub.s32 %s29, 1
        %s412 = sand.u32 %s42, 1
        %s413 = scalar_lea.sflag [#allocation3], %s412
        %s414 = sand.u32 %s42, 1
        %s415 = smul.addr %s414, 512
        %s416 = scalar_lea.vmem [#allocation2], %s415
        // Predicated region
        $region57: #{tpu_custom_call.1} parent=55 // pred_check
          %p417 = pneg %p55
        $region58: #{tpu_custom_call.1} parent=55 // pred_check_branch
          %419 = sbr.rel (%p417) target = $region60
        $region59: #{tpu_custom_call.1} parent=55 // pred_region
          %420 = dma.done %s413, 8192
        $region60: #{tpu_custom_call.1} parent=55 // pred_fallthru
          _
        // Predicated region
        $region61: #{tpu_custom_call.1} parent=55 // pred_check
          %p421 = pneg %p76
        $region62: #{tpu_custom_call.1} parent=55 // pred_check_branch
          %423 = sbr.rel (%p421) target = $region64
        $region63: #{tpu_custom_call.1} parent=55 // pred_region
          %424 = dma.done [#allocation6], 1024
        $region64: #{tpu_custom_call.1} parent=55 // pred_fallthru
          _
        // Predicated region
        $region65: #{tpu_custom_call.1} parent=55 // pred_check
          %p425 = pneg %p118
        $region66: #{tpu_custom_call.1} parent=55 // pred_check_branch
          %427 = sbr.rel (%p425) target = $region68
        $region67: #{tpu_custom_call.1} parent=55 // pred_region
          %428 = dma.done [#allocation6], 1024
        $region68: #{tpu_custom_call.1} parent=55 // pred_fallthru
          _
        // Predicated region
        $region69: #{tpu_custom_call.1} parent=55 // pred_check
          %p429 = pneg %p160
        $region70: #{tpu_custom_call.1} parent=55 // pred_check_branch
          %431 = sbr.rel (%p429) target = $region72
        $region71: #{tpu_custom_call.1} parent=55 // pred_region
          %432 = dma.done [#allocation9], 1024
        $region72: #{tpu_custom_call.1} parent=55 // pred_fallthru
          _
        // Predicated region
        $region73: #{tpu_custom_call.1} parent=55 // pred_check
          %p433 = pneg %p202
        $region74: #{tpu_custom_call.1} parent=55 // pred_check_branch
          %435 = sbr.rel (%p433) target = $region76
        $region75: #{tpu_custom_call.1} parent=55 // pred_region
          %436 = dma.done [#allocation9], 1024
        $region76: #{tpu_custom_call.1} parent=55 // pred_fallthru
          _
        %s437 = sand.u32 %s42, 1
        %s438 = scalar_lea.sflag [#allocation3], %s437
        %s439 = sand.u32 %s42, 1
        %s440 = smul.addr %s439, 512
        %s441 = scalar_lea.vmem [#allocation2], %s440
        %p442 = pneg %p55
        %p443 = pneg %p52
        %p444 = pneg %p76
        %p445 = pneg %p73
        %p446 = pneg %p97
        %p447 = pneg %p94
        %p448 = pneg %p118
        %p449 = pneg %p115
        %p450 = pneg %p139
        %p451 = pneg %p136
        %p452 = pneg %p160
        %p453 = pneg %p157
        %p454 = pneg %p181
        %p455 = pneg %p178
        %p456 = pneg %p202
        %p457 = pneg %p199
        %p458 = pneg %p223
        %p459 = pneg %p220
        %p460 = pneg %p249
        %p461 = pneg %p246
        %s462 = smul.u32 64, %s34
        %p463 = scmp.lt.s32.totalorder %s462, 127
        %s464 = scalar_select %p463, %s462, 127
        %s465 = smul.addr %s464, 8
        %s466 = scalar_lea.vmem %s9, %s465
        %p467 = pneg %p275
        %p468 = pneg %p272
        %s469 = sand.u32 %s262, 1
        %s470 = scalar_lea.sflag [#allocation4], %s469
        %s471 = sand.u32 %s262, 1
        %s472 = smul.addr %s471, 512
        %s473 = scalar_lea.vmem [#allocation11], %s472
        %p474 = pneg %p301
        %p475 = pneg %p298
        %s476 = sand.u32 %s288, 1
        %s477 = scalar_lea.sflag [#allocation13], %s476
        %s478 = sand.u32 %s288, 1
        %s479 = smul.addr %s478, 8
        %s480 = scalar_lea.vmem [#allocation12], %s479
        %s481 = smul.u32 64, %s34
        %s482 = smul.u32 64, %s34
        %p483 = scmp.lt.s32.totalorder %s482, 127
        %s484 = scalar_select %p483, %s482, 127
        %s485 = smul.addr %s484, 8
        %s486 = scalar_lea.vmem %s9, %s485
        %s487 = smul.u32 64, %s34
        %s488 = smul.u32 64, %s34
        %v490 = vld [vmem:[%s416] sm:$0xff]
        %v491 = vld [vmem:[%s416 + $0x8] sm:$0xff]
        %v492 = vld [vmem:[%s416 + $0x10] sm:$0xff]
        %v493 = vld [vmem:[%s416 + $0x18] sm:$0xff]
        %v494 = vld [vmem:[%s416 + $0x20] sm:$0xff]
        %v495 = vld [vmem:[%s416 + $0x28] sm:$0xff]
        %v496 = vld [vmem:[%s416 + $0x30] sm:$0xff]
        %v497 = vld [vmem:[%s416 + $0x38] sm:$0xff]
        %v498 = vld [vmem:[%s416 + $0x40] sm:$0xff]
        %v499 = vld [vmem:[%s416 + $0x48] sm:$0xff]
        %v500 = vld [vmem:[%s416 + $0x50] sm:$0xff]
        %v501 = vld [vmem:[%s416 + $0x58] sm:$0xff]
        %v502 = vld [vmem:[%s416 + $0x60] sm:$0xff]
        %v503 = vld [vmem:[%s416 + $0x68] sm:$0xff]
        %v504 = vld [vmem:[%s416 + $0x70] sm:$0xff]
        %v505 = vld [vmem:[%s416 + $0x78] sm:$0xff]
        %v506 = vld [vmem:[%s416 + $0x80] sm:$0xff]
        %v507 = vld [vmem:[%s416 + $0x88] sm:$0xff]
        %v508 = vld [vmem:[%s416 + $0x90] sm:$0xff]
        %v509 = vld [vmem:[%s416 + $0x98] sm:$0xff]
        %v510 = vld [vmem:[%s416 + $0xa0] sm:$0xff]
        %v511 = vld [vmem:[%s416 + $0xa8] sm:$0xff]
        %v512 = vld [vmem:[%s416 + $0xb0] sm:$0xff]
        %v513 = vld [vmem:[%s416 + $0xb8] sm:$0xff]
        %v514 = vld [vmem:[%s416 + $0xc0] sm:$0xff]
        %v515 = vld [vmem:[%s416 + $0xc8] sm:$0xff]
        %v516 = vld [vmem:[%s416 + $0xd0] sm:$0xff]
        %v517 = vld [vmem:[%s416 + $0xd8] sm:$0xff]
        %v518 = vld [vmem:[%s416 + $0xe0] sm:$0xff]
        %v519 = vld [vmem:[%s416 + $0xe8] sm:$0xff]
        %v520 = vld [vmem:[%s416 + $0xf0] sm:$0xff]
        %v521 = vld [vmem:[%s416 + $0xf8] sm:$0xff]
        %v522 = vld [vmem:[%s416 + $0x100] sm:$0xff]
        %v523 = vld [vmem:[%s416 + $0x108] sm:$0xff]
        %v524 = vld [vmem:[%s416 + $0x110] sm:$0xff]
        %v525 = vld [vmem:[%s416 + $0x118] sm:$0xff]
        %v526 = vld [vmem:[%s416 + $0x120] sm:$0xff]
        %v527 = vld [vmem:[%s416 + $0x128] sm:$0xff]
        %v528 = vld [vmem:[%s416 + $0x130] sm:$0xff]
        %v529 = vld [vmem:[%s416 + $0x138] sm:$0xff]
        %v530 = vld [vmem:[%s416 + $0x140] sm:$0xff]
        %v531 = vld [vmem:[%s416 + $0x148] sm:$0xff]
        %v532 = vld [vmem:[%s416 + $0x150] sm:$0xff]
        %v533 = vld [vmem:[%s416 + $0x158] sm:$0xff]
        %v534 = vld [vmem:[%s416 + $0x160] sm:$0xff]
        %v535 = vld [vmem:[%s416 + $0x168] sm:$0xff]
        %v536 = vld [vmem:[%s416 + $0x170] sm:$0xff]
        %v537 = vld [vmem:[%s416 + $0x178] sm:$0xff]
        %v538 = vld [vmem:[%s416 + $0x180] sm:$0xff]
        %v539 = vld [vmem:[%s416 + $0x188] sm:$0xff]
        %v540 = vld [vmem:[%s416 + $0x190] sm:$0xff]
        %v541 = vld [vmem:[%s416 + $0x198] sm:$0xff]
        %v542 = vld [vmem:[%s416 + $0x1a0] sm:$0xff]
        %v543 = vld [vmem:[%s416 + $0x1a8] sm:$0xff]
        %v544 = vld [vmem:[%s416 + $0x1b0] sm:$0xff]
        %v545 = vld [vmem:[%s416 + $0x1b8] sm:$0xff]
        %v546 = vld [vmem:[%s416 + $0x1c0] sm:$0xff]
        %v547 = vld [vmem:[%s416 + $0x1c8] sm:$0xff]
        %v548 = vld [vmem:[%s416 + $0x1d0] sm:$0xff]
        %v549 = vld [vmem:[%s416 + $0x1d8] sm:$0xff]
        %v550 = vld [vmem:[%s416 + $0x1e0] sm:$0xff]
        %v551 = vld [vmem:[%s416 + $0x1e8] sm:$0xff]
        %v552 = vld [vmem:[%s416 + $0x1f0] sm:$0xff]
        %v553 = vld [vmem:[%s416 + $0x1f8] sm:$0xff]
        %v554 = vpack.c.bf16 %v491, %v490
        %v555 = vpack.c.bf16 %v493, %v492
        %v556 = vpack.c.bf16 %v495, %v494
        %v557 = vpack.c.bf16 %v497, %v496
        %v558 = vpack.c.bf16 %v499, %v498
        %v559 = vpack.c.bf16 %v501, %v500
        %v560 = vpack.c.bf16 %v503, %v502
        %v561 = vpack.c.bf16 %v505, %v504
        %v562 = vpack.c.bf16 %v507, %v506
        %v563 = vpack.c.bf16 %v509, %v508
        %v564 = vpack.c.bf16 %v511, %v510
        %v565 = vpack.c.bf16 %v513, %v512
        %v566 = vpack.c.bf16 %v515, %v514
        %v567 = vpack.c.bf16 %v517, %v516
        %v568 = vpack.c.bf16 %v519, %v518
        %v569 = vpack.c.bf16 %v521, %v520
        %v570 = vpack.c.bf16 %v523, %v522
        %v571 = vpack.c.bf16 %v525, %v524
        %v572 = vpack.c.bf16 %v527, %v526
        %v573 = vpack.c.bf16 %v529, %v528
        %v574 = vpack.c.bf16 %v531, %v530
        %v575 = vpack.c.bf16 %v533, %v532
        %v576 = vpack.c.bf16 %v535, %v534
        %v577 = vpack.c.bf16 %v537, %v536
        %v578 = vpack.c.bf16 %v539, %v538
        %v579 = vpack.c.bf16 %v541, %v540
        %v580 = vpack.c.bf16 %v543, %v542
        %v581 = vpack.c.bf16 %v545, %v544
        %v582 = vpack.c.bf16 %v547, %v546
        %v583 = vpack.c.bf16 %v549, %v548
        %v584 = vpack.c.bf16 %v551, %v550
        %v585 = vpack.c.bf16 %v553, %v552
        %v586 = vld [vmem:[#allocation5] sm:$0xf]
        %v587 = vld [vmem:[#allocation5 + $0x4] sm:$0xf]
        %v588 = vld [vmem:[#allocation5 + $0x8] sm:$0xf]
        %v589 = vld [vmem:[#allocation5 + $0xc] sm:$0xf]
        %v590 = vld [vmem:[#allocation5 + $0x10] sm:$0xf]
        %v591 = vld [vmem:[#allocation5 + $0x14] sm:$0xf]
        %v592 = vld [vmem:[#allocation5 + $0x18] sm:$0xf]
        %v593 = vld [vmem:[#allocation5 + $0x1c] sm:$0xf]
        %v594 = vld [vmem:[#allocation5 + $0x20] sm:$0xf]
        %v595 = vld [vmem:[#allocation5 + $0x24] sm:$0xf]
        %v596 = vld [vmem:[#allocation5 + $0x28] sm:$0xf]
        %v597 = vld [vmem:[#allocation5 + $0x2c] sm:$0xf]
        %v598 = vld [vmem:[#allocation5 + $0x30] sm:$0xf]
        %v599 = vld [vmem:[#allocation5 + $0x34] sm:$0xf]
        %v600 = vld [vmem:[#allocation5 + $0x38] sm:$0xf]
        %v601 = vld [vmem:[#allocation5 + $0x3c] sm:$0xf]
        %v602 = vld [vmem:[%s2] sm:$0x1]
        %v604 = vlaneseq
        %v605 = vshrl.u32 %v604, 7
        %v606 = vsub.s32 0, %v605
        %v607 = vrot.slane %v602, %v606
        %v625 = vunpack.c.l.b16 %v586
        %v626 = vunpack.c.l.b16 %v587
        %v627 = vunpack.c.l.b16 %v588
        %v628 = vunpack.c.l.b16 %v589
        %v629 = vunpack.c.l.b16 %v590
        %v630 = vunpack.c.l.b16 %v591
        %v631 = vunpack.c.l.b16 %v592
        %v632 = vunpack.c.l.b16 %v593
        %v633 = vunpack.c.l.b16 %v594
        %v634 = vunpack.c.l.b16 %v595
        %v635 = vunpack.c.l.b16 %v596
        %v636 = vunpack.c.l.b16 %v597
        %v637 = vunpack.c.l.b16 %v598
        %v638 = vunpack.c.l.b16 %v599
        %v639 = vunpack.c.l.b16 %v600
        %v640 = vunpack.c.l.b16 %v601
        %v641 = vpack.c.b16 %v626, %v625
        %v642 = vpack.c.b16 %v628, %v627
        %v643 = vpack.c.b16 %v630, %v629
        %v644 = vpack.c.b16 %v632, %v631
        %v645 = vpack.c.b16 %v634, %v633
        %v646 = vpack.c.b16 %v636, %v635
        %v647 = vpack.c.b16 %v638, %v637
        %v648 = vpack.c.b16 %v640, %v639
        %657 = vmatprep.subr.bf16.mxu0 0
        %658 = vmatpush1.bf16.msra.mxu0 %v641
        %659 = vmatprep.subr.bf16.mxu0 0
        %660 = vmatpush1.bf16.msra.mxu0 %v642
        %661 = vmatprep.subr.bf16.mxu0 0
        %662 = vmatpush1.bf16.msra.mxu0 %v643
        %663 = vmatprep.subr.bf16.mxu0 0
        %664 = vmatpush1.bf16.msra.mxu0 %v644
        %665 = vmatprep.subr.bf16.mxu0 0
        %666 = vmatpush1.bf16.msra.mxu0 %v645
        %667 = vmatprep.subr.bf16.mxu0 0
        %668 = vmatpush1.bf16.msra.mxu0 %v646
        %669 = vmatprep.subr.bf16.mxu0 0
        %670 = vmatpush1.bf16.msra.mxu0 %v647
        %671 = vmatprep.subr.bf16.mxu0 0
        %672 = vmatpush1.bf16.msra.mxu0 %v648
        %673 = vmatprep.subr.bf16.mxu0 0
        %674 = vmatpush1.bf16.msra.mxu0 0
        %675 = vmatprep.subr.bf16.mxu0 0
        %676 = vmatpush1.bf16.msra.mxu0 0
        %677 = vmatprep.subr.bf16.mxu0 0
        %678 = vmatpush1.bf16.msra.mxu0 0
        %679 = vmatprep.subr.bf16.mxu0 0
        %680 = vmatpush1.bf16.msra.mxu0 0
        %681 = vmatprep.subr.bf16.mxu0 0
        %682 = vmatpush1.bf16.msra.mxu0 0
        %683 = vmatprep.subr.bf16.mxu0 0
        %684 = vmatpush1.bf16.msra.mxu0 0
        %685 = vmatprep.subr.bf16.mxu0 0
        %686 = vmatpush1.bf16.msra.mxu0 0
        %687 = vmatprep.subr.bf16.mxu0 0
        %688 = vmatpush1.bf16.msra.mxu0 0
        %689 = vmatprep.mubr.bf16.mxu0 0
        %690 = vmatmul.mubr.bf16.gmra.mrb[0].mxu0 %v554
        %v691 = vpop.f32.mrb[0].mxu0
        %v692 = vadd.f32 %v607, %v691
        %v693 = vpop.f32.mrb[0].mxu0
        %v694 = vpop.f32.mrb[0].mxu0
        %v695 = vadd.f32 %v607, %v694
        %v696 = vpop.f32.mrb[0].mxu0
        %697 = vmatprep.mubr.bf16.mxu0 0
        %698 = vmatmul.mubr.bf16.gmra.mrb[0].mxu0 %v555
        %v699 = vpop.f32.mrb[0].mxu0
        %v700 = vadd.f32 %v607, %v699
        %v701 = vpop.f32.mrb[0].mxu0
        %v702 = vpop.f32.mrb[0].mxu0
        %v703 = vadd.f32 %v607, %v702
        %v704 = vpop.f32.mrb[0].mxu0
        %705 = vmatprep.mubr.bf16.mxu0 0
        %706 = vmatmul.mubr.bf16.gmra.mrb[0].mxu0 %v556
        %v707 = vpop.f32.mrb[0].mxu0
        %v708 = vadd.f32 %v607, %v707
        %v709 = vpop.f32.mrb[0].mxu0
        %v710 = vpop.f32.mrb[0].mxu0
        %v711 = vadd.f32 %v607, %v710
        %v712 = vpop.f32.mrb[0].mxu0
        %713 = vmatprep.mubr.bf16.mxu0 0
        %714 = vmatmul.mubr.bf16.gmra.mrb[0].mxu0 %v557
        %v715 = vpop.f32.mrb[0].mxu0
        %v716 = vadd.f32 %v607, %v715
        %v717 = vpop.f32.mrb[0].mxu0
        %v718 = vpop.f32.mrb[0].mxu0
        %v719 = vadd.f32 %v607, %v718
        %v720 = vpop.f32.mrb[0].mxu0
        %721 = vmatprep.mubr.bf16.mxu0 0
        %722 = vmatmul.mubr.bf16.gmra.mrb[0].mxu0 %v558
        %v723 = vpop.f32.mrb[0].mxu0
        %v724 = vadd.f32 %v607, %v723
        %v725 = vpop.f32.mrb[0].mxu0
        %v726 = vpop.f32.mrb[0].mxu0
        %v727 = vadd.f32 %v607, %v726
        %v728 = vpop.f32.mrb[0].mxu0
        %729 = vmatprep.mubr.bf16.mxu0 0
        %730 = vmatmul.mubr.bf16.gmra.mrb[0].mxu0 %v559
        %v731 = vpop.f32.mrb[0].mxu0
        %v732 = vadd.f32 %v607, %v731
        %v733 = vpop.f32.mrb[0].mxu0
        %v734 = vpop.f32.mrb[0].mxu0
        %v735 = vadd.f32 %v607, %v734
        %v736 = vpop.f32.mrb[0].mxu0
        %737 = vmatprep.mubr.bf16.mxu0 0
        %738 = vmatmul.mubr.bf16.gmra.mrb[0].mxu0 %v560
        %v739 = vpop.f32.mrb[0].mxu0
        %v740 = vadd.f32 %v607, %v739
        %v741 = vpop.f32.mrb[0].mxu0
        %v742 = vpop.f32.mrb[0].mxu0
        %v743 = vadd.f32 %v607, %v742
        %v744 = vpop.f32.mrb[0].mxu0
        %745 = vmatprep.mubr.bf16.mxu0 0
        %746 = vmatmul.mubr.bf16.gmra.mrb[0].mxu0 %v561
        %v747 = vpop.f32.mrb[0].mxu0
        %v748 = vadd.f32 %v607, %v747
        %v749 = vpop.f32.mrb[0].mxu0
        %v750 = vpop.f32.mrb[0].mxu0
        %v751 = vadd.f32 %v607, %v750
        %v752 = vpop.f32.mrb[0].mxu0
        %753 = vmatprep.mubr.bf16.mxu0 0
        %754 = vmatmul.mubr.bf16.gmra.mrb[0].mxu0 %v562
        %v755 = vpop.f32.mrb[0].mxu0
        %v756 = vadd.f32 %v607, %v755
        %v757 = vpop.f32.mrb[0].mxu0
        %v758 = vpop.f32.mrb[0].mxu0
        %v759 = vadd.f32 %v607, %v758
        %v760 = vpop.f32.mrb[0].mxu0
        %761 = vmatprep.mubr.bf16.mxu0 0
        %762 = vmatmul.mubr.bf16.gmra.mrb[0].mxu0 %v563
        %v763 = vpop.f32.mrb[0].mxu0
        %v764 = vadd.f32 %v607, %v763
        %v765 = vpop.f32.mrb[0].mxu0
        %v766 = vpop.f32.mrb[0].mxu0
        %v767 = vadd.f32 %v607, %v766
        %v768 = vpop.f32.mrb[0].mxu0
        %769 = vmatprep.mubr.bf16.mxu0 0
        %770 = vmatmul.mubr.bf16.gmra.mrb[0].mxu0 %v564
        %v771 = vpop.f32.mrb[0].mxu0
        %v772 = vadd.f32 %v607, %v771
        %v773 = vpop.f32.mrb[0].mxu0
        %v774 = vpop.f32.mrb[0].mxu0
        %v775 = vadd.f32 %v607, %v774
        %v776 = vpop.f32.mrb[0].mxu0
        %777 = vmatprep.mubr.bf16.mxu0 0
        %778 = vmatmul.mubr.bf16.gmra.mrb[0].mxu0 %v565
        %v779 = vpop.f32.mrb[0].mxu0
        %v780 = vadd.f32 %v607, %v779
        %v781 = vpop.f32.mrb[0].mxu0
        %v782 = vpop.f32.mrb[0].mxu0
        %v783 = vadd.f32 %v607, %v782
        %v784 = vpop.f32.mrb[0].mxu0
        %785 = vmatprep.mubr.bf16.mxu0 0
        %786 = vmatmul.mubr.bf16.gmra.mrb[0].mxu0 %v566
        %v787 = vpop.f32.mrb[0].mxu0
        %v788 = vadd.f32 %v607, %v787
        %v789 = vpop.f32.mrb[0].mxu0
        %v790 = vpop.f32.mrb[0].mxu0
        %v791 = vadd.f32 %v607, %v790
        %v792 = vpop.f32.mrb[0].mxu0
        %793 = vmatprep.mubr.bf16.mxu0 0
        %794 = vmatmul.mubr.bf16.gmra.mrb[0].mxu0 %v567
        %v795 = vpop.f32.mrb[0].mxu0
        %v796 = vadd.f32 %v607, %v795
        %v797 = vpop.f32.mrb[0].mxu0
        %v798 = vpop.f32.mrb[0].mxu0
        %v799 = vadd.f32 %v607, %v798
        %v800 = vpop.f32.mrb[0].mxu0
        %801 = vmatprep.mubr.bf16.mxu0 0
        %802 = vmatmul.mubr.bf16.gmra.mrb[0].mxu0 %v568
        %v803 = vpop.f32.mrb[0].mxu0
        %v804 = vadd.f32 %v607, %v803
        %v805 = vpop.f32.mrb[0].mxu0
        %v806 = vpop.f32.mrb[0].mxu0
        %v807 = vadd.f32 %v607, %v806
        %v808 = vpop.f32.mrb[0].mxu0
        %809 = vmatprep.mubr.bf16.mxu0 0
        %810 = vmatmul.mubr.bf16.gmra.mrb[0].mxu0 %v569
        %v811 = vpop.f32.mrb[0].mxu0
        %v812 = vadd.f32 %v607, %v811
        %v813 = vpop.f32.mrb[0].mxu0
        %v814 = vpop.f32.mrb[0].mxu0
        %v815 = vadd.f32 %v607, %v814
        %v816 = vpop.f32.mrb[0].mxu0
        %817 = vmatprep.mubr.bf16.mxu0 0
        %818 = vmatmul.mubr.bf16.gmra.mrb[0].mxu0 %v570
        %v819 = vpop.f32.mrb[0].mxu0
        %v820 = vadd.f32 %v607, %v819
        %v821 = vpop.f32.mrb[0].mxu0
        %v822 = vpop.f32.mrb[0].mxu0
        %v823 = vadd.f32 %v607, %v822
        %v824 = vpop.f32.mrb[0].mxu0
        %825 = vmatprep.mubr.bf16.mxu0 0
        %826 = vmatmul.mubr.bf16.gmra.mrb[0].mxu0 %v571
        %v827 = vpop.f32.mrb[0].mxu0
        %v828 = vadd.f32 %v607, %v827
        %v829 = vpop.f32.mrb[0].mxu0
        %v830 = vpop.f32.mrb[0].mxu0
        %v831 = vadd.f32 %v607, %v830
        %v832 = vpop.f32.mrb[0].mxu0
        %833 = vmatprep.mubr.bf16.mxu0 0
        %834 = vmatmul.mubr.bf16.gmra.mrb[0].mxu0 %v572
        %v835 = vpop.f32.mrb[0].mxu0
        %v836 = vadd.f32 %v607, %v835
        %v837 = vpop.f32.mrb[0].mxu0
        %v838 = vpop.f32.mrb[0].mxu0
        %v839 = vadd.f32 %v607, %v838
        %v840 = vpop.f32.mrb[0].mxu0
        %841 = vmatprep.mubr.bf16.mxu0 0
        %842 = vmatmul.mubr.bf16.gmra.mrb[0].mxu0 %v573
        %v843 = vpop.f32.mrb[0].mxu0
        %v844 = vadd.f32 %v607, %v843
        %v845 = vpop.f32.mrb[0].mxu0
        %v846 = vpop.f32.mrb[0].mxu0
        %v847 = vadd.f32 %v607, %v846
        %v848 = vpop.f32.mrb[0].mxu0
        %849 = vmatprep.mubr.bf16.mxu0 0
        %850 = vmatmul.mubr.bf16.gmra.mrb[0].mxu0 %v574
        %v851 = vpop.f32.mrb[0].mxu0
        %v852 = vadd.f32 %v607, %v851
        %v853 = vpop.f32.mrb[0].mxu0
        %v854 = vpop.f32.mrb[0].mxu0
        %v855 = vadd.f32 %v607, %v854
        %v856 = vpop.f32.mrb[0].mxu0
        %857 = vmatprep.mubr.bf16.mxu0 0
        %858 = vmatmul.mubr.bf16.gmra.mrb[0].mxu0 %v575
        %v859 = vpop.f32.mrb[0].mxu0
        %v860 = vadd.f32 %v607, %v859
        %v861 = vpop.f32.mrb[0].mxu0
        %v862 = vpop.f32.mrb[0].mxu0
        %v863 = vadd.f32 %v607, %v862
        %v864 = vpop.f32.mrb[0].mxu0
        %865 = vmatprep.mubr.bf16.mxu0 0
        %866 = vmatmul.mubr.bf16.gmra.mrb[0].mxu0 %v576
        %v867 = vpop.f32.mrb[0].mxu0
        %v868 = vadd.f32 %v607, %v867
        %v869 = vpop.f32.mrb[0].mxu0
        %v870 = vpop.f32.mrb[0].mxu0
        %v871 = vadd.f32 %v607, %v870
        %v872 = vpop.f32.mrb[0].mxu0
        %873 = vmatprep.mubr.bf16.mxu0 0
        %874 = vmatmul.mubr.bf16.gmra.mrb[0].mxu0 %v577
        %v875 = vpop.f32.mrb[0].mxu0
        %v876 = vadd.f32 %v607, %v875
        %v877 = vpop.f32.mrb[0].mxu0
        %v878 = vpop.f32.mrb[0].mxu0
        %v879 = vadd.f32 %v607, %v878
        %v880 = vpop.f32.mrb[0].mxu0
        %881 = vmatprep.mubr.bf16.mxu0 0
        %882 = vmatmul.mubr.bf16.gmra.mrb[0].mxu0 %v578
        %v883 = vpop.f32.mrb[0].mxu0
        %v884 = vadd.f32 %v607, %v883
        %v885 = vpop.f32.mrb[0].mxu0
        %v886 = vpop.f32.mrb[0].mxu0
        %v887 = vadd.f32 %v607, %v886
        %v888 = vpop.f32.mrb[0].mxu0
        %889 = vmatprep.mubr.bf16.mxu0 0
        %890 = vmatmul.mubr.bf16.gmra.mrb[0].mxu0 %v579
        %v891 = vpop.f32.mrb[0].mxu0
        %v892 = vadd.f32 %v607, %v891
        %v893 = vpop.f32.mrb[0].mxu0
        %v894 = vpop.f32.mrb[0].mxu0
        %v895 = vadd.f32 %v607, %v894
        %v896 = vpop.f32.mrb[0].mxu0
        %897 = vmatprep.mubr.bf16.mxu0 0
        %898 = vmatmul.mubr.bf16.gmra.mrb[0].mxu0 %v580
        %v899 = vpop.f32.mrb[0].mxu0
        %v900 = vadd.f32 %v607, %v899
        %v901 = vpop.f32.mrb[0].mxu0
        %v902 = vpop.f32.mrb[0].mxu0
        %v903 = vadd.f32 %v607, %v902
        %v904 = vpop.f32.mrb[0].mxu0
        %905 = vmatprep.mubr.bf16.mxu0 0
        %906 = vmatmul.mubr.bf16.gmra.mrb[0].mxu0 %v581
        %v907 = vpop.f32.mrb[0].mxu0
        %v908 = vadd.f32 %v607, %v907
        %v909 = vpop.f32.mrb[0].mxu0
        %v910 = vpop.f32.mrb[0].mxu0
        %v911 = vadd.f32 %v607, %v910
        %v912 = vpop.f32.mrb[0].mxu0
        %913 = vmatprep.mubr.bf16.mxu0 0
        %914 = vmatmul.mubr.bf16.gmra.mrb[0].mxu0 %v582
        %v915 = vpop.f32.mrb[0].mxu0
        %v916 = vadd.f32 %v607, %v915
        %v917 = vpop.f32.mrb[0].mxu0
        %v918 = vpop.f32.mrb[0].mxu0
        %v919 = vadd.f32 %v607, %v918
        %v920 = vpop.f32.mrb[0].mxu0
        %921 = vmatprep.mubr.bf16.mxu0 0
        %922 = vmatmul.mubr.bf16.gmra.mrb[0].mxu0 %v583
        %v923 = vpop.f32.mrb[0].mxu0
        %v924 = vadd.f32 %v607, %v923
        %v925 = vpop.f32.mrb[0].mxu0
        %v926 = vpop.f32.mrb[0].mxu0
        %v927 = vadd.f32 %v607, %v926
        %v928 = vpop.f32.mrb[0].mxu0
        %929 = vmatprep.mubr.bf16.mxu0 0
        %930 = vmatmul.mubr.bf16.gmra.mrb[0].mxu0 %v584
        %v931 = vpop.f32.mrb[0].mxu0
        %v932 = vadd.f32 %v607, %v931
        %v933 = vpop.f32.mrb[0].mxu0
        %v934 = vpop.f32.mrb[0].mxu0
        %v935 = vadd.f32 %v607, %v934
        %v936 = vpop.f32.mrb[0].mxu0
        %937 = vmatprep.mubr.bf16.mxu0 0
        %938 = vmatmul.mubr.bf16.gmra.mrb[0].mxu0 %v585
        %v939 = vpop.f32.mrb[0].mxu0
        %v940 = vadd.f32 %v607, %v939
        %v941 = vpop.f32.mrb[0].mxu0
        %v942 = vpop.f32.mrb[0].mxu0
        %v943 = vadd.f32 %v607, %v942
        %v944 = vpop.f32.mrb[0].mxu0
        %945 = vdwg.mxu0
        %v946 = vmax.f32 %v692, 0.0
        %v947 = vmax.f32 %v695, 0.0
        %v948 = vmax.f32 %v700, 0.0
        %v949 = vmax.f32 %v703, 0.0
        %v950 = vmax.f32 %v708, 0.0
        %v951 = vmax.f32 %v711, 0.0
        %v952 = vmax.f32 %v716, 0.0
        %v953 = vmax.f32 %v719, 0.0
        %v954 = vmax.f32 %v724, 0.0
        %v955 = vmax.f32 %v727, 0.0
        %v956 = vmax.f32 %v732, 0.0
        %v957 = vmax.f32 %v735, 0.0
        %v958 = vmax.f32 %v740, 0.0
        %v959 = vmax.f32 %v743, 0.0
        %v960 = vmax.f32 %v748, 0.0
        %v961 = vmax.f32 %v751, 0.0
        %v962 = vmax.f32 %v756, 0.0
        %v963 = vmax.f32 %v759, 0.0
        %v964 = vmax.f32 %v764, 0.0
        %v965 = vmax.f32 %v767, 0.0
        %v966 = vmax.f32 %v772, 0.0
        %v967 = vmax.f32 %v775, 0.0
        %v968 = vmax.f32 %v780, 0.0
        %v969 = vmax.f32 %v783, 0.0
        %v970 = vmax.f32 %v788, 0.0
        %v971 = vmax.f32 %v791, 0.0
        %v972 = vmax.f32 %v796, 0.0
        %v973 = vmax.f32 %v799, 0.0
        %v974 = vmax.f32 %v804, 0.0
        %v975 = vmax.f32 %v807, 0.0
        %v976 = vmax.f32 %v812, 0.0
        %v977 = vmax.f32 %v815, 0.0
        %v978 = vmax.f32 %v820, 0.0
        %v979 = vmax.f32 %v823, 0.0
        %v980 = vmax.f32 %v828, 0.0
        %v981 = vmax.f32 %v831, 0.0
        %v982 = vmax.f32 %v836, 0.0
        %v983 = vmax.f32 %v839, 0.0
        %v984 = vmax.f32 %v844, 0.0
        %v985 = vmax.f32 %v847, 0.0
        %v986 = vmax.f32 %v852, 0.0
        %v987 = vmax.f32 %v855, 0.0
        %v988 = vmax.f32 %v860, 0.0
        %v989 = vmax.f32 %v863, 0.0
        %v990 = vmax.f32 %v868, 0.0
        %v991 = vmax.f32 %v871, 0.0
        %v992 = vmax.f32 %v876, 0.0
        %v993 = vmax.f32 %v879, 0.0
        %v994 = vmax.f32 %v884, 0.0
        %v995 = vmax.f32 %v887, 0.0
        %v996 = vmax.f32 %v892, 0.0
        %v997 = vmax.f32 %v895, 0.0
        %v998 = vmax.f32 %v900, 0.0
        %v999 = vmax.f32 %v903, 0.0
        %v1000 = vmax.f32 %v908, 0.0
        %v1001 = vmax.f32 %v911, 0.0
        %v1002 = vmax.f32 %v916, 0.0
        %v1003 = vmax.f32 %v919, 0.0
        %v1004 = vmax.f32 %v924, 0.0
        %v1005 = vmax.f32 %v927, 0.0
        %v1006 = vmax.f32 %v932, 0.0
        %v1007 = vmax.f32 %v935, 0.0
        %v1008 = vmax.f32 %v940, 0.0
        %v1009 = vmax.f32 %v943, 0.0
        %v1010 = vpack.c.bf16 %v947, %v946
        %v1011 = vpack.c.bf16 %v949, %v948
        %v1012 = vpack.c.bf16 %v951, %v950
        %v1013 = vpack.c.bf16 %v953, %v952
        %v1014 = vpack.c.bf16 %v955, %v954
        %v1015 = vpack.c.bf16 %v957, %v956
        %v1016 = vpack.c.bf16 %v959, %v958
        %v1017 = vpack.c.bf16 %v961, %v960
        %v1018 = vpack.c.bf16 %v963, %v962
        %v1019 = vpack.c.bf16 %v965, %v964
        %v1020 = vpack.c.bf16 %v967, %v966
        %v1021 = vpack.c.bf16 %v969, %v968
        %v1022 = vpack.c.bf16 %v971, %v970
        %v1023 = vpack.c.bf16 %v973, %v972
        %v1024 = vpack.c.bf16 %v975, %v974
        %v1025 = vpack.c.bf16 %v977, %v976
        %v1026 = vpack.c.bf16 %v979, %v978
        %v1027 = vpack.c.bf16 %v981, %v980
        %v1028 = vpack.c.bf16 %v983, %v982
        %v1029 = vpack.c.bf16 %v985, %v984
        %v1030 = vpack.c.bf16 %v987, %v986
        %v1031 = vpack.c.bf16 %v989, %v988
        %v1032 = vpack.c.bf16 %v991, %v990
        %v1033 = vpack.c.bf16 %v993, %v992
        %v1034 = vpack.c.bf16 %v995, %v994
        %v1035 = vpack.c.bf16 %v997, %v996
        %v1036 = vpack.c.bf16 %v999, %v998
        %v1037 = vpack.c.bf16 %v1001, %v1000
        %v1038 = vpack.c.bf16 %v1003, %v1002
        %v1039 = vpack.c.bf16 %v1005, %v1004
        %v1040 = vpack.c.bf16 %v1007, %v1006
        %v1041 = vpack.c.bf16 %v1009, %v1008
        %v1042 = vld [vmem:[#allocation7] sm:$0xf]
        %v1043 = vld [vmem:[#allocation7 + $0x4] sm:$0xf]
        %v1044 = vld [vmem:[#allocation7 + $0x8] sm:$0xf]
        %v1045 = vld [vmem:[#allocation7 + $0xc] sm:$0xf]
        %v1046 = vld [vmem:[#allocation7 + $0x10] sm:$0xf]
        %v1047 = vld [vmem:[#allocation7 + $0x14] sm:$0xf]
        %v1048 = vld [vmem:[#allocation7 + $0x18] sm:$0xf]
        %v1049 = vld [vmem:[#allocation7 + $0x1c] sm:$0xf]
        %v1050 = vld [vmem:[#allocation7 + $0x20] sm:$0xf]
        %v1051 = vld [vmem:[#allocation7 + $0x24] sm:$0xf]
        %v1052 = vld [vmem:[#allocation7 + $0x28] sm:$0xf]
        %v1053 = vld [vmem:[#allocation7 + $0x2c] sm:$0xf]
        %v1054 = vld [vmem:[#allocation7 + $0x30] sm:$0xf]
        %v1055 = vld [vmem:[#allocation7 + $0x34] sm:$0xf]
        %v1056 = vld [vmem:[#allocation7 + $0x38] sm:$0xf]
        %v1057 = vld [vmem:[#allocation7 + $0x3c] sm:$0xf]
        %v1058 = vld [vmem:[%s4] sm:$0x1]
        %v1060 = vlaneseq
        %v1061 = vshrl.u32 %v1060, 7
        %v1062 = vsub.s32 0, %v1061
        %v1063 = vrot.slane %v1058, %v1062
        %v1081 = vunpack.c.l.b16 %v1042
        %v1082 = vunpack.c.l.b16 %v1043
        %v1083 = vunpack.c.l.b16 %v1044
        %v1084 = vunpack.c.l.b16 %v1045
        %v1085 = vunpack.c.l.b16 %v1046
        %v1086 = vunpack.c.l.b16 %v1047
        %v1087 = vunpack.c.l.b16 %v1048
        %v1088 = vunpack.c.l.b16 %v1049
        %v1089 = vunpack.c.l.b16 %v1050
        %v1090 = vunpack.c.l.b16 %v1051
        %v1091 = vunpack.c.l.b16 %v1052
        %v1092 = vunpack.c.l.b16 %v1053
        %v1093 = vunpack.c.l.b16 %v1054
        %v1094 = vunpack.c.l.b16 %v1055
        %v1095 = vunpack.c.l.b16 %v1056
        %v1096 = vunpack.c.l.b16 %v1057
        %v1097 = vpack.c.b16 %v1082, %v1081
        %v1098 = vpack.c.b16 %v1084, %v1083
        %v1099 = vpack.c.b16 %v1086, %v1085
        %v1100 = vpack.c.b16 %v1088, %v1087
        %v1101 = vpack.c.b16 %v1090, %v1089
        %v1102 = vpack.c.b16 %v1092, %v1091
        %v1103 = vpack.c.b16 %v1094, %v1093
        %v1104 = vpack.c.b16 %v1096, %v1095
        %1113 = vmatprep.subr.bf16.mxu0 0
        %1114 = vmatpush1.bf16.msra.mxu0 %v1097
        %1115 = vmatprep.subr.bf16.mxu0 0
        %1116 = vmatpush1.bf16.msra.mxu0 %v1098
        %1117 = vmatprep.subr.bf16.mxu0 0
        %1118 = vmatpush1.bf16.msra.mxu0 %v1099
        %1119 = vmatprep.subr.bf16.mxu0 0
        %1120 = vmatpush1.bf16.msra.mxu0 %v1100
        %1121 = vmatprep.subr.bf16.mxu0 0
        %1122 = vmatpush1.bf16.msra.mxu0 %v1101
        %1123 = vmatprep.subr.bf16.mxu0 0
        %1124 = vmatpush1.bf16.msra.mxu0 %v1102
        %1125 = vmatprep.subr.bf16.mxu0 0
        %1126 = vmatpush1.bf16.msra.mxu0 %v1103
        %1127 = vmatprep.subr.bf16.mxu0 0
        %1128 = vmatpush1.bf16.msra.mxu0 %v1104
        %1129 = vmatprep.subr.bf16.mxu0 0
        %1130 = vmatpush1.bf16.msra.mxu0 0
        %1131 = vmatprep.subr.bf16.mxu0 0
        %1132 = vmatpush1.bf16.msra.mxu0 0
        %1133 = vmatprep.subr.bf16.mxu0 0
        %1134 = vmatpush1.bf16.msra.mxu0 0
        %1135 = vmatprep.subr.bf16.mxu0 0
        %1136 = vmatpush1.bf16.msra.mxu0 0
        %1137 = vmatprep.subr.bf16.mxu0 0
        %1138 = vmatpush1.bf16.msra.mxu0 0
        %1139 = vmatprep.subr.bf16.mxu0 0
        %1140 = vmatpush1.bf16.msra.mxu0 0
        %1141 = vmatprep.subr.bf16.mxu0 0
        %1142 = vmatpush1.bf16.msra.mxu0 0
        %1143 = vmatprep.subr.bf16.mxu0 0
        %1144 = vmatpush1.bf16.msra.mxu0 0
        %1145 = vmatprep.mubr.bf16.mxu0 0
        %1146 = vmatmul.mubr.bf16.gmra.mrb[0].mxu0 %v1010
        %v1147 = vpop.f32.mrb[0].mxu0
        %v1148 = vadd.f32 %v1063, %v1147
        %v1149 = vpop.f32.mrb[0].mxu0
        %v1150 = vpop.f32.mrb[0].mxu0
        %v1151 = vadd.f32 %v1063, %v1150
        %v1152 = vpop.f32.mrb[0].mxu0
        %1153 = vmatprep.mubr.bf16.mxu0 0
        %1154 = vmatmul.mubr.bf16.gmra.mrb[0].mxu0 %v1011
        %v1155 = vpop.f32.mrb[0].mxu0
        %v1156 = vadd.f32 %v1063, %v1155
        %v1157 = vpop.f32.mrb[0].mxu0
        %v1158 = vpop.f32.mrb[0].mxu0
        %v1159 = vadd.f32 %v1063, %v1158
        %v1160 = vpop.f32.mrb[0].mxu0
        %1161 = vmatprep.mubr.bf16.mxu0 0
        %1162 = vmatmul.mubr.bf16.gmra.mrb[0].mxu0 %v1012
        %v1163 = vpop.f32.mrb[0].mxu0
        %v1164 = vadd.f32 %v1063, %v1163
        %v1165 = vpop.f32.mrb[0].mxu0
        %v1166 = vpop.f32.mrb[0].mxu0
        %v1167 = vadd.f32 %v1063, %v1166
        %v1168 = vpop.f32.mrb[0].mxu0
        %1169 = vmatprep.mubr.bf16.mxu0 0
        %1170 = vmatmul.mubr.bf16.gmra.mrb[0].mxu0 %v1013
        %v1171 = vpop.f32.mrb[0].mxu0
        %v1172 = vadd.f32 %v1063, %v1171
        %v1173 = vpop.f32.mrb[0].mxu0
        %v1174 = vpop.f32.mrb[0].mxu0
        %v1175 = vadd.f32 %v1063, %v1174
        %v1176 = vpop.f32.mrb[0].mxu0
        %1177 = vmatprep.mubr.bf16.mxu0 0
        %1178 = vmatmul.mubr.bf16.gmra.mrb[0].mxu0 %v1014
        %v1179 = vpop.f32.mrb[0].mxu0
        %v1180 = vadd.f32 %v1063, %v1179
        %v1181 = vpop.f32.mrb[0].mxu0
        %v1182 = vpop.f32.mrb[0].mxu0
        %v1183 = vadd.f32 %v1063, %v1182
        %v1184 = vpop.f32.mrb[0].mxu0
        %1185 = vmatprep.mubr.bf16.mxu0 0
        %1186 = vmatmul.mubr.bf16.gmra.mrb[0].mxu0 %v1015
        %v1187 = vpop.f32.mrb[0].mxu0
        %v1188 = vadd.f32 %v1063, %v1187
        %v1189 = vpop.f32.mrb[0].mxu0
        %v1190 = vpop.f32.mrb[0].mxu0
        %v1191 = vadd.f32 %v1063, %v1190
        %v1192 = vpop.f32.mrb[0].mxu0
        %1193 = vmatprep.mubr.bf16.mxu0 0
        %1194 = vmatmul.mubr.bf16.gmra.mrb[0].mxu0 %v1016
        %v1195 = vpop.f32.mrb[0].mxu0
        %v1196 = vadd.f32 %v1063, %v1195
        %v1197 = vpop.f32.mrb[0].mxu0
        %v1198 = vpop.f32.mrb[0].mxu0
        %v1199 = vadd.f32 %v1063, %v1198
        %v1200 = vpop.f32.mrb[0].mxu0
        %1201 = vmatprep.mubr.bf16.mxu0 0
        %1202 = vmatmul.mubr.bf16.gmra.mrb[0].mxu0 %v1017
        %v1203 = vpop.f32.mrb[0].mxu0
        %v1204 = vadd.f32 %v1063, %v1203
        %v1205 = vpop.f32.mrb[0].mxu0
        %v1206 = vpop.f32.mrb[0].mxu0
        %v1207 = vadd.f32 %v1063, %v1206
        %v1208 = vpop.f32.mrb[0].mxu0
        %1209 = vmatprep.mubr.bf16.mxu0 0
        %1210 = vmatmul.mubr.bf16.gmra.mrb[0].mxu0 %v1018
        %v1211 = vpop.f32.mrb[0].mxu0
        %v1212 = vadd.f32 %v1063, %v1211
        %v1213 = vpop.f32.mrb[0].mxu0
        %v1214 = vpop.f32.mrb[0].mxu0
        %v1215 = vadd.f32 %v1063, %v1214
        %v1216 = vpop.f32.mrb[0].mxu0
        %1217 = vmatprep.mubr.bf16.mxu0 0
        %1218 = vmatmul.mubr.bf16.gmra.mrb[0].mxu0 %v1019
        %v1219 = vpop.f32.mrb[0].mxu0
        %v1220 = vadd.f32 %v1063, %v1219
        %v1221 = vpop.f32.mrb[0].mxu0
        %v1222 = vpop.f32.mrb[0].mxu0
        %v1223 = vadd.f32 %v1063, %v1222
        %v1224 = vpop.f32.mrb[0].mxu0
        %1225 = vmatprep.mubr.bf16.mxu0 0
        %1226 = vmatmul.mubr.bf16.gmra.mrb[0].mxu0 %v1020
        %v1227 = vpop.f32.mrb[0].mxu0
        %v1228 = vadd.f32 %v1063, %v1227
        %v1229 = vpop.f32.mrb[0].mxu0
        %v1230 = vpop.f32.mrb[0].mxu0
        %v1231 = vadd.f32 %v1063, %v1230
        %v1232 = vpop.f32.mrb[0].mxu0
        %1233 = vmatprep.mubr.bf16.mxu0 0
        %1234 = vmatmul.mubr.bf16.gmra.mrb[0].mxu0 %v1021
        %v1235 = vpop.f32.mrb[0].mxu0
        %v1236 = vadd.f32 %v1063, %v1235
        %v1237 = vpop.f32.mrb[0].mxu0
        %v1238 = vpop.f32.mrb[0].mxu0
        %v1239 = vadd.f32 %v1063, %v1238
        %v1240 = vpop.f32.mrb[0].mxu0
        %1241 = vmatprep.mubr.bf16.mxu0 0
        %1242 = vmatmul.mubr.bf16.gmra.mrb[0].mxu0 %v1022
        %v1243 = vpop.f32.mrb[0].mxu0
        %v1244 = vadd.f32 %v1063, %v1243
        %v1245 = vpop.f32.mrb[0].mxu0
        %v1246 = vpop.f32.mrb[0].mxu0
        %v1247 = vadd.f32 %v1063, %v1246
        %v1248 = vpop.f32.mrb[0].mxu0
        %1249 = vmatprep.mubr.bf16.mxu0 0
        %1250 = vmatmul.mubr.bf16.gmra.mrb[0].mxu0 %v1023
        %v1251 = vpop.f32.mrb[0].mxu0
        %v1252 = vadd.f32 %v1063, %v1251
        %v1253 = vpop.f32.mrb[0].mxu0
        %v1254 = vpop.f32.mrb[0].mxu0
        %v1255 = vadd.f32 %v1063, %v1254
        %v1256 = vpop.f32.mrb[0].mxu0
        %1257 = vmatprep.mubr.bf16.mxu0 0
        %1258 = vmatmul.mubr.bf16.gmra.mrb[0].mxu0 %v1024
        %v1259 = vpop.f32.mrb[0].mxu0
        %v1260 = vadd.f32 %v1063, %v1259
        %v1261 = vpop.f32.mrb[0].mxu0
        %v1262 = vpop.f32.mrb[0].mxu0
        %v1263 = vadd.f32 %v1063, %v1262
        %v1264 = vpop.f32.mrb[0].mxu0
        %1265 = vmatprep.mubr.bf16.mxu0 0
        %1266 = vmatmul.mubr.bf16.gmra.mrb[0].mxu0 %v1025
        %v1267 = vpop.f32.mrb[0].mxu0
        %v1268 = vadd.f32 %v1063, %v1267
        %v1269 = vpop.f32.mrb[0].mxu0
        %v1270 = vpop.f32.mrb[0].mxu0
        %v1271 = vadd.f32 %v1063, %v1270
        %v1272 = vpop.f32.mrb[0].mxu0
        %1273 = vmatprep.mubr.bf16.mxu0 0
        %1274 = vmatmul.mubr.bf16.gmra.mrb[0].mxu0 %v1026
        %v1275 = vpop.f32.mrb[0].mxu0
        %v1276 = vadd.f32 %v1063, %v1275
        %v1277 = vpop.f32.mrb[0].mxu0
        %v1278 = vpop.f32.mrb[0].mxu0
        %v1279 = vadd.f32 %v1063, %v1278
        %v1280 = vpop.f32.mrb[0].mxu0
        %1281 = vmatprep.mubr.bf16.mxu0 0
        %1282 = vmatmul.mubr.bf16.gmra.mrb[0].mxu0 %v1027
        %v1283 = vpop.f32.mrb[0].mxu0
        %v1284 = vadd.f32 %v1063, %v1283
        %v1285 = vpop.f32.mrb[0].mxu0
        %v1286 = vpop.f32.mrb[0].mxu0
        %v1287 = vadd.f32 %v1063, %v1286
        %v1288 = vpop.f32.mrb[0].mxu0
        %1289 = vmatprep.mubr.bf16.mxu0 0
        %1290 = vmatmul.mubr.bf16.gmra.mrb[0].mxu0 %v1028
        %v1291 = vpop.f32.mrb[0].mxu0
        %v1292 = vadd.f32 %v1063, %v1291
        %v1293 = vpop.f32.mrb[0].mxu0
        %v1294 = vpop.f32.mrb[0].mxu0
        %v1295 = vadd.f32 %v1063, %v1294
        %v1296 = vpop.f32.mrb[0].mxu0
        %1297 = vmatprep.mubr.bf16.mxu0 0
        %1298 = vmatmul.mubr.bf16.gmra.mrb[0].mxu0 %v1029
        %v1299 = vpop.f32.mrb[0].mxu0
        %v1300 = vadd.f32 %v1063, %v1299
        %v1301 = vpop.f32.mrb[0].mxu0
        %v1302 = vpop.f32.mrb[0].mxu0
        %v1303 = vadd.f32 %v1063, %v1302
        %v1304 = vpop.f32.mrb[0].mxu0
        %1305 = vmatprep.mubr.bf16.mxu0 0
        %1306 = vmatmul.mubr.bf16.gmra.mrb[0].mxu0 %v1030
        %v1307 = vpop.f32.mrb[0].mxu0
        %v1308 = vadd.f32 %v1063, %v1307
        %v1309 = vpop.f32.mrb[0].mxu0
        %v1310 = vpop.f32.mrb[0].mxu0
        %v1311 = vadd.f32 %v1063, %v1310
        %v1312 = vpop.f32.mrb[0].mxu0
        %1313 = vmatprep.mubr.bf16.mxu0 0
        %1314 = vmatmul.mubr.bf16.gmra.mrb[0].mxu0 %v1031
        %v1315 = vpop.f32.mrb[0].mxu0
        %v1316 = vadd.f32 %v1063, %v1315
        %v1317 = vpop.f32.mrb[0].mxu0
        %v1318 = vpop.f32.mrb[0].mxu0
        %v1319 = vadd.f32 %v1063, %v1318
        %v1320 = vpop.f32.mrb[0].mxu0
        %1321 = vmatprep.mubr.bf16.mxu0 0
        %1322 = vmatmul.mubr.bf16.gmra.mrb[0].mxu0 %v1032
        %v1323 = vpop.f32.mrb[0].mxu0
        %v1324 = vadd.f32 %v1063, %v1323
        %v1325 = vpop.f32.mrb[0].mxu0
        %v1326 = vpop.f32.mrb[0].mxu0
        %v1327 = vadd.f32 %v1063, %v1326
        %v1328 = vpop.f32.mrb[0].mxu0
        %1329 = vmatprep.mubr.bf16.mxu0 0
        %1330 = vmatmul.mubr.bf16.gmra.mrb[0].mxu0 %v1033
        %v1331 = vpop.f32.mrb[0].mxu0
        %v1332 = vadd.f32 %v1063, %v1331
        %v1333 = vpop.f32.mrb[0].mxu0
        %v1334 = vpop.f32.mrb[0].mxu0
        %v1335 = vadd.f32 %v1063, %v1334
        %v1336 = vpop.f32.mrb[0].mxu0
        %1337 = vmatprep.mubr.bf16.mxu0 0
        %1338 = vmatmul.mubr.bf16.gmra.mrb[0].mxu0 %v1034
        %v1339 = vpop.f32.mrb[0].mxu0
        %v1340 = vadd.f32 %v1063, %v1339
        %v1341 = vpop.f32.mrb[0].mxu0
        %v1342 = vpop.f32.mrb[0].mxu0
        %v1343 = vadd.f32 %v1063, %v1342
        %v1344 = vpop.f32.mrb[0].mxu0
        %1345 = vmatprep.mubr.bf16.mxu0 0
        %1346 = vmatmul.mubr.bf16.gmra.mrb[0].mxu0 %v1035
        %v1347 = vpop.f32.mrb[0].mxu0
        %v1348 = vadd.f32 %v1063, %v1347
        %v1349 = vpop.f32.mrb[0].mxu0
        %v1350 = vpop.f32.mrb[0].mxu0
        %v1351 = vadd.f32 %v1063, %v1350
        %v1352 = vpop.f32.mrb[0].mxu0
        %1353 = vmatprep.mubr.bf16.mxu0 0
        %1354 = vmatmul.mubr.bf16.gmra.mrb[0].mxu0 %v1036
        %v1355 = vpop.f32.mrb[0].mxu0
        %v1356 = vadd.f32 %v1063, %v1355
        %v1357 = vpop.f32.mrb[0].mxu0
        %v1358 = vpop.f32.mrb[0].mxu0
        %v1359 = vadd.f32 %v1063, %v1358
        %v1360 = vpop.f32.mrb[0].mxu0
        %1361 = vmatprep.mubr.bf16.mxu0 0
        %1362 = vmatmul.mubr.bf16.gmra.mrb[0].mxu0 %v1037
        %v1363 = vpop.f32.mrb[0].mxu0
        %v1364 = vadd.f32 %v1063, %v1363
        %v1365 = vpop.f32.mrb[0].mxu0
        %v1366 = vpop.f32.mrb[0].mxu0
        %v1367 = vadd.f32 %v1063, %v1366
        %v1368 = vpop.f32.mrb[0].mxu0
        %1369 = vmatprep.mubr.bf16.mxu0 0
        %1370 = vmatmul.mubr.bf16.gmra.mrb[0].mxu0 %v1038
        %v1371 = vpop.f32.mrb[0].mxu0
        %v1372 = vadd.f32 %v1063, %v1371
        %v1373 = vpop.f32.mrb[0].mxu0
        %v1374 = vpop.f32.mrb[0].mxu0
        %v1375 = vadd.f32 %v1063, %v1374
        %v1376 = vpop.f32.mrb[0].mxu0
        %1377 = vmatprep.mubr.bf16.mxu0 0
        %1378 = vmatmul.mubr.bf16.gmra.mrb[0].mxu0 %v1039
        %v1379 = vpop.f32.mrb[0].mxu0
        %v1380 = vadd.f32 %v1063, %v1379
        %v1381 = vpop.f32.mrb[0].mxu0
        %v1382 = vpop.f32.mrb[0].mxu0
        %v1383 = vadd.f32 %v1063, %v1382
        %v1384 = vpop.f32.mrb[0].mxu0
        %1385 = vmatprep.mubr.bf16.mxu0 0
        %1386 = vmatmul.mubr.bf16.gmra.mrb[0].mxu0 %v1040
        %v1387 = vpop.f32.mrb[0].mxu0
        %v1388 = vadd.f32 %v1063, %v1387
        %v1389 = vpop.f32.mrb[0].mxu0
        %v1390 = vpop.f32.mrb[0].mxu0
        %v1391 = vadd.f32 %v1063, %v1390
        %v1392 = vpop.f32.mrb[0].mxu0
        %1393 = vmatprep.mubr.bf16.mxu0 0
        %1394 = vmatmul.mubr.bf16.gmra.mrb[0].mxu0 %v1041
        %v1395 = vpop.f32.mrb[0].mxu0
        %v1396 = vadd.f32 %v1063, %v1395
        %v1397 = vpop.f32.mrb[0].mxu0
        %v1398 = vpop.f32.mrb[0].mxu0
        %v1399 = vadd.f32 %v1063, %v1398
        %v1400 = vpop.f32.mrb[0].mxu0
        %1401 = vdwg.mxu0
        %vm1402 = vcmask 261120
        %1403 = vst.msk [vmem:[%s486] sm:$0xff] %vm1402, %v1148
        %1404 = vst.msk [vmem:[%s486 + $0x8] sm:$0xff] %vm1402, %v1151
        %1405 = vst.msk [vmem:[%s486 + $0x10] sm:$0xff] %vm1402, %v1156
        %1406 = vst.msk [vmem:[%s486 + $0x18] sm:$0xff] %vm1402, %v1159
        %1407 = vst.msk [vmem:[%s486 + $0x20] sm:$0xff] %vm1402, %v1164
        %1408 = vst.msk [vmem:[%s486 + $0x28] sm:$0xff] %vm1402, %v1167
        %1409 = vst.msk [vmem:[%s486 + $0x30] sm:$0xff] %vm1402, %v1172
        %1410 = vst.msk [vmem:[%s486 + $0x38] sm:$0xff] %vm1402, %v1175
        %1411 = vst.msk [vmem:[%s486 + $0x40] sm:$0xff] %vm1402, %v1180
        %1412 = vst.msk [vmem:[%s486 + $0x48] sm:$0xff] %vm1402, %v1183
        %1413 = vst.msk [vmem:[%s486 + $0x50] sm:$0xff] %vm1402, %v1188
        %1414 = vst.msk [vmem:[%s486 + $0x58] sm:$0xff] %vm1402, %v1191
        %1415 = vst.msk [vmem:[%s486 + $0x60] sm:$0xff] %vm1402, %v1196
        %1416 = vst.msk [vmem:[%s486 + $0x68] sm:$0xff] %vm1402, %v1199
        %1417 = vst.msk [vmem:[%s486 + $0x70] sm:$0xff] %vm1402, %v1204
        %1418 = vst.msk [vmem:[%s486 + $0x78] sm:$0xff] %vm1402, %v1207
        %1419 = vst.msk [vmem:[%s486 + $0x80] sm:$0xff] %vm1402, %v1212
        %1420 = vst.msk [vmem:[%s486 + $0x88] sm:$0xff] %vm1402, %v1215
        %1421 = vst.msk [vmem:[%s486 + $0x90] sm:$0xff] %vm1402, %v1220
        %1422 = vst.msk [vmem:[%s486 + $0x98] sm:$0xff] %vm1402, %v1223
        %1423 = vst.msk [vmem:[%s486 + $0xa0] sm:$0xff] %vm1402, %v1228
        %1424 = vst.msk [vmem:[%s486 + $0xa8] sm:$0xff] %vm1402, %v1231
        %1425 = vst.msk [vmem:[%s486 + $0xb0] sm:$0xff] %vm1402, %v1236
        %1426 = vst.msk [vmem:[%s486 + $0xb8] sm:$0xff] %vm1402, %v1239
        %1427 = vst.msk [vmem:[%s486 + $0xc0] sm:$0xff] %vm1402, %v1244
        %1428 = vst.msk [vmem:[%s486 + $0xc8] sm:$0xff] %vm1402, %v1247
        %1429 = vst.msk [vmem:[%s486 + $0xd0] sm:$0xff] %vm1402, %v1252
        %1430 = vst.msk [vmem:[%s486 + $0xd8] sm:$0xff] %vm1402, %v1255
        %1431 = vst.msk [vmem:[%s486 + $0xe0] sm:$0xff] %vm1402, %v1260
        %1432 = vst.msk [vmem:[%s486 + $0xe8] sm:$0xff] %vm1402, %v1263
        %1433 = vst.msk [vmem:[%s486 + $0xf0] sm:$0xff] %vm1402, %v1268
        %1434 = vst.msk [vmem:[%s486 + $0xf8] sm:$0xff] %vm1402, %v1271
        %1435 = vst.msk [vmem:[%s486 + $0x100] sm:$0xff] %vm1402, %v1276
        %1436 = vst.msk [vmem:[%s486 + $0x108] sm:$0xff] %vm1402, %v1279
        %1437 = vst.msk [vmem:[%s486 + $0x110] sm:$0xff] %vm1402, %v1284
        %1438 = vst.msk [vmem:[%s486 + $0x118] sm:$0xff] %vm1402, %v1287
        %1439 = vst.msk [vmem:[%s486 + $0x120] sm:$0xff] %vm1402, %v1292
        %1440 = vst.msk [vmem:[%s486 + $0x128] sm:$0xff] %vm1402, %v1295
        %1441 = vst.msk [vmem:[%s486 + $0x130] sm:$0xff] %vm1402, %v1300
        %1442 = vst.msk [vmem:[%s486 + $0x138] sm:$0xff] %vm1402, %v1303
        %1443 = vst.msk [vmem:[%s486 + $0x140] sm:$0xff] %vm1402, %v1308
        %1444 = vst.msk [vmem:[%s486 + $0x148] sm:$0xff] %vm1402, %v1311
        %1445 = vst.msk [vmem:[%s486 + $0x150] sm:$0xff] %vm1402, %v1316
        %1446 = vst.msk [vmem:[%s486 + $0x158] sm:$0xff] %vm1402, %v1319
        %1447 = vst.msk [vmem:[%s486 + $0x160] sm:$0xff] %vm1402, %v1324
        %1448 = vst.msk [vmem:[%s486 + $0x168] sm:$0xff] %vm1402, %v1327
        %1449 = vst.msk [vmem:[%s486 + $0x170] sm:$0xff] %vm1402, %v1332
        %1450 = vst.msk [vmem:[%s486 + $0x178] sm:$0xff] %vm1402, %v1335
        %1451 = vst.msk [vmem:[%s486 + $0x180] sm:$0xff] %vm1402, %v1340
        %1452 = vst.msk [vmem:[%s486 + $0x188] sm:$0xff] %vm1402, %v1343
        %1453 = vst.msk [vmem:[%s486 + $0x190] sm:$0xff] %vm1402, %v1348
        %1454 = vst.msk [vmem:[%s486 + $0x198] sm:$0xff] %vm1402, %v1351
        %1455 = vst.msk [vmem:[%s486 + $0x1a0] sm:$0xff] %vm1402, %v1356
        %1456 = vst.msk [vmem:[%s486 + $0x1a8] sm:$0xff] %vm1402, %v1359
        %1457 = vst.msk [vmem:[%s486 + $0x1b0] sm:$0xff] %vm1402, %v1364
        %1458 = vst.msk [vmem:[%s486 + $0x1b8] sm:$0xff] %vm1402, %v1367
        %1459 = vst.msk [vmem:[%s486 + $0x1c0] sm:$0xff] %vm1402, %v1372
        %1460 = vst.msk [vmem:[%s486 + $0x1c8] sm:$0xff] %vm1402, %v1375
        %1461 = vst.msk [vmem:[%s486 + $0x1d0] sm:$0xff] %vm1402, %v1380
        %1462 = vst.msk [vmem:[%s486 + $0x1d8] sm:$0xff] %vm1402, %v1383
        %1463 = vst.msk [vmem:[%s486 + $0x1e0] sm:$0xff] %vm1402, %v1388
        %1464 = vst.msk [vmem:[%s486 + $0x1e8] sm:$0xff] %vm1402, %v1391
        %1465 = vst.msk [vmem:[%s486 + $0x1f0] sm:$0xff] %vm1402, %v1396
        %1466 = vst.msk [vmem:[%s486 + $0x1f8] sm:$0xff] %vm1402, %v1399
        %v1467 = vpack.c.bf16 %v1151, %v1148
        %v1468 = vpack.c.bf16 %v1159, %v1156
        %v1469 = vpack.c.bf16 %v1167, %v1164
        %v1470 = vpack.c.bf16 %v1175, %v1172
        %v1471 = vpack.c.bf16 %v1183, %v1180
        %v1472 = vpack.c.bf16 %v1191, %v1188
        %v1473 = vpack.c.bf16 %v1199, %v1196
        %v1474 = vpack.c.bf16 %v1207, %v1204
        %v1475 = vpack.c.bf16 %v1215, %v1212
        %v1476 = vpack.c.bf16 %v1223, %v1220
        %v1477 = vpack.c.bf16 %v1231, %v1228
        %v1478 = vpack.c.bf16 %v1239, %v1236
        %v1479 = vpack.c.bf16 %v1247, %v1244
        %v1480 = vpack.c.bf16 %v1255, %v1252
        %v1481 = vpack.c.bf16 %v1263, %v1260
        %v1482 = vpack.c.bf16 %v1271, %v1268
        %v1483 = vpack.c.bf16 %v1279, %v1276
        %v1484 = vpack.c.bf16 %v1287, %v1284
        %v1485 = vpack.c.bf16 %v1295, %v1292
        %v1486 = vpack.c.bf16 %v1303, %v1300
        %v1487 = vpack.c.bf16 %v1311, %v1308
        %v1488 = vpack.c.bf16 %v1319, %v1316
        %v1489 = vpack.c.bf16 %v1327, %v1324
        %v1490 = vpack.c.bf16 %v1335, %v1332
        %v1491 = vpack.c.bf16 %v1343, %v1340
        %v1492 = vpack.c.bf16 %v1351, %v1348
        %v1493 = vpack.c.bf16 %v1359, %v1356
        %v1494 = vpack.c.bf16 %v1367, %v1364
        %v1495 = vpack.c.bf16 %v1375, %v1372
        %v1496 = vpack.c.bf16 %v1383, %v1380
        %v1497 = vpack.c.bf16 %v1391, %v1388
        %v1498 = vpack.c.bf16 %v1399, %v1396
        %v1499 = vld [vmem:[#allocation8] sm:$0xf]
        %v1500 = vld [vmem:[#allocation8 + $0x4] sm:$0xf]
        %v1501 = vld [vmem:[#allocation8 + $0x8] sm:$0xf]
        %v1502 = vld [vmem:[#allocation8 + $0xc] sm:$0xf]
        %v1503 = vld [vmem:[#allocation8 + $0x10] sm:$0xf]
        %v1504 = vld [vmem:[#allocation8 + $0x14] sm:$0xf]
        %v1505 = vld [vmem:[#allocation8 + $0x18] sm:$0xf]
        %v1506 = vld [vmem:[#allocation8 + $0x1c] sm:$0xf]
        %v1507 = vld [vmem:[#allocation8 + $0x20] sm:$0xf]
        %v1508 = vld [vmem:[#allocation8 + $0x24] sm:$0xf]
        %v1509 = vld [vmem:[#allocation8 + $0x28] sm:$0xf]
        %v1510 = vld [vmem:[#allocation8 + $0x2c] sm:$0xf]
        %v1511 = vld [vmem:[#allocation8 + $0x30] sm:$0xf]
        %v1512 = vld [vmem:[#allocation8 + $0x34] sm:$0xf]
        %v1513 = vld [vmem:[#allocation8 + $0x38] sm:$0xf]
        %v1514 = vld [vmem:[#allocation8 + $0x3c] sm:$0xf]
        %v1515 = vld [vmem:[%s6] sm:$0x1]
        %v1517 = vlaneseq
        %v1518 = vshrl.u32 %v1517, 7
        %v1519 = vsub.s32 0, %v1518
        %v1520 = vrot.slane %v1515, %v1519
        %v1538 = vunpack.c.l.b16 %v1499
        %v1539 = vunpack.c.l.b16 %v1500
        %v1540 = vunpack.c.l.b16 %v1501
        %v1541 = vunpack.c.l.b16 %v1502
        %v1542 = vunpack.c.l.b16 %v1503
        %v1543 = vunpack.c.l.b16 %v1504
        %v1544 = vunpack.c.l.b16 %v1505
        %v1545 = vunpack.c.l.b16 %v1506
        %v1546 = vunpack.c.l.b16 %v1507
        %v1547 = vunpack.c.l.b16 %v1508
        %v1548 = vunpack.c.l.b16 %v1509
        %v1549 = vunpack.c.l.b16 %v1510
        %v1550 = vunpack.c.l.b16 %v1511
        %v1551 = vunpack.c.l.b16 %v1512
        %v1552 = vunpack.c.l.b16 %v1513
        %v1553 = vunpack.c.l.b16 %v1514
        %v1554 = vpack.c.b16 %v1539, %v1538
        %v1555 = vpack.c.b16 %v1541, %v1540
        %v1556 = vpack.c.b16 %v1543, %v1542
        %v1557 = vpack.c.b16 %v1545, %v1544
        %v1558 = vpack.c.b16 %v1547, %v1546
        %v1559 = vpack.c.b16 %v1549, %v1548
        %v1560 = vpack.c.b16 %v1551, %v1550
        %v1561 = vpack.c.b16 %v1553, %v1552
        %1570 = vmatprep.subr.bf16.mxu0 0
        %1571 = vmatpush1.bf16.msra.mxu0 %v1554
        %1572 = vmatprep.subr.bf16.mxu0 0
        %1573 = vmatpush1.bf16.msra.mxu0 %v1555
        %1574 = vmatprep.subr.bf16.mxu0 0
        %1575 = vmatpush1.bf16.msra.mxu0 %v1556
        %1576 = vmatprep.subr.bf16.mxu0 0
        %1577 = vmatpush1.bf16.msra.mxu0 %v1557
        %1578 = vmatprep.subr.bf16.mxu0 0
        %1579 = vmatpush1.bf16.msra.mxu0 %v1558
        %1580 = vmatprep.subr.bf16.mxu0 0
        %1581 = vmatpush1.bf16.msra.mxu0 %v1559
        %1582 = vmatprep.subr.bf16.mxu0 0
        %1583 = vmatpush1.bf16.msra.mxu0 %v1560
        %1584 = vmatprep.subr.bf16.mxu0 0
        %1585 = vmatpush1.bf16.msra.mxu0 %v1561
        %1586 = vmatprep.subr.bf16.mxu0 0
        %1587 = vmatpush1.bf16.msra.mxu0 0
        %1588 = vmatprep.subr.bf16.mxu0 0
        %1589 = vmatpush1.bf16.msra.mxu0 0
        %1590 = vmatprep.subr.bf16.mxu0 0
        %1591 = vmatpush1.bf16.msra.mxu0 0
        %1592 = vmatprep.subr.bf16.mxu0 0
        %1593 = vmatpush1.bf16.msra.mxu0 0
        %1594 = vmatprep.subr.bf16.mxu0 0
        %1595 = vmatpush1.bf16.msra.mxu0 0
        %1596 = vmatprep.subr.bf16.mxu0 0
        %1597 = vmatpush1.bf16.msra.mxu0 0
        %1598 = vmatprep.subr.bf16.mxu0 0
        %1599 = vmatpush1.bf16.msra.mxu0 0
        %1600 = vmatprep.subr.bf16.mxu0 0
        %1601 = vmatpush1.bf16.msra.mxu0 0
        %1602 = vmatprep.mubr.bf16.mxu0 0
        %1603 = vmatmul.mubr.bf16.gmra.mrb[0].mxu0 %v1467
        %v1604 = vpop.f32.mrb[0].mxu0
        %v1605 = vadd.f32 %v1520, %v1604
        %v1606 = vpop.f32.mrb[0].mxu0
        %v1607 = vpop.f32.mrb[0].mxu0
        %v1608 = vadd.f32 %v1520, %v1607
        %v1609 = vpop.f32.mrb[0].mxu0
        %1610 = vmatprep.mubr.bf16.mxu0 0
        %1611 = vmatmul.mubr.bf16.gmra.mrb[0].mxu0 %v1468
        %v1612 = vpop.f32.mrb[0].mxu0
        %v1613 = vadd.f32 %v1520, %v1612
        %v1614 = vpop.f32.mrb[0].mxu0
        %v1615 = vpop.f32.mrb[0].mxu0
        %v1616 = vadd.f32 %v1520, %v1615
        %v1617 = vpop.f32.mrb[0].mxu0
        %1618 = vmatprep.mubr.bf16.mxu0 0
        %1619 = vmatmul.mubr.bf16.gmra.mrb[0].mxu0 %v1469
        %v1620 = vpop.f32.mrb[0].mxu0
        %v1621 = vadd.f32 %v1520, %v1620
        %v1622 = vpop.f32.mrb[0].mxu0
        %v1623 = vpop.f32.mrb[0].mxu0
        %v1624 = vadd.f32 %v1520, %v1623
        %v1625 = vpop.f32.mrb[0].mxu0
        %1626 = vmatprep.mubr.bf16.mxu0 0
        %1627 = vmatmul.mubr.bf16.gmra.mrb[0].mxu0 %v1470
        %v1628 = vpop.f32.mrb[0].mxu0
        %v1629 = vadd.f32 %v1520, %v1628
        %v1630 = vpop.f32.mrb[0].mxu0
        %v1631 = vpop.f32.mrb[0].mxu0
        %v1632 = vadd.f32 %v1520, %v1631
        %v1633 = vpop.f32.mrb[0].mxu0
        %1634 = vmatprep.mubr.bf16.mxu0 0
        %1635 = vmatmul.mubr.bf16.gmra.mrb[0].mxu0 %v1471
        %v1636 = vpop.f32.mrb[0].mxu0
        %v1637 = vadd.f32 %v1520, %v1636
        %v1638 = vpop.f32.mrb[0].mxu0
        %v1639 = vpop.f32.mrb[0].mxu0
        %v1640 = vadd.f32 %v1520, %v1639
        %v1641 = vpop.f32.mrb[0].mxu0
        %1642 = vmatprep.mubr.bf16.mxu0 0
        %1643 = vmatmul.mubr.bf16.gmra.mrb[0].mxu0 %v1472
        %v1644 = vpop.f32.mrb[0].mxu0
        %v1645 = vadd.f32 %v1520, %v1644
        %v1646 = vpop.f32.mrb[0].mxu0
        %v1647 = vpop.f32.mrb[0].mxu0
        %v1648 = vadd.f32 %v1520, %v1647
        %v1649 = vpop.f32.mrb[0].mxu0
        %1650 = vmatprep.mubr.bf16.mxu0 0
        %1651 = vmatmul.mubr.bf16.gmra.mrb[0].mxu0 %v1473
        %v1652 = vpop.f32.mrb[0].mxu0
        %v1653 = vadd.f32 %v1520, %v1652
        %v1654 = vpop.f32.mrb[0].mxu0
        %v1655 = vpop.f32.mrb[0].mxu0
        %v1656 = vadd.f32 %v1520, %v1655
        %v1657 = vpop.f32.mrb[0].mxu0
        %1658 = vmatprep.mubr.bf16.mxu0 0
        %1659 = vmatmul.mubr.bf16.gmra.mrb[0].mxu0 %v1474
        %v1660 = vpop.f32.mrb[0].mxu0
        %v1661 = vadd.f32 %v1520, %v1660
        %v1662 = vpop.f32.mrb[0].mxu0
        %v1663 = vpop.f32.mrb[0].mxu0
        %v1664 = vadd.f32 %v1520, %v1663
        %v1665 = vpop.f32.mrb[0].mxu0
        %1666 = vmatprep.mubr.bf16.mxu0 0
        %1667 = vmatmul.mubr.bf16.gmra.mrb[0].mxu0 %v1475
        %v1668 = vpop.f32.mrb[0].mxu0
        %v1669 = vadd.f32 %v1520, %v1668
        %v1670 = vpop.f32.mrb[0].mxu0
        %v1671 = vpop.f32.mrb[0].mxu0
        %v1672 = vadd.f32 %v1520, %v1671
        %v1673 = vpop.f32.mrb[0].mxu0
        %1674 = vmatprep.mubr.bf16.mxu0 0
        %1675 = vmatmul.mubr.bf16.gmra.mrb[0].mxu0 %v1476
        %v1676 = vpop.f32.mrb[0].mxu0
        %v1677 = vadd.f32 %v1520, %v1676
        %v1678 = vpop.f32.mrb[0].mxu0
        %v1679 = vpop.f32.mrb[0].mxu0
        %v1680 = vadd.f32 %v1520, %v1679
        %v1681 = vpop.f32.mrb[0].mxu0
        %1682 = vmatprep.mubr.bf16.mxu0 0
        %1683 = vmatmul.mubr.bf16.gmra.mrb[0].mxu0 %v1477
        %v1684 = vpop.f32.mrb[0].mxu0
        %v1685 = vadd.f32 %v1520, %v1684
        %v1686 = vpop.f32.mrb[0].mxu0
        %v1687 = vpop.f32.mrb[0].mxu0
        %v1688 = vadd.f32 %v1520, %v1687
        %v1689 = vpop.f32.mrb[0].mxu0
        %1690 = vmatprep.mubr.bf16.mxu0 0
        %1691 = vmatmul.mubr.bf16.gmra.mrb[0].mxu0 %v1478
        %v1692 = vpop.f32.mrb[0].mxu0
        %v1693 = vadd.f32 %v1520, %v1692
        %v1694 = vpop.f32.mrb[0].mxu0
        %v1695 = vpop.f32.mrb[0].mxu0
        %v1696 = vadd.f32 %v1520, %v1695
        %v1697 = vpop.f32.mrb[0].mxu0
        %1698 = vmatprep.mubr.bf16.mxu0 0
        %1699 = vmatmul.mubr.bf16.gmra.mrb[0].mxu0 %v1479
        %v1700 = vpop.f32.mrb[0].mxu0
        %v1701 = vadd.f32 %v1520, %v1700
        %v1702 = vpop.f32.mrb[0].mxu0
        %v1703 = vpop.f32.mrb[0].mxu0
        %v1704 = vadd.f32 %v1520, %v1703
        %v1705 = vpop.f32.mrb[0].mxu0
        %1706 = vmatprep.mubr.bf16.mxu0 0
        %1707 = vmatmul.mubr.bf16.gmra.mrb[0].mxu0 %v1480
        %v1708 = vpop.f32.mrb[0].mxu0
        %v1709 = vadd.f32 %v1520, %v1708
        %v1710 = vpop.f32.mrb[0].mxu0
        %v1711 = vpop.f32.mrb[0].mxu0
        %v1712 = vadd.f32 %v1520, %v1711
        %v1713 = vpop.f32.mrb[0].mxu0
        %1714 = vmatprep.mubr.bf16.mxu0 0
        %1715 = vmatmul.mubr.bf16.gmra.mrb[0].mxu0 %v1481
        %v1716 = vpop.f32.mrb[0].mxu0
        %v1717 = vadd.f32 %v1520, %v1716
        %v1718 = vpop.f32.mrb[0].mxu0
        %v1719 = vpop.f32.mrb[0].mxu0
        %v1720 = vadd.f32 %v1520, %v1719
        %v1721 = vpop.f32.mrb[0].mxu0
        %1722 = vmatprep.mubr.bf16.mxu0 0
        %1723 = vmatmul.mubr.bf16.gmra.mrb[0].mxu0 %v1482
        %v1724 = vpop.f32.mrb[0].mxu0
        %v1725 = vadd.f32 %v1520, %v1724
        %v1726 = vpop.f32.mrb[0].mxu0
        %v1727 = vpop.f32.mrb[0].mxu0
        %v1728 = vadd.f32 %v1520, %v1727
        %v1729 = vpop.f32.mrb[0].mxu0
        %1730 = vmatprep.mubr.bf16.mxu0 0
        %1731 = vmatmul.mubr.bf16.gmra.mrb[0].mxu0 %v1483
        %v1732 = vpop.f32.mrb[0].mxu0
        %v1733 = vadd.f32 %v1520, %v1732
        %v1734 = vpop.f32.mrb[0].mxu0
        %v1735 = vpop.f32.mrb[0].mxu0
        %v1736 = vadd.f32 %v1520, %v1735
        %v1737 = vpop.f32.mrb[0].mxu0
        %1738 = vmatprep.mubr.bf16.mxu0 0
        %1739 = vmatmul.mubr.bf16.gmra.mrb[0].mxu0 %v1484
        %v1740 = vpop.f32.mrb[0].mxu0
        %v1741 = vadd.f32 %v1520, %v1740
        %v1742 = vpop.f32.mrb[0].mxu0
        %v1743 = vpop.f32.mrb[0].mxu0
        %v1744 = vadd.f32 %v1520, %v1743
        %v1745 = vpop.f32.mrb[0].mxu0
        %1746 = vmatprep.mubr.bf16.mxu0 0
        %1747 = vmatmul.mubr.bf16.gmra.mrb[0].mxu0 %v1485
        %v1748 = vpop.f32.mrb[0].mxu0
        %v1749 = vadd.f32 %v1520, %v1748
        %v1750 = vpop.f32.mrb[0].mxu0
        %v1751 = vpop.f32.mrb[0].mxu0
        %v1752 = vadd.f32 %v1520, %v1751
        %v1753 = vpop.f32.mrb[0].mxu0
        %1754 = vmatprep.mubr.bf16.mxu0 0
        %1755 = vmatmul.mubr.bf16.gmra.mrb[0].mxu0 %v1486
        %v1756 = vpop.f32.mrb[0].mxu0
        %v1757 = vadd.f32 %v1520, %v1756
        %v1758 = vpop.f32.mrb[0].mxu0
        %v1759 = vpop.f32.mrb[0].mxu0
        %v1760 = vadd.f32 %v1520, %v1759
        %v1761 = vpop.f32.mrb[0].mxu0
        %1762 = vmatprep.mubr.bf16.mxu0 0
        %1763 = vmatmul.mubr.bf16.gmra.mrb[0].mxu0 %v1487
        %v1764 = vpop.f32.mrb[0].mxu0
        %v1765 = vadd.f32 %v1520, %v1764
        %v1766 = vpop.f32.mrb[0].mxu0
        %v1767 = vpop.f32.mrb[0].mxu0
        %v1768 = vadd.f32 %v1520, %v1767
        %v1769 = vpop.f32.mrb[0].mxu0
        %1770 = vmatprep.mubr.bf16.mxu0 0
        %1771 = vmatmul.mubr.bf16.gmra.mrb[0].mxu0 %v1488
        %v1772 = vpop.f32.mrb[0].mxu0
        %v1773 = vadd.f32 %v1520, %v1772
        %v1774 = vpop.f32.mrb[0].mxu0
        %v1775 = vpop.f32.mrb[0].mxu0
        %v1776 = vadd.f32 %v1520, %v1775
        %v1777 = vpop.f32.mrb[0].mxu0
        %1778 = vmatprep.mubr.bf16.mxu0 0
        %1779 = vmatmul.mubr.bf16.gmra.mrb[0].mxu0 %v1489
        %v1780 = vpop.f32.mrb[0].mxu0
        %v1781 = vadd.f32 %v1520, %v1780
        %v1782 = vpop.f32.mrb[0].mxu0
        %v1783 = vpop.f32.mrb[0].mxu0
        %v1784 = vadd.f32 %v1520, %v1783
        %v1785 = vpop.f32.mrb[0].mxu0
        %1786 = vmatprep.mubr.bf16.mxu0 0
        %1787 = vmatmul.mubr.bf16.gmra.mrb[0].mxu0 %v1490
        %v1788 = vpop.f32.mrb[0].mxu0
        %v1789 = vadd.f32 %v1520, %v1788
        %v1790 = vpop.f32.mrb[0].mxu0
        %v1791 = vpop.f32.mrb[0].mxu0
        %v1792 = vadd.f32 %v1520, %v1791
        %v1793 = vpop.f32.mrb[0].mxu0
        %1794 = vmatprep.mubr.bf16.mxu0 0
        %1795 = vmatmul.mubr.bf16.gmra.mrb[0].mxu0 %v1491
        %v1796 = vpop.f32.mrb[0].mxu0
        %v1797 = vadd.f32 %v1520, %v1796
        %v1798 = vpop.f32.mrb[0].mxu0
        %v1799 = vpop.f32.mrb[0].mxu0
        %v1800 = vadd.f32 %v1520, %v1799
        %v1801 = vpop.f32.mrb[0].mxu0
        %1802 = vmatprep.mubr.bf16.mxu0 0
        %1803 = vmatmul.mubr.bf16.gmra.mrb[0].mxu0 %v1492
        %v1804 = vpop.f32.mrb[0].mxu0
        %v1805 = vadd.f32 %v1520, %v1804
        %v1806 = vpop.f32.mrb[0].mxu0
        %v1807 = vpop.f32.mrb[0].mxu0
        %v1808 = vadd.f32 %v1520, %v1807
        %v1809 = vpop.f32.mrb[0].mxu0
        %1810 = vmatprep.mubr.bf16.mxu0 0
        %1811 = vmatmul.mubr.bf16.gmra.mrb[0].mxu0 %v1493
        %v1812 = vpop.f32.mrb[0].mxu0
        %v1813 = vadd.f32 %v1520, %v1812
        %v1814 = vpop.f32.mrb[0].mxu0
        %v1815 = vpop.f32.mrb[0].mxu0
        %v1816 = vadd.f32 %v1520, %v1815
        %v1817 = vpop.f32.mrb[0].mxu0
        %1818 = vmatprep.mubr.bf16.mxu0 0
        %1819 = vmatmul.mubr.bf16.gmra.mrb[0].mxu0 %v1494
        %v1820 = vpop.f32.mrb[0].mxu0
        %v1821 = vadd.f32 %v1520, %v1820
        %v1822 = vpop.f32.mrb[0].mxu0
        %v1823 = vpop.f32.mrb[0].mxu0
        %v1824 = vadd.f32 %v1520, %v1823
        %v1825 = vpop.f32.mrb[0].mxu0
        %1826 = vmatprep.mubr.bf16.mxu0 0
        %1827 = vmatmul.mubr.bf16.gmra.mrb[0].mxu0 %v1495
        %v1828 = vpop.f32.mrb[0].mxu0
        %v1829 = vadd.f32 %v1520, %v1828
        %v1830 = vpop.f32.mrb[0].mxu0
        %v1831 = vpop.f32.mrb[0].mxu0
        %v1832 = vadd.f32 %v1520, %v1831
        %v1833 = vpop.f32.mrb[0].mxu0
        %1834 = vmatprep.mubr.bf16.mxu0 0
        %1835 = vmatmul.mubr.bf16.gmra.mrb[0].mxu0 %v1496
        %v1836 = vpop.f32.mrb[0].mxu0
        %v1837 = vadd.f32 %v1520, %v1836
        %v1838 = vpop.f32.mrb[0].mxu0
        %v1839 = vpop.f32.mrb[0].mxu0
        %v1840 = vadd.f32 %v1520, %v1839
        %v1841 = vpop.f32.mrb[0].mxu0
        %1842 = vmatprep.mubr.bf16.mxu0 0
        %1843 = vmatmul.mubr.bf16.gmra.mrb[0].mxu0 %v1497
        %v1844 = vpop.f32.mrb[0].mxu0
        %v1845 = vadd.f32 %v1520, %v1844
        %v1846 = vpop.f32.mrb[0].mxu0
        %v1847 = vpop.f32.mrb[0].mxu0
        %v1848 = vadd.f32 %v1520, %v1847
        %v1849 = vpop.f32.mrb[0].mxu0
        %1850 = vmatprep.mubr.bf16.mxu0 0
        %1851 = vmatmul.mubr.bf16.gmra.mrb[0].mxu0 %v1498
        %v1852 = vpop.f32.mrb[0].mxu0
        %v1853 = vadd.f32 %v1520, %v1852
        %v1854 = vpop.f32.mrb[0].mxu0
        %v1855 = vpop.f32.mrb[0].mxu0
        %v1856 = vadd.f32 %v1520, %v1855
        %v1857 = vpop.f32.mrb[0].mxu0
        %1858 = vdwg.mxu0
        %v1859 = vmax.f32 %v1605, 0.0
        %v1860 = vmax.f32 %v1608, 0.0
        %v1861 = vmax.f32 %v1613, 0.0
        %v1862 = vmax.f32 %v1616, 0.0
        %v1863 = vmax.f32 %v1621, 0.0
        %v1864 = vmax.f32 %v1624, 0.0
        %v1865 = vmax.f32 %v1629, 0.0
        %v1866 = vmax.f32 %v1632, 0.0
        %v1867 = vmax.f32 %v1637, 0.0
        %v1868 = vmax.f32 %v1640, 0.0
        %v1869 = vmax.f32 %v1645, 0.0
        %v1870 = vmax.f32 %v1648, 0.0
        %v1871 = vmax.f32 %v1653, 0.0
        %v1872 = vmax.f32 %v1656, 0.0
        %v1873 = vmax.f32 %v1661, 0.0
        %v1874 = vmax.f32 %v1664, 0.0
        %v1875 = vmax.f32 %v1669, 0.0
        %v1876 = vmax.f32 %v1672, 0.0
        %v1877 = vmax.f32 %v1677, 0.0
        %v1878 = vmax.f32 %v1680, 0.0
        %v1879 = vmax.f32 %v1685, 0.0
        %v1880 = vmax.f32 %v1688, 0.0
        %v1881 = vmax.f32 %v1693, 0.0
        %v1882 = vmax.f32 %v1696, 0.0
        %v1883 = vmax.f32 %v1701, 0.0
        %v1884 = vmax.f32 %v1704, 0.0
        %v1885 = vmax.f32 %v1709, 0.0
        %v1886 = vmax.f32 %v1712, 0.0
        %v1887 = vmax.f32 %v1717, 0.0
        %v1888 = vmax.f32 %v1720, 0.0
        %v1889 = vmax.f32 %v1725, 0.0
        %v1890 = vmax.f32 %v1728, 0.0
        %v1891 = vmax.f32 %v1733, 0.0
        %v1892 = vmax.f32 %v1736, 0.0
        %v1893 = vmax.f32 %v1741, 0.0
        %v1894 = vmax.f32 %v1744, 0.0
        %v1895 = vmax.f32 %v1749, 0.0
        %v1896 = vmax.f32 %v1752, 0.0
        %v1897 = vmax.f32 %v1757, 0.0
        %v1898 = vmax.f32 %v1760, 0.0
        %v1899 = vmax.f32 %v1765, 0.0
        %v1900 = vmax.f32 %v1768, 0.0
        %v1901 = vmax.f32 %v1773, 0.0
        %v1902 = vmax.f32 %v1776, 0.0
        %v1903 = vmax.f32 %v1781, 0.0
        %v1904 = vmax.f32 %v1784, 0.0
        %v1905 = vmax.f32 %v1789, 0.0
        %v1906 = vmax.f32 %v1792, 0.0
        %v1907 = vmax.f32 %v1797, 0.0
        %v1908 = vmax.f32 %v1800, 0.0
        %v1909 = vmax.f32 %v1805, 0.0
        %v1910 = vmax.f32 %v1808, 0.0
        %v1911 = vmax.f32 %v1813, 0.0
        %v1912 = vmax.f32 %v1816, 0.0
        %v1913 = vmax.f32 %v1821, 0.0
        %v1914 = vmax.f32 %v1824, 0.0
        %v1915 = vmax.f32 %v1829, 0.0
        %v1916 = vmax.f32 %v1832, 0.0
        %v1917 = vmax.f32 %v1837, 0.0
        %v1918 = vmax.f32 %v1840, 0.0
        %v1919 = vmax.f32 %v1845, 0.0
        %v1920 = vmax.f32 %v1848, 0.0
        %v1921 = vmax.f32 %v1853, 0.0
        %v1922 = vmax.f32 %v1856, 0.0
        %v1923 = vpack.c.bf16 %v1860, %v1859
        %v1924 = vpack.c.bf16 %v1862, %v1861
        %v1925 = vpack.c.bf16 %v1864, %v1863
        %v1926 = vpack.c.bf16 %v1866, %v1865
        %v1927 = vpack.c.bf16 %v1868, %v1867
        %v1928 = vpack.c.bf16 %v1870, %v1869
        %v1929 = vpack.c.bf16 %v1872, %v1871
        %v1930 = vpack.c.bf16 %v1874, %v1873
        %v1931 = vpack.c.bf16 %v1876, %v1875
        %v1932 = vpack.c.bf16 %v1878, %v1877
        %v1933 = vpack.c.bf16 %v1880, %v1879
        %v1934 = vpack.c.bf16 %v1882, %v1881
        %v1935 = vpack.c.bf16 %v1884, %v1883
        %v1936 = vpack.c.bf16 %v1886, %v1885
        %v1937 = vpack.c.bf16 %v1888, %v1887
        %v1938 = vpack.c.bf16 %v1890, %v1889
        %v1939 = vpack.c.bf16 %v1892, %v1891
        %v1940 = vpack.c.bf16 %v1894, %v1893
        %v1941 = vpack.c.bf16 %v1896, %v1895
        %v1942 = vpack.c.bf16 %v1898, %v1897
        %v1943 = vpack.c.bf16 %v1900, %v1899
        %v1944 = vpack.c.bf16 %v1902, %v1901
        %v1945 = vpack.c.bf16 %v1904, %v1903
        %v1946 = vpack.c.bf16 %v1906, %v1905
        %v1947 = vpack.c.bf16 %v1908, %v1907
        %v1948 = vpack.c.bf16 %v1910, %v1909
        %v1949 = vpack.c.bf16 %v1912, %v1911
        %v1950 = vpack.c.bf16 %v1914, %v1913
        %v1951 = vpack.c.bf16 %v1916, %v1915
        %v1952 = vpack.c.bf16 %v1918, %v1917
        %v1953 = vpack.c.bf16 %v1920, %v1919
        %v1954 = vpack.c.bf16 %v1922, %v1921
        %v1955 = vld [vmem:[#allocation10] sm:$0xf]
        %v1956 = vld [vmem:[#allocation10 + $0x4] sm:$0xf]
        %v1957 = vld [vmem:[#allocation10 + $0x8] sm:$0xf]
        %v1958 = vld [vmem:[#allocation10 + $0xc] sm:$0xf]
        %v1959 = vld [vmem:[#allocation10 + $0x10] sm:$0xf]
        %v1960 = vld [vmem:[#allocation10 + $0x14] sm:$0xf]
        %v1961 = vld [vmem:[#allocation10 + $0x18] sm:$0xf]
        %v1962 = vld [vmem:[#allocation10 + $0x1c] sm:$0xf]
        %v1963 = vld [vmem:[#allocation10 + $0x20] sm:$0xf]
        %v1964 = vld [vmem:[#allocation10 + $0x24] sm:$0xf]
        %v1965 = vld [vmem:[#allocation10 + $0x28] sm:$0xf]
        %v1966 = vld [vmem:[#allocation10 + $0x2c] sm:$0xf]
        %v1967 = vld [vmem:[#allocation10 + $0x30] sm:$0xf]
        %v1968 = vld [vmem:[#allocation10 + $0x34] sm:$0xf]
        %v1969 = vld [vmem:[#allocation10 + $0x38] sm:$0xf]
        %v1970 = vld [vmem:[#allocation10 + $0x3c] sm:$0xf]
        %v1971 = vld [vmem:[%s8] sm:$0x1]
        %v1973 = vlaneseq
        %v1974 = vshrl.u32 %v1973, 7
        %v1975 = vsub.s32 0, %v1974
        %v1976 = vrot.slane %v1971, %v1975
        %v1994 = vunpack.c.l.b16 %v1955
        %v1995 = vunpack.c.l.b16 %v1956
        %v1996 = vunpack.c.l.b16 %v1957
        %v1997 = vunpack.c.l.b16 %v1958
        %v1998 = vunpack.c.l.b16 %v1959
        %v1999 = vunpack.c.l.b16 %v1960
        %v2000 = vunpack.c.l.b16 %v1961
        %v2001 = vunpack.c.l.b16 %v1962
        %v2002 = vunpack.c.l.b16 %v1963
        %v2003 = vunpack.c.l.b16 %v1964
        %v2004 = vunpack.c.l.b16 %v1965
        %v2005 = vunpack.c.l.b16 %v1966
        %v2006 = vunpack.c.l.b16 %v1967
        %v2007 = vunpack.c.l.b16 %v1968
        %v2008 = vunpack.c.l.b16 %v1969
        %v2009 = vunpack.c.l.b16 %v1970
        %v2010 = vpack.c.b16 %v1995, %v1994
        %v2011 = vpack.c.b16 %v1997, %v1996
        %v2012 = vpack.c.b16 %v1999, %v1998
        %v2013 = vpack.c.b16 %v2001, %v2000
        %v2014 = vpack.c.b16 %v2003, %v2002
        %v2015 = vpack.c.b16 %v2005, %v2004
        %v2016 = vpack.c.b16 %v2007, %v2006
        %v2017 = vpack.c.b16 %v2009, %v2008
        %2026 = vmatprep.subr.bf16.mxu0 0
        %2027 = vmatpush1.bf16.msra.mxu0 %v2010
        %2028 = vmatprep.subr.bf16.mxu0 0
        %2029 = vmatpush1.bf16.msra.mxu0 %v2011
        %2030 = vmatprep.subr.bf16.mxu0 0
        %2031 = vmatpush1.bf16.msra.mxu0 %v2012
        %2032 = vmatprep.subr.bf16.mxu0 0
        %2033 = vmatpush1.bf16.msra.mxu0 %v2013
        %2034 = vmatprep.subr.bf16.mxu0 0
        %2035 = vmatpush1.bf16.msra.mxu0 %v2014
        %2036 = vmatprep.subr.bf16.mxu0 0
        %2037 = vmatpush1.bf16.msra.mxu0 %v2015
        %2038 = vmatprep.subr.bf16.mxu0 0
        %2039 = vmatpush1.bf16.msra.mxu0 %v2016
        %2040 = vmatprep.subr.bf16.mxu0 0
        %2041 = vmatpush1.bf16.msra.mxu0 %v2017
        %2042 = vmatprep.subr.bf16.mxu0 0
        %2043 = vmatpush1.bf16.msra.mxu0 0
        %2044 = vmatprep.subr.bf16.mxu0 0
        %2045 = vmatpush1.bf16.msra.mxu0 0
        %2046 = vmatprep.subr.bf16.mxu0 0
        %2047 = vmatpush1.bf16.msra.mxu0 0
        %2048 = vmatprep.subr.bf16.mxu0 0
        %2049 = vmatpush1.bf16.msra.mxu0 0
        %2050 = vmatprep.subr.bf16.mxu0 0
        %2051 = vmatpush1.bf16.msra.mxu0 0
        %2052 = vmatprep.subr.bf16.mxu0 0
        %2053 = vmatpush1.bf16.msra.mxu0 0
        %2054 = vmatprep.subr.bf16.mxu0 0
        %2055 = vmatpush1.bf16.msra.mxu0 0
        %2056 = vmatprep.subr.bf16.mxu0 0
        %2057 = vmatpush1.bf16.msra.mxu0 0
        %2058 = vmatprep.mubr.bf16.mxu0 0
        %2059 = vmatmul.mubr.bf16.gmra.mrb[0].mxu0 %v1923
        %v2060 = vpop.f32.mrb[0].mxu0
        %v2061 = vadd.f32 %v1976, %v2060
        %v2062 = vpop.f32.mrb[0].mxu0
        %v2063 = vpop.f32.mrb[0].mxu0
        %v2064 = vadd.f32 %v1976, %v2063
        %v2065 = vpop.f32.mrb[0].mxu0
        %2066 = vmatprep.mubr.bf16.mxu0 0
        %2067 = vmatmul.mubr.bf16.gmra.mrb[0].mxu0 %v1924
        %v2068 = vpop.f32.mrb[0].mxu0
        %v2069 = vadd.f32 %v1976, %v2068
        %v2070 = vpop.f32.mrb[0].mxu0
        %v2071 = vpop.f32.mrb[0].mxu0
        %v2072 = vadd.f32 %v1976, %v2071
        %v2073 = vpop.f32.mrb[0].mxu0
        %2074 = vmatprep.mubr.bf16.mxu0 0
        %2075 = vmatmul.mubr.bf16.gmra.mrb[0].mxu0 %v1925
        %v2076 = vpop.f32.mrb[0].mxu0
        %v2077 = vadd.f32 %v1976, %v2076
        %v2078 = vpop.f32.mrb[0].mxu0
        %v2079 = vpop.f32.mrb[0].mxu0
        %v2080 = vadd.f32 %v1976, %v2079
        %v2081 = vpop.f32.mrb[0].mxu0
        %2082 = vmatprep.mubr.bf16.mxu0 0
        %2083 = vmatmul.mubr.bf16.gmra.mrb[0].mxu0 %v1926
        %v2084 = vpop.f32.mrb[0].mxu0
        %v2085 = vadd.f32 %v1976, %v2084
        %v2086 = vpop.f32.mrb[0].mxu0
        %v2087 = vpop.f32.mrb[0].mxu0
        %v2088 = vadd.f32 %v1976, %v2087
        %v2089 = vpop.f32.mrb[0].mxu0
        %2090 = vmatprep.mubr.bf16.mxu0 0
        %2091 = vmatmul.mubr.bf16.gmra.mrb[0].mxu0 %v1927
        %v2092 = vpop.f32.mrb[0].mxu0
        %v2093 = vadd.f32 %v1976, %v2092
        %v2094 = vpop.f32.mrb[0].mxu0
        %v2095 = vpop.f32.mrb[0].mxu0
        %v2096 = vadd.f32 %v1976, %v2095
        %v2097 = vpop.f32.mrb[0].mxu0
        %2098 = vmatprep.mubr.bf16.mxu0 0
        %2099 = vmatmul.mubr.bf16.gmra.mrb[0].mxu0 %v1928
        %v2100 = vpop.f32.mrb[0].mxu0
        %v2101 = vadd.f32 %v1976, %v2100
        %v2102 = vpop.f32.mrb[0].mxu0
        %v2103 = vpop.f32.mrb[0].mxu0
        %v2104 = vadd.f32 %v1976, %v2103
        %v2105 = vpop.f32.mrb[0].mxu0
        %2106 = vmatprep.mubr.bf16.mxu0 0
        %2107 = vmatmul.mubr.bf16.gmra.mrb[0].mxu0 %v1929
        %v2108 = vpop.f32.mrb[0].mxu0
        %v2109 = vadd.f32 %v1976, %v2108
        %v2110 = vpop.f32.mrb[0].mxu0
        %v2111 = vpop.f32.mrb[0].mxu0
        %v2112 = vadd.f32 %v1976, %v2111
        %v2113 = vpop.f32.mrb[0].mxu0
        %2114 = vmatprep.mubr.bf16.mxu0 0
        %2115 = vmatmul.mubr.bf16.gmra.mrb[0].mxu0 %v1930
        %v2116 = vpop.f32.mrb[0].mxu0
        %v2117 = vadd.f32 %v1976, %v2116
        %v2118 = vpop.f32.mrb[0].mxu0
        %v2119 = vpop.f32.mrb[0].mxu0
        %v2120 = vadd.f32 %v1976, %v2119
        %v2121 = vpop.f32.mrb[0].mxu0
        %2122 = vmatprep.mubr.bf16.mxu0 0
        %2123 = vmatmul.mubr.bf16.gmra.mrb[0].mxu0 %v1931
        %v2124 = vpop.f32.mrb[0].mxu0
        %v2125 = vadd.f32 %v1976, %v2124
        %v2126 = vpop.f32.mrb[0].mxu0
        %v2127 = vpop.f32.mrb[0].mxu0
        %v2128 = vadd.f32 %v1976, %v2127
        %v2129 = vpop.f32.mrb[0].mxu0
        %2130 = vmatprep.mubr.bf16.mxu0 0
        %2131 = vmatmul.mubr.bf16.gmra.mrb[0].mxu0 %v1932
        %v2132 = vpop.f32.mrb[0].mxu0
        %v2133 = vadd.f32 %v1976, %v2132
        %v2134 = vpop.f32.mrb[0].mxu0
        %v2135 = vpop.f32.mrb[0].mxu0
        %v2136 = vadd.f32 %v1976, %v2135
        %v2137 = vpop.f32.mrb[0].mxu0
        %2138 = vmatprep.mubr.bf16.mxu0 0
        %2139 = vmatmul.mubr.bf16.gmra.mrb[0].mxu0 %v1933
        %v2140 = vpop.f32.mrb[0].mxu0
        %v2141 = vadd.f32 %v1976, %v2140
        %v2142 = vpop.f32.mrb[0].mxu0
        %v2143 = vpop.f32.mrb[0].mxu0
        %v2144 = vadd.f32 %v1976, %v2143
        %v2145 = vpop.f32.mrb[0].mxu0
        %2146 = vmatprep.mubr.bf16.mxu0 0
        %2147 = vmatmul.mubr.bf16.gmra.mrb[0].mxu0 %v1934
        %v2148 = vpop.f32.mrb[0].mxu0
        %v2149 = vadd.f32 %v1976, %v2148
        %v2150 = vpop.f32.mrb[0].mxu0
        %v2151 = vpop.f32.mrb[0].mxu0
        %v2152 = vadd.f32 %v1976, %v2151
        %v2153 = vpop.f32.mrb[0].mxu0
        %2154 = vmatprep.mubr.bf16.mxu0 0
        %2155 = vmatmul.mubr.bf16.gmra.mrb[0].mxu0 %v1935
        %v2156 = vpop.f32.mrb[0].mxu0
        %v2157 = vadd.f32 %v1976, %v2156
        %v2158 = vpop.f32.mrb[0].mxu0
        %v2159 = vpop.f32.mrb[0].mxu0
        %v2160 = vadd.f32 %v1976, %v2159
        %v2161 = vpop.f32.mrb[0].mxu0
        %2162 = vmatprep.mubr.bf16.mxu0 0
        %2163 = vmatmul.mubr.bf16.gmra.mrb[0].mxu0 %v1936
        %v2164 = vpop.f32.mrb[0].mxu0
        %v2165 = vadd.f32 %v1976, %v2164
        %v2166 = vpop.f32.mrb[0].mxu0
        %v2167 = vpop.f32.mrb[0].mxu0
        %v2168 = vadd.f32 %v1976, %v2167
        %v2169 = vpop.f32.mrb[0].mxu0
        %2170 = vmatprep.mubr.bf16.mxu0 0
        %2171 = vmatmul.mubr.bf16.gmra.mrb[0].mxu0 %v1937
        %v2172 = vpop.f32.mrb[0].mxu0
        %v2173 = vadd.f32 %v1976, %v2172
        %v2174 = vpop.f32.mrb[0].mxu0
        %v2175 = vpop.f32.mrb[0].mxu0
        %v2176 = vadd.f32 %v1976, %v2175
        %v2177 = vpop.f32.mrb[0].mxu0
        %2178 = vmatprep.mubr.bf16.mxu0 0
        %2179 = vmatmul.mubr.bf16.gmra.mrb[0].mxu0 %v1938
        %v2180 = vpop.f32.mrb[0].mxu0
        %v2181 = vadd.f32 %v1976, %v2180
        %v2182 = vpop.f32.mrb[0].mxu0
        %v2183 = vpop.f32.mrb[0].mxu0
        %v2184 = vadd.f32 %v1976, %v2183
        %v2185 = vpop.f32.mrb[0].mxu0
        %2186 = vmatprep.mubr.bf16.mxu0 0
        %2187 = vmatmul.mubr.bf16.gmra.mrb[0].mxu0 %v1939
        %v2188 = vpop.f32.mrb[0].mxu0
        %v2189 = vadd.f32 %v1976, %v2188
        %v2190 = vpop.f32.mrb[0].mxu0
        %v2191 = vpop.f32.mrb[0].mxu0
        %v2192 = vadd.f32 %v1976, %v2191
        %v2193 = vpop.f32.mrb[0].mxu0
        %2194 = vmatprep.mubr.bf16.mxu0 0
        %2195 = vmatmul.mubr.bf16.gmra.mrb[0].mxu0 %v1940
        %v2196 = vpop.f32.mrb[0].mxu0
        %v2197 = vadd.f32 %v1976, %v2196
        %v2198 = vpop.f32.mrb[0].mxu0
        %v2199 = vpop.f32.mrb[0].mxu0
        %v2200 = vadd.f32 %v1976, %v2199
        %v2201 = vpop.f32.mrb[0].mxu0
        %2202 = vmatprep.mubr.bf16.mxu0 0
        %2203 = vmatmul.mubr.bf16.gmra.mrb[0].mxu0 %v1941
        %v2204 = vpop.f32.mrb[0].mxu0
        %v2205 = vadd.f32 %v1976, %v2204
        %v2206 = vpop.f32.mrb[0].mxu0
        %v2207 = vpop.f32.mrb[0].mxu0
        %v2208 = vadd.f32 %v1976, %v2207
        %v2209 = vpop.f32.mrb[0].mxu0
        %2210 = vmatprep.mubr.bf16.mxu0 0
        %2211 = vmatmul.mubr.bf16.gmra.mrb[0].mxu0 %v1942
        %v2212 = vpop.f32.mrb[0].mxu0
        %v2213 = vadd.f32 %v1976, %v2212
        %v2214 = vpop.f32.mrb[0].mxu0
        %v2215 = vpop.f32.mrb[0].mxu0
        %v2216 = vadd.f32 %v1976, %v2215
        %v2217 = vpop.f32.mrb[0].mxu0
        %2218 = vmatprep.mubr.bf16.mxu0 0
        %2219 = vmatmul.mubr.bf16.gmra.mrb[0].mxu0 %v1943
        %v2220 = vpop.f32.mrb[0].mxu0
        %v2221 = vadd.f32 %v1976, %v2220
        %v2222 = vpop.f32.mrb[0].mxu0
        %v2223 = vpop.f32.mrb[0].mxu0
        %v2224 = vadd.f32 %v1976, %v2223
        %v2225 = vpop.f32.mrb[0].mxu0
        %2226 = vmatprep.mubr.bf16.mxu0 0
        %2227 = vmatmul.mubr.bf16.gmra.mrb[0].mxu0 %v1944
        %v2228 = vpop.f32.mrb[0].mxu0
        %v2229 = vadd.f32 %v1976, %v2228
        %v2230 = vpop.f32.mrb[0].mxu0
        %v2231 = vpop.f32.mrb[0].mxu0
        %v2232 = vadd.f32 %v1976, %v2231
        %v2233 = vpop.f32.mrb[0].mxu0
        %2234 = vmatprep.mubr.bf16.mxu0 0
        %2235 = vmatmul.mubr.bf16.gmra.mrb[0].mxu0 %v1945
        %v2236 = vpop.f32.mrb[0].mxu0
        %v2237 = vadd.f32 %v1976, %v2236
        %v2238 = vpop.f32.mrb[0].mxu0
        %v2239 = vpop.f32.mrb[0].mxu0
        %v2240 = vadd.f32 %v1976, %v2239
        %v2241 = vpop.f32.mrb[0].mxu0
        %2242 = vmatprep.mubr.bf16.mxu0 0
        %2243 = vmatmul.mubr.bf16.gmra.mrb[0].mxu0 %v1946
        %v2244 = vpop.f32.mrb[0].mxu0
        %v2245 = vadd.f32 %v1976, %v2244
        %v2246 = vpop.f32.mrb[0].mxu0
        %v2247 = vpop.f32.mrb[0].mxu0
        %v2248 = vadd.f32 %v1976, %v2247
        %v2249 = vpop.f32.mrb[0].mxu0
        %2250 = vmatprep.mubr.bf16.mxu0 0
        %2251 = vmatmul.mubr.bf16.gmra.mrb[0].mxu0 %v1947
        %v2252 = vpop.f32.mrb[0].mxu0
        %v2253 = vadd.f32 %v1976, %v2252
        %v2254 = vpop.f32.mrb[0].mxu0
        %v2255 = vpop.f32.mrb[0].mxu0
        %v2256 = vadd.f32 %v1976, %v2255
        %v2257 = vpop.f32.mrb[0].mxu0
        %2258 = vmatprep.mubr.bf16.mxu0 0
        %2259 = vmatmul.mubr.bf16.gmra.mrb[0].mxu0 %v1948
        %v2260 = vpop.f32.mrb[0].mxu0
        %v2261 = vadd.f32 %v1976, %v2260
        %v2262 = vpop.f32.mrb[0].mxu0
        %v2263 = vpop.f32.mrb[0].mxu0
        %v2264 = vadd.f32 %v1976, %v2263
        %v2265 = vpop.f32.mrb[0].mxu0
        %2266 = vmatprep.mubr.bf16.mxu0 0
        %2267 = vmatmul.mubr.bf16.gmra.mrb[0].mxu0 %v1949
        %v2268 = vpop.f32.mrb[0].mxu0
        %v2269 = vadd.f32 %v1976, %v2268
        %v2270 = vpop.f32.mrb[0].mxu0
        %v2271 = vpop.f32.mrb[0].mxu0
        %v2272 = vadd.f32 %v1976, %v2271
        %v2273 = vpop.f32.mrb[0].mxu0
        %2274 = vmatprep.mubr.bf16.mxu0 0
        %2275 = vmatmul.mubr.bf16.gmra.mrb[0].mxu0 %v1950
        %v2276 = vpop.f32.mrb[0].mxu0
        %v2277 = vadd.f32 %v1976, %v2276
        %v2278 = vpop.f32.mrb[0].mxu0
        %v2279 = vpop.f32.mrb[0].mxu0
        %v2280 = vadd.f32 %v1976, %v2279
        %v2281 = vpop.f32.mrb[0].mxu0
        %2282 = vmatprep.mubr.bf16.mxu0 0
        %2283 = vmatmul.mubr.bf16.gmra.mrb[0].mxu0 %v1951
        %v2284 = vpop.f32.mrb[0].mxu0
        %v2285 = vadd.f32 %v1976, %v2284
        %v2286 = vpop.f32.mrb[0].mxu0
        %v2287 = vpop.f32.mrb[0].mxu0
        %v2288 = vadd.f32 %v1976, %v2287
        %v2289 = vpop.f32.mrb[0].mxu0
        %2290 = vmatprep.mubr.bf16.mxu0 0
        %2291 = vmatmul.mubr.bf16.gmra.mrb[0].mxu0 %v1952
        %v2292 = vpop.f32.mrb[0].mxu0
        %v2293 = vadd.f32 %v1976, %v2292
        %v2294 = vpop.f32.mrb[0].mxu0
        %v2295 = vpop.f32.mrb[0].mxu0
        %v2296 = vadd.f32 %v1976, %v2295
        %v2297 = vpop.f32.mrb[0].mxu0
        %2298 = vmatprep.mubr.bf16.mxu0 0
        %2299 = vmatmul.mubr.bf16.gmra.mrb[0].mxu0 %v1953
        %v2300 = vpop.f32.mrb[0].mxu0
        %v2301 = vadd.f32 %v1976, %v2300
        %v2302 = vpop.f32.mrb[0].mxu0
        %v2303 = vpop.f32.mrb[0].mxu0
        %v2304 = vadd.f32 %v1976, %v2303
        %v2305 = vpop.f32.mrb[0].mxu0
        %2306 = vmatprep.mubr.bf16.mxu0 0
        %2307 = vmatmul.mubr.bf16.gmra.mrb[0].mxu0 %v1954
        %v2308 = vpop.f32.mrb[0].mxu0
        %v2309 = vadd.f32 %v1976, %v2308
        %v2310 = vpop.f32.mrb[0].mxu0
        %v2311 = vpop.f32.mrb[0].mxu0
        %v2312 = vadd.f32 %v1976, %v2311
        %v2313 = vpop.f32.mrb[0].mxu0
        %2314 = vdwg.mxu0
        %v2315 = vxor.u32 %v2061, 2147483648
        %v2316 = vxor.u32 %v2064, 2147483648
        %v2317 = vxor.u32 %v2069, 2147483648
        %v2318 = vxor.u32 %v2072, 2147483648
        %v2319 = vxor.u32 %v2077, 2147483648
        %v2320 = vxor.u32 %v2080, 2147483648
        %v2321 = vxor.u32 %v2085, 2147483648
        %v2322 = vxor.u32 %v2088, 2147483648
        %v2323 = vxor.u32 %v2093, 2147483648
        %v2324 = vxor.u32 %v2096, 2147483648
        %v2325 = vxor.u32 %v2101, 2147483648
        %v2326 = vxor.u32 %v2104, 2147483648
        %v2327 = vxor.u32 %v2109, 2147483648
        %v2328 = vxor.u32 %v2112, 2147483648
        %v2329 = vxor.u32 %v2117, 2147483648
        %v2330 = vxor.u32 %v2120, 2147483648
        %v2331 = vxor.u32 %v2125, 2147483648
        %v2332 = vxor.u32 %v2128, 2147483648
        %v2333 = vxor.u32 %v2133, 2147483648
        %v2334 = vxor.u32 %v2136, 2147483648
        %v2335 = vxor.u32 %v2141, 2147483648
        %v2336 = vxor.u32 %v2144, 2147483648
        %v2337 = vxor.u32 %v2149, 2147483648
        %v2338 = vxor.u32 %v2152, 2147483648
        %v2339 = vxor.u32 %v2157, 2147483648
        %v2340 = vxor.u32 %v2160, 2147483648
        %v2341 = vxor.u32 %v2165, 2147483648
        %v2342 = vxor.u32 %v2168, 2147483648
        %v2343 = vxor.u32 %v2173, 2147483648
        %v2344 = vxor.u32 %v2176, 2147483648
        %v2345 = vxor.u32 %v2181, 2147483648
        %v2346 = vxor.u32 %v2184, 2147483648
        %v2347 = vxor.u32 %v2189, 2147483648
        %v2348 = vxor.u32 %v2192, 2147483648
        %v2349 = vxor.u32 %v2197, 2147483648
        %v2350 = vxor.u32 %v2200, 2147483648
        %v2351 = vxor.u32 %v2205, 2147483648
        %v2352 = vxor.u32 %v2208, 2147483648
        %v2353 = vxor.u32 %v2213, 2147483648
        %v2354 = vxor.u32 %v2216, 2147483648
        %v2355 = vxor.u32 %v2221, 2147483648
        %v2356 = vxor.u32 %v2224, 2147483648
        %v2357 = vxor.u32 %v2229, 2147483648
        %v2358 = vxor.u32 %v2232, 2147483648
        %v2359 = vxor.u32 %v2237, 2147483648
        %v2360 = vxor.u32 %v2240, 2147483648
        %v2361 = vxor.u32 %v2245, 2147483648
        %v2362 = vxor.u32 %v2248, 2147483648
        %v2363 = vxor.u32 %v2253, 2147483648
        %v2364 = vxor.u32 %v2256, 2147483648
        %v2365 = vxor.u32 %v2261, 2147483648
        %v2366 = vxor.u32 %v2264, 2147483648
        %v2367 = vxor.u32 %v2269, 2147483648
        %v2368 = vxor.u32 %v2272, 2147483648
        %v2369 = vxor.u32 %v2277, 2147483648
        %v2370 = vxor.u32 %v2280, 2147483648
        %v2371 = vxor.u32 %v2285, 2147483648
        %v2372 = vxor.u32 %v2288, 2147483648
        %v2373 = vxor.u32 %v2293, 2147483648
        %v2374 = vxor.u32 %v2296, 2147483648
        %v2375 = vxor.u32 %v2301, 2147483648
        %v2376 = vxor.u32 %v2304, 2147483648
        %v2377 = vxor.u32 %v2309, 2147483648
        %v2378 = vxor.u32 %v2312, 2147483648
        %v2379 = vmul.f32 %v2315, 1.442695
        %v2380 = vpow.pop %v2379
        %v2381 = vmul.f32 %v2316, 1.442695
        %v2382 = vpow.pop %v2381
        %v2383 = vmul.f32 %v2317, 1.442695
        %v2384 = vpow.pop %v2383
        %v2385 = vmul.f32 %v2318, 1.442695
        %v2386 = vpow.pop %v2385
        %v2387 = vmul.f32 %v2319, 1.442695
        %v2388 = vpow.pop %v2387
        %v2389 = vmul.f32 %v2320, 1.442695
        %v2390 = vpow.pop %v2389
        %v2391 = vmul.f32 %v2321, 1.442695
        %v2392 = vpow.pop %v2391
        %v2393 = vmul.f32 %v2322, 1.442695
        %v2394 = vpow.pop %v2393
        %v2395 = vmul.f32 %v2323, 1.442695
        %v2396 = vpow.pop %v2395
        %v2397 = vmul.f32 %v2324, 1.442695
        %v2398 = vpow.pop %v2397
        %v2399 = vmul.f32 %v2325, 1.442695
        %v2400 = vpow.pop %v2399
        %v2401 = vmul.f32 %v2326, 1.442695
        %v2402 = vpow.pop %v2401
        %v2403 = vmul.f32 %v2327, 1.442695
        %v2404 = vpow.pop %v2403
        %v2405 = vmul.f32 %v2328, 1.442695
        %v2406 = vpow.pop %v2405
        %v2407 = vmul.f32 %v2329, 1.442695
        %v2408 = vpow.pop %v2407
        %v2409 = vmul.f32 %v2330, 1.442695
        %v2410 = vpow.pop %v2409
        %v2411 = vmul.f32 %v2331, 1.442695
        %v2412 = vpow.pop %v2411
        %v2413 = vmul.f32 %v2332, 1.442695
        %v2414 = vpow.pop %v2413
        %v2415 = vmul.f32 %v2333, 1.442695
        %v2416 = vpow.pop %v2415
        %v2417 = vmul.f32 %v2334, 1.442695
        %v2418 = vpow.pop %v2417
        %v2419 = vmul.f32 %v2335, 1.442695
        %v2420 = vpow.pop %v2419
        %v2421 = vmul.f32 %v2336, 1.442695
        %v2422 = vpow.pop %v2421
        %v2423 = vmul.f32 %v2337, 1.442695
        %v2424 = vpow.pop %v2423
        %v2425 = vmul.f32 %v2338, 1.442695
        %v2426 = vpow.pop %v2425
        %v2427 = vmul.f32 %v2339, 1.442695
        %v2428 = vpow.pop %v2427
        %v2429 = vmul.f32 %v2340, 1.442695
        %v2430 = vpow.pop %v2429
        %v2431 = vmul.f32 %v2341, 1.442695
        %v2432 = vpow.pop %v2431
        %v2433 = vmul.f32 %v2342, 1.442695
        %v2434 = vpow.pop %v2433
        %v2435 = vmul.f32 %v2343, 1.442695
        %v2436 = vpow.pop %v2435
        %v2437 = vmul.f32 %v2344, 1.442695
        %v2438 = vpow.pop %v2437
        %v2439 = vmul.f32 %v2345, 1.442695
        %v2440 = vpow.pop %v2439
        %v2441 = vmul.f32 %v2346, 1.442695
        %v2442 = vpow.pop %v2441
        %v2443 = vmul.f32 %v2347, 1.442695
        %v2444 = vpow.pop %v2443
        %v2445 = vmul.f32 %v2348, 1.442695
        %v2446 = vpow.pop %v2445
        %v2447 = vmul.f32 %v2349, 1.442695
        %v2448 = vpow.pop %v2447
        %v2449 = vmul.f32 %v2350, 1.442695
        %v2450 = vpow.pop %v2449
        %v2451 = vmul.f32 %v2351, 1.442695
        %v2452 = vpow.pop %v2451
        %v2453 = vmul.f32 %v2352, 1.442695
        %v2454 = vpow.pop %v2453
        %v2455 = vmul.f32 %v2353, 1.442695
        %v2456 = vpow.pop %v2455
        %v2457 = vmul.f32 %v2354, 1.442695
        %v2458 = vpow.pop %v2457
        %v2459 = vmul.f32 %v2355, 1.442695
        %v2460 = vpow.pop %v2459
        %v2461 = vmul.f32 %v2356, 1.442695
        %v2462 = vpow.pop %v2461
        %v2463 = vmul.f32 %v2357, 1.442695
        %v2464 = vpow.pop %v2463
        %v2465 = vmul.f32 %v2358, 1.442695
        %v2466 = vpow.pop %v2465
        %v2467 = vmul.f32 %v2359, 1.442695
        %v2468 = vpow.pop %v2467
        %v2469 = vmul.f32 %v2360, 1.442695
        %v2470 = vpow.pop %v2469
        %v2471 = vmul.f32 %v2361, 1.442695
        %v2472 = vpow.pop %v2471
        %v2473 = vmul.f32 %v2362, 1.442695
        %v2474 = vpow.pop %v2473
        %v2475 = vmul.f32 %v2363, 1.442695
        %v2476 = vpow.pop %v2475
        %v2477 = vmul.f32 %v2364, 1.442695
        %v2478 = vpow.pop %v2477
        %v2479 = vmul.f32 %v2365, 1.442695
        %v2480 = vpow.pop %v2479
        %v2481 = vmul.f32 %v2366, 1.442695
        %v2482 = vpow.pop %v2481
        %v2483 = vmul.f32 %v2367, 1.442695
        %v2484 = vpow.pop %v2483
        %v2485 = vmul.f32 %v2368, 1.442695
        %v2486 = vpow.pop %v2485
        %v2487 = vmul.f32 %v2369, 1.442695
        %v2488 = vpow.pop %v2487
        %v2489 = vmul.f32 %v2370, 1.442695
        %v2490 = vpow.pop %v2489
        %v2491 = vmul.f32 %v2371, 1.442695
        %v2492 = vpow.pop %v2491
        %v2493 = vmul.f32 %v2372, 1.442695
        %v2494 = vpow.pop %v2493
        %v2495 = vmul.f32 %v2373, 1.442695
        %v2496 = vpow.pop %v2495
        %v2497 = vmul.f32 %v2374, 1.442695
        %v2498 = vpow.pop %v2497
        %v2499 = vmul.f32 %v2375, 1.442695
        %v2500 = vpow.pop %v2499
        %v2501 = vmul.f32 %v2376, 1.442695
        %v2502 = vpow.pop %v2501
        %v2503 = vmul.f32 %v2377, 1.442695
        %v2504 = vpow.pop %v2503
        %v2505 = vmul.f32 %v2378, 1.442695
        %v2506 = vpow.pop %v2505
        %v2507 = vadd.f32 %v2380, 1.0
        %v2508 = vadd.f32 %v2382, 1.0
        %v2509 = vadd.f32 %v2384, 1.0
        %v2510 = vadd.f32 %v2386, 1.0
        %v2511 = vadd.f32 %v2388, 1.0
        %v2512 = vadd.f32 %v2390, 1.0
        %v2513 = vadd.f32 %v2392, 1.0
        %v2514 = vadd.f32 %v2394, 1.0
        %v2515 = vadd.f32 %v2396, 1.0
        %v2516 = vadd.f32 %v2398, 1.0
        %v2517 = vadd.f32 %v2400, 1.0
        %v2518 = vadd.f32 %v2402, 1.0
        %v2519 = vadd.f32 %v2404, 1.0
        %v2520 = vadd.f32 %v2406, 1.0
        %v2521 = vadd.f32 %v2408, 1.0
        %v2522 = vadd.f32 %v2410, 1.0
        %v2523 = vadd.f32 %v2412, 1.0
        %v2524 = vadd.f32 %v2414, 1.0
        %v2525 = vadd.f32 %v2416, 1.0
        %v2526 = vadd.f32 %v2418, 1.0
        %v2527 = vadd.f32 %v2420, 1.0
        %v2528 = vadd.f32 %v2422, 1.0
        %v2529 = vadd.f32 %v2424, 1.0
        %v2530 = vadd.f32 %v2426, 1.0
        %v2531 = vadd.f32 %v2428, 1.0
        %v2532 = vadd.f32 %v2430, 1.0
        %v2533 = vadd.f32 %v2432, 1.0
        %v2534 = vadd.f32 %v2434, 1.0
        %v2535 = vadd.f32 %v2436, 1.0
        %v2536 = vadd.f32 %v2438, 1.0
        %v2537 = vadd.f32 %v2440, 1.0
        %v2538 = vadd.f32 %v2442, 1.0
        %v2539 = vadd.f32 %v2444, 1.0
        %v2540 = vadd.f32 %v2446, 1.0
        %v2541 = vadd.f32 %v2448, 1.0
        %v2542 = vadd.f32 %v2450, 1.0
        %v2543 = vadd.f32 %v2452, 1.0
        %v2544 = vadd.f32 %v2454, 1.0
        %v2545 = vadd.f32 %v2456, 1.0
        %v2546 = vadd.f32 %v2458, 1.0
        %v2547 = vadd.f32 %v2460, 1.0
        %v2548 = vadd.f32 %v2462, 1.0
        %v2549 = vadd.f32 %v2464, 1.0
        %v2550 = vadd.f32 %v2466, 1.0
        %v2551 = vadd.f32 %v2468, 1.0
        %v2552 = vadd.f32 %v2470, 1.0
        %v2553 = vadd.f32 %v2472, 1.0
        %v2554 = vadd.f32 %v2474, 1.0
        %v2555 = vadd.f32 %v2476, 1.0
        %v2556 = vadd.f32 %v2478, 1.0
        %v2557 = vadd.f32 %v2480, 1.0
        %v2558 = vadd.f32 %v2482, 1.0
        %v2559 = vadd.f32 %v2484, 1.0
        %v2560 = vadd.f32 %v2486, 1.0
        %v2561 = vadd.f32 %v2488, 1.0
        %v2562 = vadd.f32 %v2490, 1.0
        %v2563 = vadd.f32 %v2492, 1.0
        %v2564 = vadd.f32 %v2494, 1.0
        %v2565 = vadd.f32 %v2496, 1.0
        %v2566 = vadd.f32 %v2498, 1.0
        %v2567 = vadd.f32 %v2500, 1.0
        %v2568 = vadd.f32 %v2502, 1.0
        %v2569 = vadd.f32 %v2504, 1.0
        %v2570 = vadd.f32 %v2506, 1.0
        %v2571 = vrcp.pop %v2507
        %v2572 = vmul.f32 1.0, %v2571
        %v2573 = vrcp.pop %v2508
        %v2574 = vmul.f32 1.0, %v2573
        %v2575 = vrcp.pop %v2509
        %v2576 = vmul.f32 1.0, %v2575
        %v2577 = vrcp.pop %v2510
        %v2578 = vmul.f32 1.0, %v2577
        %v2579 = vrcp.pop %v2511
        %v2580 = vmul.f32 1.0, %v2579
        %v2581 = vrcp.pop %v2512
        %v2582 = vmul.f32 1.0, %v2581
        %v2583 = vrcp.pop %v2513
        %v2584 = vmul.f32 1.0, %v2583
        %v2585 = vrcp.pop %v2514
        %v2586 = vmul.f32 1.0, %v2585
        %v2587 = vrcp.pop %v2515
        %v2588 = vmul.f32 1.0, %v2587
        %v2589 = vrcp.pop %v2516
        %v2590 = vmul.f32 1.0, %v2589
        %v2591 = vrcp.pop %v2517
        %v2592 = vmul.f32 1.0, %v2591
        %v2593 = vrcp.pop %v2518
        %v2594 = vmul.f32 1.0, %v2593
        %v2595 = vrcp.pop %v2519
        %v2596 = vmul.f32 1.0, %v2595
        %v2597 = vrcp.pop %v2520
        %v2598 = vmul.f32 1.0, %v2597
        %v2599 = vrcp.pop %v2521
        %v2600 = vmul.f32 1.0, %v2599
        %v2601 = vrcp.pop %v2522
        %v2602 = vmul.f32 1.0, %v2601
        %v2603 = vrcp.pop %v2523
        %v2604 = vmul.f32 1.0, %v2603
        %v2605 = vrcp.pop %v2524
        %v2606 = vmul.f32 1.0, %v2605
        %v2607 = vrcp.pop %v2525
        %v2608 = vmul.f32 1.0, %v2607
        %v2609 = vrcp.pop %v2526
        %v2610 = vmul.f32 1.0, %v2609
        %v2611 = vrcp.pop %v2527
        %v2612 = vmul.f32 1.0, %v2611
        %v2613 = vrcp.pop %v2528
        %v2614 = vmul.f32 1.0, %v2613
        %v2615 = vrcp.pop %v2529
        %v2616 = vmul.f32 1.0, %v2615
        %v2617 = vrcp.pop %v2530
        %v2618 = vmul.f32 1.0, %v2617
        %v2619 = vrcp.pop %v2531
        %v2620 = vmul.f32 1.0, %v2619
        %v2621 = vrcp.pop %v2532
        %v2622 = vmul.f32 1.0, %v2621
        %v2623 = vrcp.pop %v2533
        %v2624 = vmul.f32 1.0, %v2623
        %v2625 = vrcp.pop %v2534
        %v2626 = vmul.f32 1.0, %v2625
        %v2627 = vrcp.pop %v2535
        %v2628 = vmul.f32 1.0, %v2627
        %v2629 = vrcp.pop %v2536
        %v2630 = vmul.f32 1.0, %v2629
        %v2631 = vrcp.pop %v2537
        %v2632 = vmul.f32 1.0, %v2631
        %v2633 = vrcp.pop %v2538
        %v2634 = vmul.f32 1.0, %v2633
        %v2635 = vrcp.pop %v2539
        %v2636 = vmul.f32 1.0, %v2635
        %v2637 = vrcp.pop %v2540
        %v2638 = vmul.f32 1.0, %v2637
        %v2639 = vrcp.pop %v2541
        %v2640 = vmul.f32 1.0, %v2639
        %v2641 = vrcp.pop %v2542
        %v2642 = vmul.f32 1.0, %v2641
        %v2643 = vrcp.pop %v2543
        %v2644 = vmul.f32 1.0, %v2643
        %v2645 = vrcp.pop %v2544
        %v2646 = vmul.f32 1.0, %v2645
        %v2647 = vrcp.pop %v2545
        %v2648 = vmul.f32 1.0, %v2647
        %v2649 = vrcp.pop %v2546
        %v2650 = vmul.f32 1.0, %v2649
        %v2651 = vrcp.pop %v2547
        %v2652 = vmul.f32 1.0, %v2651
        %v2653 = vrcp.pop %v2548
        %v2654 = vmul.f32 1.0, %v2653
        %v2655 = vrcp.pop %v2549
        %v2656 = vmul.f32 1.0, %v2655
        %v2657 = vrcp.pop %v2550
        %v2658 = vmul.f32 1.0, %v2657
        %v2659 = vrcp.pop %v2551
        %v2660 = vmul.f32 1.0, %v2659
        %v2661 = vrcp.pop %v2552
        %v2662 = vmul.f32 1.0, %v2661
        %v2663 = vrcp.pop %v2553
        %v2664 = vmul.f32 1.0, %v2663
        %v2665 = vrcp.pop %v2554
        %v2666 = vmul.f32 1.0, %v2665
        %v2667 = vrcp.pop %v2555
        %v2668 = vmul.f32 1.0, %v2667
        %v2669 = vrcp.pop %v2556
        %v2670 = vmul.f32 1.0, %v2669
        %v2671 = vrcp.pop %v2557
        %v2672 = vmul.f32 1.0, %v2671
        %v2673 = vrcp.pop %v2558
        %v2674 = vmul.f32 1.0, %v2673
        %v2675 = vrcp.pop %v2559
        %v2676 = vmul.f32 1.0, %v2675
        %v2677 = vrcp.pop %v2560
        %v2678 = vmul.f32 1.0, %v2677
        %v2679 = vrcp.pop %v2561
        %v2680 = vmul.f32 1.0, %v2679
        %v2681 = vrcp.pop %v2562
        %v2682 = vmul.f32 1.0, %v2681
        %v2683 = vrcp.pop %v2563
        %v2684 = vmul.f32 1.0, %v2683
        %v2685 = vrcp.pop %v2564
        %v2686 = vmul.f32 1.0, %v2685
        %v2687 = vrcp.pop %v2565
        %v2688 = vmul.f32 1.0, %v2687
        %v2689 = vrcp.pop %v2566
        %v2690 = vmul.f32 1.0, %v2689
        %v2691 = vrcp.pop %v2567
        %v2692 = vmul.f32 1.0, %v2691
        %v2693 = vrcp.pop %v2568
        %v2694 = vmul.f32 1.0, %v2693
        %v2695 = vrcp.pop %v2569
        %v2696 = vmul.f32 1.0, %v2695
        %v2697 = vrcp.pop %v2570
        %v2698 = vmul.f32 1.0, %v2697
        %2699 = vst [vmem:[%s473] sm:$0xff] %v2572
        %2700 = vst [vmem:[%s473 + $0x8] sm:$0xff] %v2574
        %2701 = vst [vmem:[%s473 + $0x10] sm:$0xff] %v2576
        %2702 = vst [vmem:[%s473 + $0x18] sm:$0xff] %v2578
        %2703 = vst [vmem:[%s473 + $0x20] sm:$0xff] %v2580
        %2704 = vst [vmem:[%s473 + $0x28] sm:$0xff] %v2582
        %2705 = vst [vmem:[%s473 + $0x30] sm:$0xff] %v2584
        %2706 = vst [vmem:[%s473 + $0x38] sm:$0xff] %v2586
        %2707 = vst [vmem:[%s473 + $0x40] sm:$0xff] %v2588
        %2708 = vst [vmem:[%s473 + $0x48] sm:$0xff] %v2590
        %2709 = vst [vmem:[%s473 + $0x50] sm:$0xff] %v2592
        %2710 = vst [vmem:[%s473 + $0x58] sm:$0xff] %v2594
        %2711 = vst [vmem:[%s473 + $0x60] sm:$0xff] %v2596
        %2712 = vst [vmem:[%s473 + $0x68] sm:$0xff] %v2598
        %2713 = vst [vmem:[%s473 + $0x70] sm:$0xff] %v2600
        %2714 = vst [vmem:[%s473 + $0x78] sm:$0xff] %v2602
        %2715 = vst [vmem:[%s473 + $0x80] sm:$0xff] %v2604
        %2716 = vst [vmem:[%s473 + $0x88] sm:$0xff] %v2606
        %2717 = vst [vmem:[%s473 + $0x90] sm:$0xff] %v2608
        %2718 = vst [vmem:[%s473 + $0x98] sm:$0xff] %v2610
        %2719 = vst [vmem:[%s473 + $0xa0] sm:$0xff] %v2612
        %2720 = vst [vmem:[%s473 + $0xa8] sm:$0xff] %v2614
        %2721 = vst [vmem:[%s473 + $0xb0] sm:$0xff] %v2616
        %2722 = vst [vmem:[%s473 + $0xb8] sm:$0xff] %v2618
        %2723 = vst [vmem:[%s473 + $0xc0] sm:$0xff] %v2620
        %2724 = vst [vmem:[%s473 + $0xc8] sm:$0xff] %v2622
        %2725 = vst [vmem:[%s473 + $0xd0] sm:$0xff] %v2624
        %2726 = vst [vmem:[%s473 + $0xd8] sm:$0xff] %v2626
        %2727 = vst [vmem:[%s473 + $0xe0] sm:$0xff] %v2628
        %2728 = vst [vmem:[%s473 + $0xe8] sm:$0xff] %v2630
        %2729 = vst [vmem:[%s473 + $0xf0] sm:$0xff] %v2632
        %2730 = vst [vmem:[%s473 + $0xf8] sm:$0xff] %v2634
        %2731 = vst [vmem:[%s473 + $0x100] sm:$0xff] %v2636
        %2732 = vst [vmem:[%s473 + $0x108] sm:$0xff] %v2638
        %2733 = vst [vmem:[%s473 + $0x110] sm:$0xff] %v2640
        %2734 = vst [vmem:[%s473 + $0x118] sm:$0xff] %v2642
        %2735 = vst [vmem:[%s473 + $0x120] sm:$0xff] %v2644
        %2736 = vst [vmem:[%s473 + $0x128] sm:$0xff] %v2646
        %2737 = vst [vmem:[%s473 + $0x130] sm:$0xff] %v2648
        %2738 = vst [vmem:[%s473 + $0x138] sm:$0xff] %v2650
        %2739 = vst [vmem:[%s473 + $0x140] sm:$0xff] %v2652
        %2740 = vst [vmem:[%s473 + $0x148] sm:$0xff] %v2654
        %2741 = vst [vmem:[%s473 + $0x150] sm:$0xff] %v2656
        %2742 = vst [vmem:[%s473 + $0x158] sm:$0xff] %v2658
        %2743 = vst [vmem:[%s473 + $0x160] sm:$0xff] %v2660
        %2744 = vst [vmem:[%s473 + $0x168] sm:$0xff] %v2662
        %2745 = vst [vmem:[%s473 + $0x170] sm:$0xff] %v2664
        %2746 = vst [vmem:[%s473 + $0x178] sm:$0xff] %v2666
        %2747 = vst [vmem:[%s473 + $0x180] sm:$0xff] %v2668
        %2748 = vst [vmem:[%s473 + $0x188] sm:$0xff] %v2670
        %2749 = vst [vmem:[%s473 + $0x190] sm:$0xff] %v2672
        %2750 = vst [vmem:[%s473 + $0x198] sm:$0xff] %v2674
        %2751 = vst [vmem:[%s473 + $0x1a0] sm:$0xff] %v2676
        %2752 = vst [vmem:[%s473 + $0x1a8] sm:$0xff] %v2678
        %2753 = vst [vmem:[%s473 + $0x1b0] sm:$0xff] %v2680
        %2754 = vst [vmem:[%s473 + $0x1b8] sm:$0xff] %v2682
        %2755 = vst [vmem:[%s473 + $0x1c0] sm:$0xff] %v2684
        %2756 = vst [vmem:[%s473 + $0x1c8] sm:$0xff] %v2686
        %2757 = vst [vmem:[%s473 + $0x1d0] sm:$0xff] %v2688
        %2758 = vst [vmem:[%s473 + $0x1d8] sm:$0xff] %v2690
        %2759 = vst [vmem:[%s473 + $0x1e0] sm:$0xff] %v2692
        %2760 = vst [vmem:[%s473 + $0x1e8] sm:$0xff] %v2694
        %2761 = vst [vmem:[%s473 + $0x1f0] sm:$0xff] %v2696
        %2762 = vst [vmem:[%s473 + $0x1f8] sm:$0xff] %v2698
        %v2763 = vsub.f32 %v2572, %v490
        %v2764 = vsub.f32 %v2574, %v491
        %v2765 = vsub.f32 %v2576, %v492
        %v2766 = vsub.f32 %v2578, %v493
        %v2767 = vsub.f32 %v2580, %v494
        %v2768 = vsub.f32 %v2582, %v495
        %v2769 = vsub.f32 %v2584, %v496
        %v2770 = vsub.f32 %v2586, %v497
        %v2771 = vsub.f32 %v2588, %v498
        %v2772 = vsub.f32 %v2590, %v499
        %v2773 = vsub.f32 %v2592, %v500
        %v2774 = vsub.f32 %v2594, %v501
        %v2775 = vsub.f32 %v2596, %v502
        %v2776 = vsub.f32 %v2598, %v503
        %v2777 = vsub.f32 %v2600, %v504
        %v2778 = vsub.f32 %v2602, %v505
        %v2779 = vsub.f32 %v2604, %v506
        %v2780 = vsub.f32 %v2606, %v507
        %v2781 = vsub.f32 %v2608, %v508
        %v2782 = vsub.f32 %v2610, %v509
        %v2783 = vsub.f32 %v2612, %v510
        %v2784 = vsub.f32 %v2614, %v511
        %v2785 = vsub.f32 %v2616, %v512
        %v2786 = vsub.f32 %v2618, %v513
        %v2787 = vsub.f32 %v2620, %v514
        %v2788 = vsub.f32 %v2622, %v515
        %v2789 = vsub.f32 %v2624, %v516
        %v2790 = vsub.f32 %v2626, %v517
        %v2791 = vsub.f32 %v2628, %v518
        %v2792 = vsub.f32 %v2630, %v519
        %v2793 = vsub.f32 %v2632, %v520
        %v2794 = vsub.f32 %v2634, %v521
        %v2795 = vsub.f32 %v2636, %v522
        %v2796 = vsub.f32 %v2638, %v523
        %v2797 = vsub.f32 %v2640, %v524
        %v2798 = vsub.f32 %v2642, %v525
        %v2799 = vsub.f32 %v2644, %v526
        %v2800 = vsub.f32 %v2646, %v527
        %v2801 = vsub.f32 %v2648, %v528
        %v2802 = vsub.f32 %v2650, %v529
        %v2803 = vsub.f32 %v2652, %v530
        %v2804 = vsub.f32 %v2654, %v531
        %v2805 = vsub.f32 %v2656, %v532
        %v2806 = vsub.f32 %v2658, %v533
        %v2807 = vsub.f32 %v2660, %v534
        %v2808 = vsub.f32 %v2662, %v535
        %v2809 = vsub.f32 %v2664, %v536
        %v2810 = vsub.f32 %v2666, %v537
        %v2811 = vsub.f32 %v2668, %v538
        %v2812 = vsub.f32 %v2670, %v539
        %v2813 = vsub.f32 %v2672, %v540
        %v2814 = vsub.f32 %v2674, %v541
        %v2815 = vsub.f32 %v2676, %v542
        %v2816 = vsub.f32 %v2678, %v543
        %v2817 = vsub.f32 %v2680, %v544
        %v2818 = vsub.f32 %v2682, %v545
        %v2819 = vsub.f32 %v2684, %v546
        %v2820 = vsub.f32 %v2686, %v547
        %v2821 = vsub.f32 %v2688, %v548
        %v2822 = vsub.f32 %v2690, %v549
        %v2823 = vsub.f32 %v2692, %v550
        %v2824 = vsub.f32 %v2694, %v551
        %v2825 = vsub.f32 %v2696, %v552
        %v2826 = vsub.f32 %v2698, %v553
        %v2827 = vmul.f32 %v2763, %v2763
        %v2828 = vmul.f32 %v2764, %v2764
        %v2829 = vmul.f32 %v2765, %v2765
        %v2830 = vmul.f32 %v2766, %v2766
        %v2831 = vmul.f32 %v2767, %v2767
        %v2832 = vmul.f32 %v2768, %v2768
        %v2833 = vmul.f32 %v2769, %v2769
        %v2834 = vmul.f32 %v2770, %v2770
        %v2835 = vmul.f32 %v2771, %v2771
        %v2836 = vmul.f32 %v2772, %v2772
        %v2837 = vmul.f32 %v2773, %v2773
        %v2838 = vmul.f32 %v2774, %v2774
        %v2839 = vmul.f32 %v2775, %v2775
        %v2840 = vmul.f32 %v2776, %v2776
        %v2841 = vmul.f32 %v2777, %v2777
        %v2842 = vmul.f32 %v2778, %v2778
        %v2843 = vmul.f32 %v2779, %v2779
        %v2844 = vmul.f32 %v2780, %v2780
        %v2845 = vmul.f32 %v2781, %v2781
        %v2846 = vmul.f32 %v2782, %v2782
        %v2847 = vmul.f32 %v2783, %v2783
        %v2848 = vmul.f32 %v2784, %v2784
        %v2849 = vmul.f32 %v2785, %v2785
        %v2850 = vmul.f32 %v2786, %v2786
        %v2851 = vmul.f32 %v2787, %v2787
        %v2852 = vmul.f32 %v2788, %v2788
        %v2853 = vmul.f32 %v2789, %v2789
        %v2854 = vmul.f32 %v2790, %v2790
        %v2855 = vmul.f32 %v2791, %v2791
        %v2856 = vmul.f32 %v2792, %v2792
        %v2857 = vmul.f32 %v2793, %v2793
        %v2858 = vmul.f32 %v2794, %v2794
        %v2859 = vmul.f32 %v2795, %v2795
        %v2860 = vmul.f32 %v2796, %v2796
        %v2861 = vmul.f32 %v2797, %v2797
        %v2862 = vmul.f32 %v2798, %v2798
        %v2863 = vmul.f32 %v2799, %v2799
        %v2864 = vmul.f32 %v2800, %v2800
        %v2865 = vmul.f32 %v2801, %v2801
        %v2866 = vmul.f32 %v2802, %v2802
        %v2867 = vmul.f32 %v2803, %v2803
        %v2868 = vmul.f32 %v2804, %v2804
        %v2869 = vmul.f32 %v2805, %v2805
        %v2870 = vmul.f32 %v2806, %v2806
        %v2871 = vmul.f32 %v2807, %v2807
        %v2872 = vmul.f32 %v2808, %v2808
        %v2873 = vmul.f32 %v2809, %v2809
        %v2874 = vmul.f32 %v2810, %v2810
        %v2875 = vmul.f32 %v2811, %v2811
        %v2876 = vmul.f32 %v2812, %v2812
        %v2877 = vmul.f32 %v2813, %v2813
        %v2878 = vmul.f32 %v2814, %v2814
        %v2879 = vmul.f32 %v2815, %v2815
        %v2880 = vmul.f32 %v2816, %v2816
        %v2881 = vmul.f32 %v2817, %v2817
        %v2882 = vmul.f32 %v2818, %v2818
        %v2883 = vmul.f32 %v2819, %v2819
        %v2884 = vmul.f32 %v2820, %v2820
        %v2885 = vmul.f32 %v2821, %v2821
        %v2886 = vmul.f32 %v2822, %v2822
        %v2887 = vmul.f32 %v2823, %v2823
        %v2888 = vmul.f32 %v2824, %v2824
        %v2889 = vmul.f32 %v2825, %v2825
        %v2890 = vmul.f32 %v2826, %v2826
        %v2891 = vadd.f32 %v2827, %v2828
        %v2892 = vadd.f32 %v2891, %v2829
        %v2893 = vadd.f32 %v2892, %v2830
        %v2894 = vadd.f32 %v2893, %v2831
        %v2895 = vadd.f32 %v2894, %v2832
        %v2896 = vadd.f32 %v2895, %v2833
        %v2897 = vadd.f32 %v2896, %v2834
        %v2898 = vadd.f32 %v2897, %v2835
        %v2899 = vadd.f32 %v2898, %v2836
        %v2900 = vadd.f32 %v2899, %v2837
        %v2901 = vadd.f32 %v2900, %v2838
        %v2902 = vadd.f32 %v2901, %v2839
        %v2903 = vadd.f32 %v2902, %v2840
        %v2904 = vadd.f32 %v2903, %v2841
        %v2905 = vadd.f32 %v2904, %v2842
        %v2906 = vadd.f32 %v2905, %v2843
        %v2907 = vadd.f32 %v2906, %v2844
        %v2908 = vadd.f32 %v2907, %v2845
        %v2909 = vadd.f32 %v2908, %v2846
        %v2910 = vadd.f32 %v2909, %v2847
        %v2911 = vadd.f32 %v2910, %v2848
        %v2912 = vadd.f32 %v2911, %v2849
        %v2913 = vadd.f32 %v2912, %v2850
        %v2914 = vadd.f32 %v2913, %v2851
        %v2915 = vadd.f32 %v2914, %v2852
        %v2916 = vadd.f32 %v2915, %v2853
        %v2917 = vadd.f32 %v2916, %v2854
        %v2918 = vadd.f32 %v2917, %v2855
        %v2919 = vadd.f32 %v2918, %v2856
        %v2920 = vadd.f32 %v2919, %v2857
        %v2921 = vadd.f32 %v2920, %v2858
        %v2922 = vadd.f32 %v2921, %v2859
        %v2923 = vadd.f32 %v2922, %v2860
        %v2924 = vadd.f32 %v2923, %v2861
        %v2925 = vadd.f32 %v2924, %v2862
        %v2926 = vadd.f32 %v2925, %v2863
        %v2927 = vadd.f32 %v2926, %v2864
        %v2928 = vadd.f32 %v2927, %v2865
        %v2929 = vadd.f32 %v2928, %v2866
        %v2930 = vadd.f32 %v2929, %v2867
        %v2931 = vadd.f32 %v2930, %v2868
        %v2932 = vadd.f32 %v2931, %v2869
        %v2933 = vadd.f32 %v2932, %v2870
        %v2934 = vadd.f32 %v2933, %v2871
        %v2935 = vadd.f32 %v2934, %v2872
        %v2936 = vadd.f32 %v2935, %v2873
        %v2937 = vadd.f32 %v2936, %v2874
        %v2938 = vadd.f32 %v2937, %v2875
        %v2939 = vadd.f32 %v2938, %v2876
        %v2940 = vadd.f32 %v2939, %v2877
        %v2941 = vadd.f32 %v2940, %v2878
        %v2942 = vadd.f32 %v2941, %v2879
        %v2943 = vadd.f32 %v2942, %v2880
        %v2944 = vadd.f32 %v2943, %v2881
        %v2945 = vadd.f32 %v2944, %v2882
        %v2946 = vadd.f32 %v2945, %v2883
        %v2947 = vadd.f32 %v2946, %v2884
        %v2948 = vadd.f32 %v2947, %v2885
        %v2949 = vadd.f32 %v2948, %v2886
        %v2950 = vadd.f32 %v2949, %v2887
        %v2951 = vadd.f32 %v2950, %v2888
        %v2952 = vadd.f32 %v2951, %v2889
        %v2953 = vadd.f32 %v2952, %v2890
        %2954 = vst [vmem:[%s480] sm:$0xff] %v2953
        %s2955 = smul.u32 64, %s34
        %p2956 = scmp.lt.s32.totalorder %s2955, 127
        %s2957 = scalar_select %p2956, %s2955, 127
        %s2958 = smul.addr %s2957, 8
        %s2959 = scalar_lea.vmem %s9, %s2958
        %s2960 = sand.u32 %s262, 1
        %s2961 = scalar_lea.sflag [#allocation4], %s2960
        %s2962 = sand.u32 %s262, 1
        %s2963 = smul.addr %s2962, 512
        %s2964 = scalar_lea.vmem [#allocation11], %s2963
        %s2965 = sand.u32 %s288, 1
        %s2966 = scalar_lea.sflag [#allocation13], %s2965
        %s2967 = sand.u32 %s288, 1
        %s2968 = smul.addr %s2967, 8
        %s2969 = scalar_lea.vmem [#allocation12], %s2968
        // Predicated region
        $region77: #{tpu_custom_call.1} parent=55 // pred_check
          %p2970 = pneg %p246
        $region78: #{tpu_custom_call.1} parent=55 // pred_check_branch
          %2972 = sbr.rel (%p2970) target = $region80
        $region79: #{tpu_custom_call.1} parent=55 // pred_region
          %s2973 = smul.u32 64, %s34
        $region80: #{tpu_custom_call.1} parent=55 // pred_fallthru
          _
        // Predicated region
        $region81: #{tpu_custom_call.1} parent=55 // pred_check
          %p2974 = pneg %p272
        $region82: #{tpu_custom_call.1} parent=55 // pred_check_branch
          %2976 = sbr.rel (%p2974) target = $region84
        $region83: #{tpu_custom_call.1} parent=55 // pred_region
          %s2977 = smul.u32 64, %s34
          %s2979 = ssub.s32 8192, 8192
          %2980 = vsyncadd %s2961, %s2979
          %s2981 = smul.addr %s2977, 128
          %s2982 = scalar_lea.hbm %s10, %s2981
          %s2983 = sshll.u32 %s2964, 4
          %s2984 = int_to_ptr.vmem [resolvable:$true] %s2983
          %2989 = dma.vmem_to_hbm [thread:$0]  %s2984, 8192, %s2982, %s2961, 128, 128, 8
        $region84: #{tpu_custom_call.1} parent=55 // pred_fallthru
          _
        // Predicated region
        $region85: #{tpu_custom_call.1} parent=55 // pred_check
          %p2990 = pneg %p298
        $region86: #{tpu_custom_call.1} parent=55 // pred_check_branch
          %2992 = sbr.rel (%p2990) target = $region88
        $region87: #{tpu_custom_call.1} parent=55 // pred_region
          %s2994 = ssub.s32 128, 128
          %2995 = vsyncadd %s2966, %s2994
          %s2996 = smul.addr %s34, 128
          %s2997 = scalar_lea.hbm %s11, %s2996
          %s2999 = sshll.u32 %s2969, 4
          %s3000 = int_to_ptr.vmem [resolvable:$true] %s2999
          %3002 = dma.vmem_to_hbm [thread:$0]  %s3000, 128, %s2997, %s2966
        $region88: #{tpu_custom_call.1} parent=55 // pred_fallthru
          _
      $region56: #{tpu_custom_call.1} parent=5 // pred_fallthru
        _
      %p3003 = scmp.le.s32.totalorder 2, %s29
      // Predicated region
      $region89: #{tpu_custom_call.1} parent=5 // pred_check
        %p3004 = pneg %p3003
      $region90: #{tpu_custom_call.1} parent=5 // pred_check_branch
        %3006 = sbr.rel (%p3004) target = $region92
      $region91: #{tpu_custom_call.1} parent=5 // pred_region
        %s3007 = ssub.s32 %s29, 2
        // Predicated region
        $region93: #{tpu_custom_call.1} parent=91 // pred_check
          %p3008 = pneg %p252
        $region94: #{tpu_custom_call.1} parent=91 // pred_check_branch
          %3010 = sbr.rel (%p3008) target = $region96
        $region95: #{tpu_custom_call.1} parent=91 // pred_region
          %s3011 = smul.u32 64, %s35
          %p3012 = scmp.lt.s32.totalorder %s3011, 127
          %s3013 = scalar_select %p3012, %s3011, 127
          %s3014 = smul.addr %s3013, 8
          %s3015 = scalar_lea.vmem %s9, %s3014
        $region96: #{tpu_custom_call.1} parent=91 // pred_fallthru
          _
        // Predicated region
        $region97: #{tpu_custom_call.1} parent=91 // pred_check
          %p3016 = pneg %p278
        $region98: #{tpu_custom_call.1} parent=91 // pred_check_branch
          %3018 = sbr.rel (%p3016) target = $region100
        $region99: #{tpu_custom_call.1} parent=91 // pred_region
          %s3019 = sand.u32 %s263, 1
          %s3020 = scalar_lea.sflag [#allocation4], %s3019
          %s3021 = sand.u32 %s263, 1
          %s3022 = smul.addr %s3021, 512
          %s3023 = scalar_lea.vmem [#allocation11], %s3022
          %3024 = dma.done %s3020, 8192
        $region100: #{tpu_custom_call.1} parent=91 // pred_fallthru
          _
        // Predicated region
        $region101: #{tpu_custom_call.1} parent=91 // pred_check
          %p3025 = pneg %p304
        $region102: #{tpu_custom_call.1} parent=91 // pred_check_branch
          %3027 = sbr.rel (%p3025) target = $region104
        $region103: #{tpu_custom_call.1} parent=91 // pred_region
          %s3028 = sand.u32 %s289, 1
          %s3029 = scalar_lea.sflag [#allocation13], %s3028
          %s3030 = sand.u32 %s289, 1
          %s3031 = smul.addr %s3030, 8
          %s3032 = scalar_lea.vmem [#allocation12], %s3031
          %3033 = dma.done %s3029, 128
        $region104: #{tpu_custom_call.1} parent=91 // pred_fallthru
          _
      $region92: #{tpu_custom_call.1} parent=5 // pred_fallthru
        _
    $region6: #{tpu_custom_call.1} parent=1 // loop_footer
      %s33 = sadd.s32 1, %s29
    $region7: #{tpu_custom_call.1} parent=1 // loop_footer_branch
      %28 = sbr.rel target = $region3
    $region8: #{tpu_custom_call.1} parent=1 // loop_exit
      _
    %3034 = vsyncpa [#allocation3], 1
    %s3035 = scalar_lea.sflag [#allocation3], 1
    %3036 = vsyncpa %s3035, 1
    %3037 = vsyncpa [#allocation6], 1
    %3038 = vsyncpa [#allocation9], 1
    %3039 = vsyncpa [#allocation4], 1
    %s3040 = scalar_lea.sflag [#allocation4], 1
    %3041 = vsyncpa %s3040, 1
    %3042 = vsyncpa [#allocation13], 1
    %s3043 = scalar_lea.sflag [#allocation13], 1
    %3044 = vsyncpa %s3043, 1

</llo_original>
